<compile_context>
chip_gen: v7x
topology: tpu7x:2x2x1
jax: 0.10.0
libtpu: 0.0.40
codegen_flags: <defaults>
</compile_context>

<pallas_src>
import jax
import jax.numpy as jnp
import numpy as np
from jax.experimental import pallas as pl
from jax.experimental.pallas import tpu as pltpu


COMPUTE_DTYPE = jnp.bfloat16      # matmul-input dtype; accumulation is always f32
B_TILE = 8                        # images per grid step


# ----------------------------------------------------------------------------
# One-time host-side parameter repack
# ----------------------------------------------------------------------------
def _build_toeplitz_pair(w, w_in, k_pad):
    """Slab T of shape (KH, k_pad, 256):
       cols [0, owh*OC)      : even-ow conv outputs (ow = 2*o)
       cols [128, 128+owh*OC): odd-ow  conv outputs (ow = 2*o + 1)
       such that (x2d[row] @ T[ki]) contributes tap ki of the valid stride-1
       cross-correlation, with x2d row layout [w*C + c].   w: (OC, C, KH, KW)."""
    oc_n, c_n, kh, kw = w.shape
    ow = w_in - kw + 1
    owh = ow // 2
    t = np.zeros((kh, k_pad, 256), np.float32)
    for parity in (0, 1):
        off = parity * 128
        for ki in range(kh):
            for o in range(owh):
                base = 2 * o + parity
                for kj in range(kw):
                    col_w = base + kj
                    t[ki, col_w * c_n:(col_w + 1) * c_n,
                      off + o * oc_n: off + (o + 1) * oc_n] = w[:, :, ki, kj].T
    return t


def _build_pool_gather(b_tile, kh, h_in, h_pool):
    """G of shape (KH, 2*b*h_pool, b*h_in), 0/1:
       row (b*h_pool + o)            selects input row  b*h_in + 2*o     + ki
       row (b_tile*h_pool + b*h_pool + o) selects row    b*h_in + 2*o + 1 + ki
       i.e. the per-tap row shift AND the H-direction 2x2 pool row selection."""
    g = np.zeros((kh, 2 * b_tile * h_pool, b_tile * h_in), np.float32)
    for ki in range(kh):
        for b in range(b_tile):
            for o in range(h_pool):
                g[ki, b * h_pool + o, b * h_in + 2 * o + ki] = 1.0
                g[ki, b_tile * h_pool + b * h_pool + o,
                  b * h_in + 2 * o + 1 + ki] = 1.0
    return g


def _build_fc1_gather(b_tile):
    """F of shape (5*b, b*5): row (h*b + b_idx) selects y2 row (b_idx*5 + h)."""
    f = np.zeros((5 * b_tile, b_tile * 5), np.float32)
    for h in range(5):
        for b in range(b_tile):
            f[h * b_tile + b, b * 5 + h] = 1.0
    return f


def prepare_params(params, compute_dtype=COMPUTE_DTYPE, b_tile=B_TILE):
    f32 = np.float32
    cw1 = np.asarray(params["conv1_w"], f32); cb1 = np.asarray(params["conv1_b"], f32)
    cw2 = np.asarray(params["conv2_w"], f32); cb2 = np.asarray(params["conv2_b"], f32)
    fw1 = np.asarray(params["fc1_w"], f32); fb1 = np.asarray(params["fc1_b"], f32)
    fw2 = np.asarray(params["fc2_w"], f32); fb2 = np.asarray(params["fc2_b"], f32)
    fw3 = np.asarray(params["fc3_w"], f32); fb3 = np.asarray(params["fc3_b"], f32)

    # conv1: input rows are (32 h) x (32*3=96 lanes); output halves 14*6=84 -> pad 128
    t1 = _build_toeplitz_pair(cw1, 32, 96)                 # (5, 96, 256)
    b1 = np.zeros((1, 128), f32); b1[0, :84] = np.tile(cb1, 14)
    g1 = _build_pool_gather(b_tile, 5, 32, 14)             # (5, 2*B*14, B*32)

    # conv2: input rows are (14 h) x (14*6=84 -> 128 lanes); halves 5*16=80 -> pad 128
    t2 = _build_toeplitz_pair(cw2, 14, 128)                # (5, 128, 256)
    b2 = np.zeros((1, 128), f32); b2[0, :80] = np.tile(cb2, 5)
    g2 = _build_pool_gather(b_tile, 5, 14, 5)              # (5, 2*B*5, B*14)

    # fc1: permute from torch's (c,h,w) flatten order to our (h, w*16+c) layout,
    # split by h (each image contributes 5 rows), zero-pad K 80->128, N 120->128.
    fg = _build_fc1_gather(b_tile)                         # (5*B, B*5)
    wf1 = fw1.reshape(120, 16, 5, 5).transpose(2, 3, 1, 0).reshape(5, 80, 120)
    wf1 = np.pad(wf1, ((0, 0), (0, 48), (0, 8)))           # (5, 128, 128)
    bf1 = np.pad(fb1, (0, 8))[None, :]                     # (1, 128)
    # fc2 / fc3: pre-transposed + zero-padded to lane-dense (128, 128)
    wf2 = np.pad(fw2.T, ((0, 8), (0, 44)))
    bf2 = np.pad(fb2, (0, 44))[None, :]
    wf3 = np.pad(fw3.T, ((0, 44), (0, 118)))
    bf3 = np.pad(fb3, (0, 118))[None, :]

    cd = compute_dtype
    return {
        "g1": jnp.asarray(g1, cd), "t1": jnp.asarray(t1, cd),
        "b1": jnp.asarray(b1, jnp.float32),
        "g2": jnp.asarray(g2, cd), "t2": jnp.asarray(t2, cd),
        "b2": jnp.asarray(b2, jnp.float32),
        "fg": jnp.asarray(fg, cd),
        "wf1": jnp.asarray(wf1, cd), "bf1": jnp.asarray(bf1, jnp.float32),
        "wf2": jnp.asarray(wf2, cd), "bf2": jnp.asarray(bf2, jnp.float32),
        "wf3": jnp.asarray(wf3, cd), "bf3": jnp.asarray(bf3, jnp.float32),
    }


# ----------------------------------------------------------------------------
# Fused Pallas kernel (B_TILE images per grid step, weights resident in VMEM)
# ----------------------------------------------------------------------------
def _fused_cnn_kernel(x_ref, g1_ref, t1_ref, b1_ref, g2_ref, t2_ref, b2_ref,
                      fg_ref, wf1_ref, bf1_ref, wf2_ref, bf2_ref, wf3_ref, bf3_ref,
                      o_ref):
    f32 = jnp.float32
    cd = t1_ref.dtype
    B = B_TILE

    x = x_ref[...]                                               # (B*32, 96) bf16

    # ---- conv1 + bias + ReLU + 2x2 max-pool : -> (B*14, 128) ----
    acc1 = jnp.zeros((2 * B * 14, 256), f32)
    for ki in range(5):
        xg = jnp.dot(g1_ref[ki], x, preferred_element_type=f32).astype(cd)
        acc1 = acc1 + jnp.dot(xg, t1_ref[ki], preferred_element_type=f32)
    m1 = jnp.maximum(acc1[:B * 14], acc1[B * 14:])               # H-pool (B*14, 256)
    m1 = jnp.maximum(m1[:, :128], m1[:, 128:])                   # W-pool (B*14, 128)
    y1 = jnp.maximum(m1 + b1_ref[...], 0.0).astype(cd)           # (B*14, 128)

    # ---- conv2 + bias + ReLU + 2x2 max-pool : -> (B*5, 128) ----
    acc2 = jnp.zeros((2 * B * 5, 256), f32)
    for ki in range(5):
        xg = jnp.dot(g2_ref[ki], y1, preferred_element_type=f32).astype(cd)
        acc2 = acc2 + jnp.dot(xg, t2_ref[ki], preferred_element_type=f32)
    m2 = jnp.maximum(acc2[:B * 5], acc2[B * 5:])                 # (B*5, 256)
    m2 = jnp.maximum(m2[:, :128], m2[:, 128:])                   # (B*5, 128)
    y2 = jnp.maximum(m2 + b2_ref[...], 0.0).astype(cd)           # (B*5, 128)

    # ---- fc1 + ReLU (batch on M; h-sum over 5 aligned row blocks) ----
    z = jnp.dot(fg_ref[...], y2, preferred_element_type=f32).astype(cd)  # (5*B, 128)
    acc = jnp.zeros((B, 128), f32)
    for h in range(5):
        acc = acc + jnp.dot(z[h * B:(h + 1) * B], wf1_ref[h],
                            preferred_element_type=f32)
    a1 = jnp.maximum(acc + bf1_ref[...], 0.0).astype(cd)         # (B, 128)

    # ---- fc2 + ReLU, fc3 ----
    a2 = jnp.maximum(jnp.dot(a1, wf2_ref[...], preferred_element_type=f32)
                     + bf2_ref[...], 0.0).astype(cd)
    o_ref[...] = (jnp.dot(a2, wf3_ref[...], preferred_element_type=f32)
                  + bf3_ref[...])                                # (B, 128) f32


# ----------------------------------------------------------------------------
# Forward wrapper
# ----------------------------------------------------------------------------
def cnn_cifar_forward(x, prepped):
    """x: (N, 3, 32, 32) float32 NCHW  ->  (N, 10) float32 logits."""
    n = x.shape[0]
    n_pad = ((n + B_TILE - 1) // B_TILE) * B_TILE
    # host glue: NCHW -> (N, H, W*C) bf16, pad batch to a multiple of B_TILE,
    # flatten (N, H) onto sublanes; lanes stay at the full 96 (legal full-dim block).
    x_nhwc = jnp.transpose(x, (0, 2, 3, 1)).reshape(n, 32, 96)
    if n_pad != n:
        x_nhwc = jnp.pad(x_nhwc, ((0, n_pad - n), (0, 0), (0, 0)))
    x2d = x_nhwc.reshape(n_pad * 32, 96).astype(COMPUTE_DTYPE)

    p = prepped
    weight_names = ["g1", "t1", "b1", "g2", "t2", "b2",
                    "fg", "wf1", "bf1", "wf2", "bf2", "wf3", "bf3"]

    def _resident(a):   # whole-array block, fetched once, stays in VMEM
        return pl.BlockSpec(a.shape, lambda i, _nd=a.ndim: (0,) * _nd)

    out = pl.pallas_call(
        _fused_cnn_kernel,
        out_shape=jax.ShapeDtypeStruct((n_pad, 128), jnp.float32),
        grid=(n_pad // B_TILE,),
        in_specs=[pl.BlockSpec((B_TILE * 32, 96), lambda i: (i, 0))]
                 + [_resident(p[k]) for k in weight_names],
        out_specs=pl.BlockSpec((B_TILE, 128), lambda i: (i, 0)),
        compiler_params=pltpu.CompilerParams(
            dimension_semantics=("parallel",),
            # resident weights ~1.5 MB (+ possible double buffer) + <0.7 MB
            # activations/blocks; 16 MiB leaves honest headroom on all chips.
            vmem_limit_bytes=16 * 1024 * 1024),
    )(x2d, *[p[k] for k in weight_names])
    return out[:n, :10]


# ----------------------------------------------------------------------------
# Reference (pure JAX/XLA, f32) and deterministic PyTorch-like init
# ----------------------------------------------------------------------------
def reference_forward(x, params):
    dn = ("NCHW", "OIHW", "NCHW")
    y = jax.lax.conv_general_dilated(x, params["conv1_w"], (1, 1), "VALID",
                                     dimension_numbers=dn)
    y = jax.nn.relu(y + params["conv1_b"][None, :, None, None])
    y = jax.lax.reduce_window(y, -jnp.inf, jax.lax.max, (1, 1, 2, 2), (1, 1, 2, 2),
                              "VALID")
    y = jax.lax.conv_general_dilated(y, params["conv2_w"], (1, 1), "VALID",
                                     dimension_numbers=dn)
    y = jax.nn.relu(y + params["conv2_b"][None, :, None, None])
    y = jax.lax.reduce_window(y, -jnp.inf, jax.lax.max, (1, 1, 2, 2), (1, 1, 2, 2),
                              "VALID")
    y = y.reshape(y.shape[0], -1)
    y = jax.nn.relu(y @ params["fc1_w"].T + params["fc1_b"])
    y = jax.nn.relu(y @ params["fc2_w"].T + params["fc2_b"])
    return y @ params["fc3_w"].T + params["fc3_b"]


def init_params(key):
    ks = jax.random.split(key, 10)

    def u(k, shape, fan_in):
        bound = 1.0 / float(fan_in) ** 0.5
        return jax.random.uniform(k, shape, jnp.float32, -bound, bound)

    return {
        "conv1_w": u(ks[0], (6, 3, 5, 5), 3 * 5 * 5),
        "conv1_b": u(ks[1], (6,), 3 * 5 * 5),
        "conv2_w": u(ks[2], (16, 6, 5, 5), 6 * 5 * 5),
        "conv2_b": u(ks[3], (16,), 6 * 5 * 5),
        "fc1_w": u(ks[4], (120, 400), 400),
        "fc1_b": u(ks[5], (120,), 400),
        "fc2_w": u(ks[6], (84, 120), 120),
        "fc2_b": u(ks[7], (84,), 120),
        "fc3_w": u(ks[8], (10, 84), 84),
        "fc3_b": u(ks[9], (10,), 84),
    }


if __name__ == "__main__":
    key = jax.random.PRNGKey(0)
    k_params, k_x = jax.random.split(key)
    params = init_params(k_params)
    prepped = prepare_params(params)

    # CIFAR-shaped input: spatial must be 32x32 so the flatten is 16*5*5.
    x = jax.random.normal(k_x, (2, 3, 32, 32), dtype=jnp.float32)

    out = jax.jit(cnn_cifar_forward)(x, prepped)
    out = jax.block_until_ready(out)
    assert out.shape == (2, 10) and out.dtype == jnp.float32

    ref = reference_forward(x, params)
    tol = 5e-2 if COMPUTE_DTYPE == jnp.bfloat16 else 2e-3
    assert jnp.allclose(out, ref, atol=tol, rtol=tol), float(
        jnp.max(jnp.abs(out - ref)))
    print("KERNEL_OK")
</pallas_src>

<mosaic_0001>
module attributes {stable_mosaic.version = 11 : i64} {
  func.func @_fused_cnn_kernel(%arg0: i32, %arg1: memref<256x96xbf16, #tpu.memory_space<vmem>>, %arg2: memref<5x224x256xbf16, #tpu.memory_space<vmem>>, %arg3: memref<5x96x256xbf16, #tpu.memory_space<vmem>>, %arg4: memref<1x128xf32, #tpu.memory_space<vmem>>, %arg5: memref<5x80x112xbf16, #tpu.memory_space<vmem>>, %arg6: memref<5x128x256xbf16, #tpu.memory_space<vmem>>, %arg7: memref<1x128xf32, #tpu.memory_space<vmem>>, %arg8: memref<40x40xbf16, #tpu.memory_space<vmem>>, %arg9: memref<5x128x128xbf16, #tpu.memory_space<vmem>>, %arg10: memref<1x128xf32, #tpu.memory_space<vmem>>, %arg11: memref<128x128xbf16, #tpu.memory_space<vmem>>, %arg12: memref<1x128xf32, #tpu.memory_space<vmem>>, %arg13: memref<128x128xbf16, #tpu.memory_space<vmem>>, %arg14: memref<1x128xf32, #tpu.memory_space<vmem>>, %arg15: memref<8x128xf32, #tpu.memory_space<vmem>>) attributes {dimension_semantics = [#tpu.dimension_semantics<parallel>], iteration_bounds = array<i64: 1>, scalar_prefetch = 0 : i64, scratch_operands = 0 : i64, tpu.core_type = #tpu.core_type<tc>, window_params = [{transform_indices = @transform_0, window_bounds = array<i64: 256, 96>}, {pipeline_mode = #tpu.pipeline_mode<synchronous>, transform_indices = @transform_1, window_bounds = array<i64: 5, 224, 256>}, {pipeline_mode = #tpu.pipeline_mode<synchronous>, transform_indices = @transform_2, window_bounds = array<i64: 5, 96, 256>}, {pipeline_mode = #tpu.pipeline_mode<synchronous>, transform_indices = @transform_3, window_bounds = array<i64: 1, 128>}, {pipeline_mode = #tpu.pipeline_mode<synchronous>, transform_indices = @transform_4, window_bounds = array<i64: 5, 80, 112>}, {pipeline_mode = #tpu.pipeline_mode<synchronous>, transform_indices = @transform_5, window_bounds = array<i64: 5, 128, 256>}, {pipeline_mode = #tpu.pipeline_mode<synchronous>, transform_indices = @transform_6, window_bounds = array<i64: 1, 128>}, {pipeline_mode = #tpu.pipeline_mode<synchronous>, transform_indices = @transform_7, window_bounds = array<i64: 40, 40>}, {pipeline_mode = #tpu.pipeline_mode<synchronous>, transform_indices = @transform_8, window_bounds = array<i64: 5, 128, 128>}, {pipeline_mode = #tpu.pipeline_mode<synchronous>, transform_indices = @transform_9, window_bounds = array<i64: 1, 128>}, {pipeline_mode = #tpu.pipeline_mode<synchronous>, transform_indices = @transform_10, window_bounds = array<i64: 128, 128>}, {pipeline_mode = #tpu.pipeline_mode<synchronous>, transform_indices = @transform_11, window_bounds = array<i64: 1, 128>}, {pipeline_mode = #tpu.pipeline_mode<synchronous>, transform_indices = @transform_12, window_bounds = array<i64: 128, 128>}, {pipeline_mode = #tpu.pipeline_mode<synchronous>, transform_indices = @transform_13, window_bounds = array<i64: 1, 128>}, {transform_indices = @transform_14, window_bounds = array<i64: 8, 128>}]} {
    %c0 = arith.constant 0 : index
    %c0_0 = arith.constant 0 : index
    %0 = vector.load %arg1[%c0, %c0_0] : memref<256x96xbf16, #tpu.memory_space<vmem>>, vector<256x96xbf16>
    %cst = arith.constant 0.000000e+00 : f32
    %1 = vector.broadcast %cst : f32 to vector<224x256xf32>
    %c0_1 = arith.constant 0 : index
    %c0_2 = arith.constant 0 : index
    %c0_3 = arith.constant 0 : index
    %2 = vector.load %arg2[%c0_1, %c0_2, %c0_3] : memref<5x224x256xbf16, #tpu.memory_space<vmem>>, vector<1x224x256xbf16>
    %3 = vector.shape_cast %2 : vector<1x224x256xbf16> to vector<224x256xbf16>
    %cst_4 = arith.constant dense<0.000000e+00> : vector<224x96xf32>
    %4 = tpu.matmul %3, %0, %cst_4 {dimension_numbers = #tpu.dot_dimension_numbers<[1], [0], [0], [1], [0, 0, 1, 1], [], []>} : vector<224x256xbf16>, vector<256x96xbf16>, vector<224x96xf32> -> vector<224x96xf32>
    %5 = arith.truncf %4 : vector<224x96xf32> to vector<224x96xbf16>
    %c0_5 = arith.constant 0 : index
    %c0_6 = arith.constant 0 : index
    %c0_7 = arith.constant 0 : index
    %6 = vector.load %arg3[%c0_5, %c0_6, %c0_7] : memref<5x96x256xbf16, #tpu.memory_space<vmem>>, vector<1x96x256xbf16>
    %7 = vector.shape_cast %6 : vector<1x96x256xbf16> to vector<96x256xbf16>
    %cst_8 = arith.constant dense<0.000000e+00> : vector<224x256xf32>
    %8 = tpu.matmul %5, %7, %cst_8 {dimension_numbers = #tpu.dot_dimension_numbers<[1], [0], [0], [1], [0, 0, 1, 1], [], []>} : vector<224x96xbf16>, vector<96x256xbf16>, vector<224x256xf32> -> vector<224x256xf32>
    %9 = arith.addf %1, %8 : vector<224x256xf32>
    %c1 = arith.constant 1 : index
    %c0_9 = arith.constant 0 : index
    %c0_10 = arith.constant 0 : index
    %10 = vector.load %arg2[%c1, %c0_9, %c0_10] : memref<5x224x256xbf16, #tpu.memory_space<vmem>>, vector<1x224x256xbf16>
    %11 = vector.shape_cast %10 : vector<1x224x256xbf16> to vector<224x256xbf16>
    %cst_11 = arith.constant dense<0.000000e+00> : vector<224x96xf32>
    %12 = tpu.matmul %11, %0, %cst_11 {dimension_numbers = #tpu.dot_dimension_numbers<[1], [0], [0], [1], [0, 0, 1, 1], [], []>} : vector<224x256xbf16>, vector<256x96xbf16>, vector<224x96xf32> -> vector<224x96xf32>
    %13 = arith.truncf %12 : vector<224x96xf32> to vector<224x96xbf16>
    %c1_12 = arith.constant 1 : index
    %c0_13 = arith.constant 0 : index
    %c0_14 = arith.constant 0 : index
    %14 = vector.load %arg3[%c1_12, %c0_13, %c0_14] : memref<5x96x256xbf16, #tpu.memory_space<vmem>>, vector<1x96x256xbf16>
    %15 = vector.shape_cast %14 : vector<1x96x256xbf16> to vector<96x256xbf16>
    %cst_15 = arith.constant dense<0.000000e+00> : vector<224x256xf32>
    %16 = tpu.matmul %13, %15, %cst_15 {dimension_numbers = #tpu.dot_dimension_numbers<[1], [0], [0], [1], [0, 0, 1, 1], [], []>} : vector<224x96xbf16>, vector<96x256xbf16>, vector<224x256xf32> -> vector<224x256xf32>
    %17 = arith.addf %9, %16 : vector<224x256xf32>
    %c2 = arith.constant 2 : index
    %c0_16 = arith.constant 0 : index
    %c0_17 = arith.constant 0 : index
    %18 = vector.load %arg2[%c2, %c0_16, %c0_17] : memref<5x224x256xbf16, #tpu.memory_space<vmem>>, vector<1x224x256xbf16>
    %19 = vector.shape_cast %18 : vector<1x224x256xbf16> to vector<224x256xbf16>
    %cst_18 = arith.constant dense<0.000000e+00> : vector<224x96xf32>
    %20 = tpu.matmul %19, %0, %cst_18 {dimension_numbers = #tpu.dot_dimension_numbers<[1], [0], [0], [1], [0, 0, 1, 1], [], []>} : vector<224x256xbf16>, vector<256x96xbf16>, vector<224x96xf32> -> vector<224x96xf32>
    %21 = arith.truncf %20 : vector<224x96xf32> to vector<224x96xbf16>
    %c2_19 = arith.constant 2 : index
    %c0_20 = arith.constant 0 : index
    %c0_21 = arith.constant 0 : index
    %22 = vector.load %arg3[%c2_19, %c0_20, %c0_21] : memref<5x96x256xbf16, #tpu.memory_space<vmem>>, vector<1x96x256xbf16>
    %23 = vector.shape_cast %22 : vector<1x96x256xbf16> to vector<96x256xbf16>
    %cst_22 = arith.constant dense<0.000000e+00> : vector<224x256xf32>
    %24 = tpu.matmul %21, %23, %cst_22 {dimension_numbers = #tpu.dot_dimension_numbers<[1], [0], [0], [1], [0, 0, 1, 1], [], []>} : vector<224x96xbf16>, vector<96x256xbf16>, vector<224x256xf32> -> vector<224x256xf32>
    %25 = arith.addf %17, %24 : vector<224x256xf32>
    %c3 = arith.constant 3 : index
    %c0_23 = arith.constant 0 : index
    %c0_24 = arith.constant 0 : index
    %26 = vector.load %arg2[%c3, %c0_23, %c0_24] : memref<5x224x256xbf16, #tpu.memory_space<vmem>>, vector<1x224x256xbf16>
    %27 = vector.shape_cast %26 : vector<1x224x256xbf16> to vector<224x256xbf16>
    %cst_25 = arith.constant dense<0.000000e+00> : vector<224x96xf32>
    %28 = tpu.matmul %27, %0, %cst_25 {dimension_numbers = #tpu.dot_dimension_numbers<[1], [0], [0], [1], [0, 0, 1, 1], [], []>} : vector<224x256xbf16>, vector<256x96xbf16>, vector<224x96xf32> -> vector<224x96xf32>
    %29 = arith.truncf %28 : vector<224x96xf32> to vector<224x96xbf16>
    %c3_26 = arith.constant 3 : index
    %c0_27 = arith.constant 0 : index
    %c0_28 = arith.constant 0 : index
    %30 = vector.load %arg3[%c3_26, %c0_27, %c0_28] : memref<5x96x256xbf16, #tpu.memory_space<vmem>>, vector<1x96x256xbf16>
    %31 = vector.shape_cast %30 : vector<1x96x256xbf16> to vector<96x256xbf16>
    %cst_29 = arith.constant dense<0.000000e+00> : vector<224x256xf32>
    %32 = tpu.matmul %29, %31, %cst_29 {dimension_numbers = #tpu.dot_dimension_numbers<[1], [0], [0], [1], [0, 0, 1, 1], [], []>} : vector<224x96xbf16>, vector<96x256xbf16>, vector<224x256xf32> -> vector<224x256xf32>
    %33 = arith.addf %25, %32 : vector<224x256xf32>
    %c4 = arith.constant 4 : index
    %c0_30 = arith.constant 0 : index
    %c0_31 = arith.constant 0 : index
    %34 = vector.load %arg2[%c4, %c0_30, %c0_31] : memref<5x224x256xbf16, #tpu.memory_space<vmem>>, vector<1x224x256xbf16>
    %35 = vector.shape_cast %34 : vector<1x224x256xbf16> to vector<224x256xbf16>
    %cst_32 = arith.constant dense<0.000000e+00> : vector<224x96xf32>
    %36 = tpu.matmul %35, %0, %cst_32 {dimension_numbers = #tpu.dot_dimension_numbers<[1], [0], [0], [1], [0, 0, 1, 1], [], []>} : vector<224x256xbf16>, vector<256x96xbf16>, vector<224x96xf32> -> vector<224x96xf32>
    %37 = arith.truncf %36 : vector<224x96xf32> to vector<224x96xbf16>
    %c4_33 = arith.constant 4 : index
    %c0_34 = arith.constant 0 : index
    %c0_35 = arith.constant 0 : index
    %38 = vector.load %arg3[%c4_33, %c0_34, %c0_35] : memref<5x96x256xbf16, #tpu.memory_space<vmem>>, vector<1x96x256xbf16>
    %39 = vector.shape_cast %38 : vector<1x96x256xbf16> to vector<96x256xbf16>
    %cst_36 = arith.constant dense<0.000000e+00> : vector<224x256xf32>
    %40 = tpu.matmul %37, %39, %cst_36 {dimension_numbers = #tpu.dot_dimension_numbers<[1], [0], [0], [1], [0, 0, 1, 1], [], []>} : vector<224x96xbf16>, vector<96x256xbf16>, vector<224x256xf32> -> vector<224x256xf32>
    %41 = arith.addf %33, %40 : vector<224x256xf32>
    %42 = vector.extract_strided_slice %41 {offsets = [0, 0], sizes = [112, 256], strides = [1, 1]} : vector<224x256xf32> to vector<112x256xf32>
    %43 = vector.extract_strided_slice %41 {offsets = [112, 0], sizes = [112, 256], strides = [1, 1]} : vector<224x256xf32> to vector<112x256xf32>
    %44 = arith.maximumf %42, %43 : vector<112x256xf32>
    %45 = vector.extract_strided_slice %44 {offsets = [0, 0], sizes = [112, 128], strides = [1, 1]} : vector<112x256xf32> to vector<112x128xf32>
    %46 = vector.extract_strided_slice %44 {offsets = [0, 128], sizes = [112, 128], strides = [1, 1]} : vector<112x256xf32> to vector<112x128xf32>
    %47 = arith.maximumf %45, %46 : vector<112x128xf32>
    %c0_37 = arith.constant 0 : index
    %c0_38 = arith.constant 0 : index
    %48 = vector.load %arg4[%c0_37, %c0_38] : memref<1x128xf32, #tpu.memory_space<vmem>>, vector<1x128xf32>
    %49 = vector.broadcast %48 : vector<1x128xf32> to vector<112x128xf32>
    %50 = arith.addf %47, %49 : vector<112x128xf32>
    %cst_39 = arith.constant 0.000000e+00 : f32
    %51 = vector.broadcast %cst_39 : f32 to vector<112x128xf32>
    %52 = arith.maximumf %50, %51 : vector<112x128xf32>
    %53 = arith.truncf %52 : vector<112x128xf32> to vector<112x128xbf16>
    %cst_40 = arith.constant 0.000000e+00 : f32
    %54 = vector.broadcast %cst_40 : f32 to vector<80x256xf32>
    %c0_41 = arith.constant 0 : index
    %c0_42 = arith.constant 0 : index
    %c0_43 = arith.constant 0 : index
    %55 = vector.load %arg5[%c0_41, %c0_42, %c0_43] : memref<5x80x112xbf16, #tpu.memory_space<vmem>>, vector<1x80x112xbf16>
    %56 = vector.shape_cast %55 : vector<1x80x112xbf16> to vector<80x112xbf16>
    %cst_44 = arith.constant dense<0.000000e+00> : vector<80x128xf32>
    %57 = tpu.matmul %56, %53, %cst_44 {dimension_numbers = #tpu.dot_dimension_numbers<[1], [0], [0], [1], [0, 0, 1, 1], [], []>} : vector<80x112xbf16>, vector<112x128xbf16>, vector<80x128xf32> -> vector<80x128xf32>
    %58 = arith.truncf %57 : vector<80x128xf32> to vector<80x128xbf16>
    %c0_45 = arith.constant 0 : index
    %c0_46 = arith.constant 0 : index
    %c0_47 = arith.constant 0 : index
    %59 = vector.load %arg6[%c0_45, %c0_46, %c0_47] : memref<5x128x256xbf16, #tpu.memory_space<vmem>>, vector<1x128x256xbf16>
    %60 = vector.shape_cast %59 : vector<1x128x256xbf16> to vector<128x256xbf16>
    %cst_48 = arith.constant dense<0.000000e+00> : vector<80x256xf32>
    %61 = tpu.matmul %58, %60, %cst_48 {dimension_numbers = #tpu.dot_dimension_numbers<[1], [0], [0], [1], [0, 0, 1, 1], [], []>} : vector<80x128xbf16>, vector<128x256xbf16>, vector<80x256xf32> -> vector<80x256xf32>
    %62 = arith.addf %54, %61 : vector<80x256xf32>
    %c1_49 = arith.constant 1 : index
    %c0_50 = arith.constant 0 : index
    %c0_51 = arith.constant 0 : index
    %63 = vector.load %arg5[%c1_49, %c0_50, %c0_51] : memref<5x80x112xbf16, #tpu.memory_space<vmem>>, vector<1x80x112xbf16>
    %64 = vector.shape_cast %63 : vector<1x80x112xbf16> to vector<80x112xbf16>
    %cst_52 = arith.constant dense<0.000000e+00> : vector<80x128xf32>
    %65 = tpu.matmul %64, %53, %cst_52 {dimension_numbers = #tpu.dot_dimension_numbers<[1], [0], [0], [1], [0, 0, 1, 1], [], []>} : vector<80x112xbf16>, vector<112x128xbf16>, vector<80x128xf32> -> vector<80x128xf32>
    %66 = arith.truncf %65 : vector<80x128xf32> to vector<80x128xbf16>
    %c1_53 = arith.constant 1 : index
    %c0_54 = arith.constant 0 : index
    %c0_55 = arith.constant 0 : index
    %67 = vector.load %arg6[%c1_53, %c0_54, %c0_55] : memref<5x128x256xbf16, #tpu.memory_space<vmem>>, vector<1x128x256xbf16>
    %68 = vector.shape_cast %67 : vector<1x128x256xbf16> to vector<128x256xbf16>
    %cst_56 = arith.constant dense<0.000000e+00> : vector<80x256xf32>
    %69 = tpu.matmul %66, %68, %cst_56 {dimension_numbers = #tpu.dot_dimension_numbers<[1], [0], [0], [1], [0, 0, 1, 1], [], []>} : vector<80x128xbf16>, vector<128x256xbf16>, vector<80x256xf32> -> vector<80x256xf32>
    %70 = arith.addf %62, %69 : vector<80x256xf32>
    %c2_57 = arith.constant 2 : index
    %c0_58 = arith.constant 0 : index
    %c0_59 = arith.constant 0 : index
    %71 = vector.load %arg5[%c2_57, %c0_58, %c0_59] : memref<5x80x112xbf16, #tpu.memory_space<vmem>>, vector<1x80x112xbf16>
    %72 = vector.shape_cast %71 : vector<1x80x112xbf16> to vector<80x112xbf16>
    %cst_60 = arith.constant dense<0.000000e+00> : vector<80x128xf32>
    %73 = tpu.matmul %72, %53, %cst_60 {dimension_numbers = #tpu.dot_dimension_numbers<[1], [0], [0], [1], [0, 0, 1, 1], [], []>} : vector<80x112xbf16>, vector<112x128xbf16>, vector<80x128xf32> -> vector<80x128xf32>
    %74 = arith.truncf %73 : vector<80x128xf32> to vector<80x128xbf16>
    %c2_61 = arith.constant 2 : index
    %c0_62 = arith.constant 0 : index
    %c0_63 = arith.constant 0 : index
    %75 = vector.load %arg6[%c2_61, %c0_62, %c0_63] : memref<5x128x256xbf16, #tpu.memory_space<vmem>>, vector<1x128x256xbf16>
    %76 = vector.shape_cast %75 : vector<1x128x256xbf16> to vector<128x256xbf16>
    %cst_64 = arith.constant dense<0.000000e+00> : vector<80x256xf32>
    %77 = tpu.matmul %74, %76, %cst_64 {dimension_numbers = #tpu.dot_dimension_numbers<[1], [0], [0], [1], [0, 0, 1, 1], [], []>} : vector<80x128xbf16>, vector<128x256xbf16>, vector<80x256xf32> -> vector<80x256xf32>
    %78 = arith.addf %70, %77 : vector<80x256xf32>
    %c3_65 = arith.constant 3 : index
    %c0_66 = arith.constant 0 : index
    %c0_67 = arith.constant 0 : index
    %79 = vector.load %arg5[%c3_65, %c0_66, %c0_67] : memref<5x80x112xbf16, #tpu.memory_space<vmem>>, vector<1x80x112xbf16>
    %80 = vector.shape_cast %79 : vector<1x80x112xbf16> to vector<80x112xbf16>
    %cst_68 = arith.constant dense<0.000000e+00> : vector<80x128xf32>
    %81 = tpu.matmul %80, %53, %cst_68 {dimension_numbers = #tpu.dot_dimension_numbers<[1], [0], [0], [1], [0, 0, 1, 1], [], []>} : vector<80x112xbf16>, vector<112x128xbf16>, vector<80x128xf32> -> vector<80x128xf32>
    %82 = arith.truncf %81 : vector<80x128xf32> to vector<80x128xbf16>
    %c3_69 = arith.constant 3 : index
    %c0_70 = arith.constant 0 : index
    %c0_71 = arith.constant 0 : index
    %83 = vector.load %arg6[%c3_69, %c0_70, %c0_71] : memref<5x128x256xbf16, #tpu.memory_space<vmem>>, vector<1x128x256xbf16>
    %84 = vector.shape_cast %83 : vector<1x128x256xbf16> to vector<128x256xbf16>
    %cst_72 = arith.constant dense<0.000000e+00> : vector<80x256xf32>
    %85 = tpu.matmul %82, %84, %cst_72 {dimension_numbers = #tpu.dot_dimension_numbers<[1], [0], [0], [1], [0, 0, 1, 1], [], []>} : vector<80x128xbf16>, vector<128x256xbf16>, vector<80x256xf32> -> vector<80x256xf32>
    %86 = arith.addf %78, %85 : vector<80x256xf32>
    %c4_73 = arith.constant 4 : index
    %c0_74 = arith.constant 0 : index
    %c0_75 = arith.constant 0 : index
    %87 = vector.load %arg5[%c4_73, %c0_74, %c0_75] : memref<5x80x112xbf16, #tpu.memory_space<vmem>>, vector<1x80x112xbf16>
    %88 = vector.shape_cast %87 : vector<1x80x112xbf16> to vector<80x112xbf16>
    %cst_76 = arith.constant dense<0.000000e+00> : vector<80x128xf32>
    %89 = tpu.matmul %88, %53, %cst_76 {dimension_numbers = #tpu.dot_dimension_numbers<[1], [0], [0], [1], [0, 0, 1, 1], [], []>} : vector<80x112xbf16>, vector<112x128xbf16>, vector<80x128xf32> -> vector<80x128xf32>
    %90 = arith.truncf %89 : vector<80x128xf32> to vector<80x128xbf16>
    %c4_77 = arith.constant 4 : index
    %c0_78 = arith.constant 0 : index
    %c0_79 = arith.constant 0 : index
    %91 = vector.load %arg6[%c4_77, %c0_78, %c0_79] : memref<5x128x256xbf16, #tpu.memory_space<vmem>>, vector<1x128x256xbf16>
    %92 = vector.shape_cast %91 : vector<1x128x256xbf16> to vector<128x256xbf16>
    %cst_80 = arith.constant dense<0.000000e+00> : vector<80x256xf32>
    %93 = tpu.matmul %90, %92, %cst_80 {dimension_numbers = #tpu.dot_dimension_numbers<[1], [0], [0], [1], [0, 0, 1, 1], [], []>} : vector<80x128xbf16>, vector<128x256xbf16>, vector<80x256xf32> -> vector<80x256xf32>
    %94 = arith.addf %86, %93 : vector<80x256xf32>
    %95 = vector.extract_strided_slice %94 {offsets = [0, 0], sizes = [40, 256], strides = [1, 1]} : vector<80x256xf32> to vector<40x256xf32>
    %96 = vector.extract_strided_slice %94 {offsets = [40, 0], sizes = [40, 256], strides = [1, 1]} : vector<80x256xf32> to vector<40x256xf32>
    %97 = arith.maximumf %95, %96 : vector<40x256xf32>
    %98 = vector.extract_strided_slice %97 {offsets = [0, 0], sizes = [40, 128], strides = [1, 1]} : vector<40x256xf32> to vector<40x128xf32>
    %99 = vector.extract_strided_slice %97 {offsets = [0, 128], sizes = [40, 128], strides = [1, 1]} : vector<40x256xf32> to vector<40x128xf32>
    %100 = arith.maximumf %98, %99 : vector<40x128xf32>
    %c0_81 = arith.constant 0 : index
    %c0_82 = arith.constant 0 : index
    %101 = vector.load %arg7[%c0_81, %c0_82] : memref<1x128xf32, #tpu.memory_space<vmem>>, vector<1x128xf32>
    %102 = vector.broadcast %101 : vector<1x128xf32> to vector<40x128xf32>
    %103 = arith.addf %100, %102 : vector<40x128xf32>
    %cst_83 = arith.constant 0.000000e+00 : f32
    %104 = vector.broadcast %cst_83 : f32 to vector<40x128xf32>
    %105 = arith.maximumf %103, %104 : vector<40x128xf32>
    %106 = arith.truncf %105 : vector<40x128xf32> to vector<40x128xbf16>
    %c0_84 = arith.constant 0 : index
    %c0_85 = arith.constant 0 : index
    %107 = vector.load %arg8[%c0_84, %c0_85] : memref<40x40xbf16, #tpu.memory_space<vmem>>, vector<40x40xbf16>
    %cst_86 = arith.constant dense<0.000000e+00> : vector<40x128xf32>
    %108 = tpu.matmul %107, %106, %cst_86 {dimension_numbers = #tpu.dot_dimension_numbers<[1], [0], [0], [1], [0, 0, 1, 1], [], []>} : vector<40x40xbf16>, vector<40x128xbf16>, vector<40x128xf32> -> vector<40x128xf32>
    %109 = arith.truncf %108 : vector<40x128xf32> to vector<40x128xbf16>
    %cst_87 = arith.constant 0.000000e+00 : f32
    %110 = vector.broadcast %cst_87 : f32 to vector<8x128xf32>
    %111 = vector.extract_strided_slice %109 {offsets = [0, 0], sizes = [8, 128], strides = [1, 1]} : vector<40x128xbf16> to vector<8x128xbf16>
    %c0_88 = arith.constant 0 : index
    %c0_89 = arith.constant 0 : index
    %c0_90 = arith.constant 0 : index
    %112 = vector.load %arg9[%c0_88, %c0_89, %c0_90] : memref<5x128x128xbf16, #tpu.memory_space<vmem>>, vector<1x128x128xbf16>
    %113 = vector.shape_cast %112 : vector<1x128x128xbf16> to vector<128x128xbf16>
    %cst_91 = arith.constant dense<0.000000e+00> : vector<8x128xf32>
    %114 = tpu.matmul %111, %113, %cst_91 {dimension_numbers = #tpu.dot_dimension_numbers<[1], [0], [0], [1], [0, 0, 1, 1], [], []>} : vector<8x128xbf16>, vector<128x128xbf16>, vector<8x128xf32> -> vector<8x128xf32>
    %115 = arith.addf %110, %114 : vector<8x128xf32>
    %116 = vector.extract_strided_slice %109 {offsets = [8, 0], sizes = [8, 128], strides = [1, 1]} : vector<40x128xbf16> to vector<8x128xbf16>
    %c1_92 = arith.constant 1 : index
    %c0_93 = arith.constant 0 : index
    %c0_94 = arith.constant 0 : index
    %117 = vector.load %arg9[%c1_92, %c0_93, %c0_94] : memref<5x128x128xbf16, #tpu.memory_space<vmem>>, vector<1x128x128xbf16>
    %118 = vector.shape_cast %117 : vector<1x128x128xbf16> to vector<128x128xbf16>
    %cst_95 = arith.constant dense<0.000000e+00> : vector<8x128xf32>
    %119 = tpu.matmul %116, %118, %cst_95 {dimension_numbers = #tpu.dot_dimension_numbers<[1], [0], [0], [1], [0, 0, 1, 1], [], []>} : vector<8x128xbf16>, vector<128x128xbf16>, vector<8x128xf32> -> vector<8x128xf32>
    %120 = arith.addf %115, %119 : vector<8x128xf32>
    %121 = vector.extract_strided_slice %109 {offsets = [16, 0], sizes = [8, 128], strides = [1, 1]} : vector<40x128xbf16> to vector<8x128xbf16>
    %c2_96 = arith.constant 2 : index
    %c0_97 = arith.constant 0 : index
    %c0_98 = arith.constant 0 : index
    %122 = vector.load %arg9[%c2_96, %c0_97, %c0_98] : memref<5x128x128xbf16, #tpu.memory_space<vmem>>, vector<1x128x128xbf16>
    %123 = vector.shape_cast %122 : vector<1x128x128xbf16> to vector<128x128xbf16>
    %cst_99 = arith.constant dense<0.000000e+00> : vector<8x128xf32>
    %124 = tpu.matmul %121, %123, %cst_99 {dimension_numbers = #tpu.dot_dimension_numbers<[1], [0], [0], [1], [0, 0, 1, 1], [], []>} : vector<8x128xbf16>, vector<128x128xbf16>, vector<8x128xf32> -> vector<8x128xf32>
    %125 = arith.addf %120, %124 : vector<8x128xf32>
    %126 = vector.extract_strided_slice %109 {offsets = [24, 0], sizes = [8, 128], strides = [1, 1]} : vector<40x128xbf16> to vector<8x128xbf16>
    %c3_100 = arith.constant 3 : index
    %c0_101 = arith.constant 0 : index
    %c0_102 = arith.constant 0 : index
    %127 = vector.load %arg9[%c3_100, %c0_101, %c0_102] : memref<5x128x128xbf16, #tpu.memory_space<vmem>>, vector<1x128x128xbf16>
    %128 = vector.shape_cast %127 : vector<1x128x128xbf16> to vector<128x128xbf16>
    %cst_103 = arith.constant dense<0.000000e+00> : vector<8x128xf32>
    %129 = tpu.matmul %126, %128, %cst_103 {dimension_numbers = #tpu.dot_dimension_numbers<[1], [0], [0], [1], [0, 0, 1, 1], [], []>} : vector<8x128xbf16>, vector<128x128xbf16>, vector<8x128xf32> -> vector<8x128xf32>
    %130 = arith.addf %125, %129 : vector<8x128xf32>
    %131 = vector.extract_strided_slice %109 {offsets = [32, 0], sizes = [8, 128], strides = [1, 1]} : vector<40x128xbf16> to vector<8x128xbf16>
    %c4_104 = arith.constant 4 : index
    %c0_105 = arith.constant 0 : index
    %c0_106 = arith.constant 0 : index
    %132 = vector.load %arg9[%c4_104, %c0_105, %c0_106] : memref<5x128x128xbf16, #tpu.memory_space<vmem>>, vector<1x128x128xbf16>
    %133 = vector.shape_cast %132 : vector<1x128x128xbf16> to vector<128x128xbf16>
    %cst_107 = arith.constant dense<0.000000e+00> : vector<8x128xf32>
    %134 = tpu.matmul %131, %133, %cst_107 {dimension_numbers = #tpu.dot_dimension_numbers<[1], [0], [0], [1], [0, 0, 1, 1], [], []>} : vector<8x128xbf16>, vector<128x128xbf16>, vector<8x128xf32> -> vector<8x128xf32>
    %135 = arith.addf %130, %134 : vector<8x128xf32>
    %c0_108 = arith.constant 0 : index
    %c0_109 = arith.constant 0 : index
    %136 = vector.load %arg10[%c0_108, %c0_109] : memref<1x128xf32, #tpu.memory_space<vmem>>, vector<1x128xf32>
    %137 = vector.broadcast %136 : vector<1x128xf32> to vector<8x128xf32>
    %138 = arith.addf %135, %137 : vector<8x128xf32>
    %cst_110 = arith.constant 0.000000e+00 : f32
    %139 = vector.broadcast %cst_110 : f32 to vector<8x128xf32>
    %140 = arith.maximumf %138, %139 : vector<8x128xf32>
    %141 = arith.truncf %140 : vector<8x128xf32> to vector<8x128xbf16>
    %c0_111 = arith.constant 0 : index
    %c0_112 = arith.constant 0 : index
    %142 = vector.load %arg11[%c0_111, %c0_112] : memref<128x128xbf16, #tpu.memory_space<vmem>>, vector<128x128xbf16>
    %cst_113 = arith.constant dense<0.000000e+00> : vector<8x128xf32>
    %143 = tpu.matmul %141, %142, %cst_113 {dimension_numbers = #tpu.dot_dimension_numbers<[1], [0], [0], [1], [0, 0, 1, 1], [], []>} : vector<8x128xbf16>, vector<128x128xbf16>, vector<8x128xf32> -> vector<8x128xf32>
    %c0_114 = arith.constant 0 : index
    %c0_115 = arith.constant 0 : index
    %144 = vector.load %arg12[%c0_114, %c0_115] : memref<1x128xf32, #tpu.memory_space<vmem>>, vector<1x128xf32>
    %145 = vector.broadcast %144 : vector<1x128xf32> to vector<8x128xf32>
    %146 = arith.addf %143, %145 : vector<8x128xf32>
    %cst_116 = arith.constant 0.000000e+00 : f32
    %147 = vector.broadcast %cst_116 : f32 to vector<8x128xf32>
    %148 = arith.maximumf %146, %147 : vector<8x128xf32>
    %149 = arith.truncf %148 : vector<8x128xf32> to vector<8x128xbf16>
    %c0_117 = arith.constant 0 : index
    %c0_118 = arith.constant 0 : index
    %150 = vector.load %arg13[%c0_117, %c0_118] : memref<128x128xbf16, #tpu.memory_space<vmem>>, vector<128x128xbf16>
    %cst_119 = arith.constant dense<0.000000e+00> : vector<8x128xf32>
    %151 = tpu.matmul %149, %150, %cst_119 {dimension_numbers = #tpu.dot_dimension_numbers<[1], [0], [0], [1], [0, 0, 1, 1], [], []>} : vector<8x128xbf16>, vector<128x128xbf16>, vector<8x128xf32> -> vector<8x128xf32>
    %c0_120 = arith.constant 0 : index
    %c0_121 = arith.constant 0 : index
    %152 = vector.load %arg14[%c0_120, %c0_121] : memref<1x128xf32, #tpu.memory_space<vmem>>, vector<1x128xf32>
    %153 = vector.broadcast %152 : vector<1x128xf32> to vector<8x128xf32>
    %154 = arith.addf %151, %153 : vector<8x128xf32>
    %c0_122 = arith.constant 0 : index
    %c0_123 = arith.constant 0 : index
    %155 = vector.load %arg15[%c0_122, %c0_123] : memref<8x128xf32, #tpu.memory_space<vmem>>, vector<8x128xf32>
    tpu.vector_store %arg15[%c0_122, %c0_123], %154 {strides = array<i32>} : memref<8x128xf32, #tpu.memory_space<vmem>>, vector<8x128xf32>,
    return
  }
  func.func @transform_0(%arg0: i32) -> (i32, i32) {
    %c0_i32 = arith.constant 0 : i32
    %c0_i32_0 = arith.constant 0 : i32
    return %arg0, %c0_i32 : i32, i32
  }
  func.func @transform_1(%arg0: i32) -> (i32, i32, i32) {
    %c0_i32 = arith.constant 0 : i32
    %c0_i32_0 = arith.constant 0 : i32
    %c0_i32_1 = arith.constant 0 : i32
    %c0_i32_2 = arith.constant 0 : i32
    return %c0_i32, %c0_i32_0, %c0_i32_1 : i32, i32, i32
  }
  func.func @transform_2(%arg0: i32) -> (i32, i32, i32) {
    %c0_i32 = arith.constant 0 : i32
    %c0_i32_0 = arith.constant 0 : i32
    %c0_i32_1 = arith.constant 0 : i32
    %c0_i32_2 = arith.constant 0 : i32
    return %c0_i32, %c0_i32_0, %c0_i32_1 : i32, i32, i32
  }
  func.func @transform_3(%arg0: i32) -> (i32, i32) {
    %c0_i32 = arith.constant 0 : i32
    %c0_i32_0 = arith.constant 0 : i32
    %c0_i32_1 = arith.constant 0 : i32
    return %c0_i32, %c0_i32_0 : i32, i32
  }
  func.func @transform_4(%arg0: i32) -> (i32, i32, i32) {
    %c0_i32 = arith.constant 0 : i32
    %c0_i32_0 = arith.constant 0 : i32
    %c0_i32_1 = arith.constant 0 : i32
    %c0_i32_2 = arith.constant 0 : i32
    return %c0_i32, %c0_i32_0, %c0_i32_1 : i32, i32, i32
  }
  func.func @transform_5(%arg0: i32) -> (i32, i32, i32) {
    %c0_i32 = arith.constant 0 : i32
    %c0_i32_0 = arith.constant 0 : i32
    %c0_i32_1 = arith.constant 0 : i32
    %c0_i32_2 = arith.constant 0 : i32
    return %c0_i32, %c0_i32_0, %c0_i32_1 : i32, i32, i32
  }
  func.func @transform_6(%arg0: i32) -> (i32, i32) {
    %c0_i32 = arith.constant 0 : i32
    %c0_i32_0 = arith.constant 0 : i32
    %c0_i32_1 = arith.constant 0 : i32
    return %c0_i32, %c0_i32_0 : i32, i32
  }
  func.func @transform_7(%arg0: i32) -> (i32, i32) {
    %c0_i32 = arith.constant 0 : i32
    %c0_i32_0 = arith.constant 0 : i32
    %c0_i32_1 = arith.constant 0 : i32
    return %c0_i32, %c0_i32_0 : i32, i32
  }
  func.func @transform_8(%arg0: i32) -> (i32, i32, i32) {
    %c0_i32 = arith.constant 0 : i32
    %c0_i32_0 = arith.constant 0 : i32
    %c0_i32_1 = arith.constant 0 : i32
    %c0_i32_2 = arith.constant 0 : i32
    return %c0_i32, %c0_i32_0, %c0_i32_1 : i32, i32, i32
  }
  func.func @transform_9(%arg0: i32) -> (i32, i32) {
    %c0_i32 = arith.constant 0 : i32
    %c0_i32_0 = arith.constant 0 : i32
    %c0_i32_1 = arith.constant 0 : i32
    return %c0_i32, %c0_i32_0 : i32, i32
  }
  func.func @transform_10(%arg0: i32) -> (i32, i32) {
    %c0_i32 = arith.constant 0 : i32
    %c0_i32_0 = arith.constant 0 : i32
    %c0_i32_1 = arith.constant 0 : i32
    return %c0_i32, %c0_i32_0 : i32, i32
  }
  func.func @transform_11(%arg0: i32) -> (i32, i32) {
    %c0_i32 = arith.constant 0 : i32
    %c0_i32_0 = arith.constant 0 : i32
    %c0_i32_1 = arith.constant 0 : i32
    return %c0_i32, %c0_i32_0 : i32, i32
  }
  func.func @transform_12(%arg0: i32) -> (i32, i32) {
    %c0_i32 = arith.constant 0 : i32
    %c0_i32_0 = arith.constant 0 : i32
    %c0_i32_1 = arith.constant 0 : i32
    return %c0_i32, %c0_i32_0 : i32, i32
  }
  func.func @transform_13(%arg0: i32) -> (i32, i32) {
    %c0_i32 = arith.constant 0 : i32
    %c0_i32_0 = arith.constant 0 : i32
    %c0_i32_1 = arith.constant 0 : i32
    return %c0_i32, %c0_i32_0 : i32, i32
  }
  func.func @transform_14(%arg0: i32) -> (i32, i32) {
    %c0_i32 = arith.constant 0 : i32
    %c0_i32_0 = arith.constant 0 : i32
    return %arg0, %c0_i32 : i32, i32
  }
}

</mosaic_0001>

<llo_original>
// kernel: cnn_cifar_forward.1
$region0: #{cnn_cifar_forward.1}
  #allocation0 [shape = 'u32[]', space=smem, size = 0x4, offset = 0x4, fixed_abs, tag = 'smem constant byte address 0x4 - core index']
  #allocation1 [shape = 'u32[144,128]{1,0:T(1,128)}', space=vmem, size = 0x12000, scoped, tag = 'internal scratch']
  %s0 = inlined_call_operand.vmem [shape: bf16[256,96], index: 0, kind: input, shape index: {}]
  %s1 = inlined_call_operand.hbm [shape: bf16[5,224,256], index: 1, kind: input, shape index: {}]
  %s2 = inlined_call_operand.hbm [shape: bf16[5,96,256], index: 2, kind: input, shape index: {}]
  %s3 = inlined_call_operand.vmem [shape: f32[1,128], index: 3, kind: input, shape index: {}]
  %s4 = inlined_call_operand.hbm [shape: bf16[5,80,112], index: 4, kind: input, shape index: {}]
  %s5 = inlined_call_operand.vmem [shape: bf16[5,128,256], index: 5, kind: input, shape index: {}]
  %s6 = inlined_call_operand.vmem [shape: f32[1,128], index: 6, kind: input, shape index: {}]
  %s7 = inlined_call_operand.vmem [shape: bf16[40,40], index: 7, kind: input, shape index: {}]
  %s8 = inlined_call_operand.hbm [shape: bf16[5,128,128], index: 8, kind: input, shape index: {}]
  %s9 = inlined_call_operand.vmem [shape: f32[1,128], index: 9, kind: input, shape index: {}]
  %s10 = inlined_call_operand.vmem [shape: bf16[128,128], index: 10, kind: input, shape index: {}]
  %s11 = inlined_call_operand.vmem [shape: f32[1,128], index: 11, kind: input, shape index: {}]
  %s12 = inlined_call_operand.vmem [shape: bf16[128,128], index: 12, kind: input, shape index: {}]
  %s13 = inlined_call_operand.vmem [shape: f32[1,128], index: 13, kind: input, shape index: {}]
  %s14 = inlined_call_operand.vmem [shape: f32[8,128], index: 14, kind: output, shape index: {}]
  %s15 = sld [smem:[#allocation0]]
  $region82: #{cnn_cifar_forward.1} parent=0
    _
  %s17 = ssub.s32 1, %s15
  %s18 = scalar_select 0, %s17, %s15
  $region1: #{cnn_cifar_forward.1} parent=0
    #allocation2 [shape = 'u8[573440]{0}', space=vmem, size = 0x8c000, scoped, tag = 'input window, operand 1, single buffered']
    #allocation3 [shape = 's32[1]{0}', space=sflag, size = 0x4, scoped, tag = 'scoped memory for cnn_cifar_forward.1']
    #allocation4 [shape = 'u8[245760]{0}', space=vmem, size = 0x3c000, scoped, tag = 'input window, operand 2, single buffered']
    #allocation5 [shape = 's32[1]{0}', space=sflag, size = 0x4, scoped, tag = 'scoped memory for cnn_cifar_forward.1']
    #allocation6 [shape = 'u8[102400]{0}', space=vmem, size = 0x19000, scoped, tag = 'input window, operand 4, single buffered']
    #allocation7 [shape = 'u8[163840]{0}', space=vmem, size = 0x28000, scoped, tag = 'input window, operand 8, single buffered']
    #allocation8 [shape = 's32[1]{0}', space=sflag, size = 0x4, scoped, tag = 'scoped memory for cnn_cifar_forward.1']
    %19 = vsyncpa [#allocation3], 0
    %20 = vsyncpa [#allocation5], 0
    %21 = vsyncpa [#allocation8], 0
    // Predicated region
    $region2: #{cnn_cifar_forward.1} parent=1 // pred_check
      _
    $region3: #{cnn_cifar_forward.1} parent=1 // pred_check_branch
      %23 = sbr.rel (0) target = $region5
    $region4: #{cnn_cifar_forward.1} parent=1 // pred_region
      _
    $region5: #{cnn_cifar_forward.1} parent=1 // pred_fallthru
      _
    // Predicated region
    $region6: #{cnn_cifar_forward.1} parent=1 // pred_check
      _
    $region7: #{cnn_cifar_forward.1} parent=1 // pred_check_branch
      %25 = sbr.rel (0) target = $region9
    $region8: #{cnn_cifar_forward.1} parent=1 // pred_region
      %s27 = ssub.s32 17920, 17920
      %28 = vsyncadd [#allocation3], %s27
      %s29 = sshll.u32 [#allocation2], 4
      %s30 = int_to_ptr.vmem [resolvable:$true] %s29
      %35 = dma.hbm_to_vmem [thread:$0]  %s1, 17920, %s30, [#allocation3], 128, 128, 8
    $region9: #{cnn_cifar_forward.1} parent=1 // pred_fallthru
      _
    // Predicated region
    $region10: #{cnn_cifar_forward.1} parent=1 // pred_check
      _
    $region11: #{cnn_cifar_forward.1} parent=1 // pred_check_branch
      %37 = sbr.rel (0) target = $region13
    $region12: #{cnn_cifar_forward.1} parent=1 // pred_region
      %s39 = ssub.s32 7680, 7680
      %40 = vsyncadd [#allocation5], %s39
      %s41 = sshll.u32 [#allocation4], 4
      %s42 = int_to_ptr.vmem [resolvable:$true] %s41
      %47 = dma.hbm_to_vmem [thread:$0]  %s2, 7680, %s42, [#allocation5], 128, 128, 8
    $region13: #{cnn_cifar_forward.1} parent=1 // pred_fallthru
      _
    // Predicated region
    $region14: #{cnn_cifar_forward.1} parent=1 // pred_check
      _
    $region15: #{cnn_cifar_forward.1} parent=1 // pred_check_branch
      %49 = sbr.rel (0) target = $region17
    $region16: #{cnn_cifar_forward.1} parent=1 // pred_region
      _
    $region17: #{cnn_cifar_forward.1} parent=1 // pred_fallthru
      _
    // Predicated region
    $region18: #{cnn_cifar_forward.1} parent=1 // pred_check
      _
    $region19: #{cnn_cifar_forward.1} parent=1 // pred_check_branch
      %51 = sbr.rel (0) target = $region21
    $region20: #{cnn_cifar_forward.1} parent=1 // pred_region
      %s53 = ssub.s32 3200, 3200
      %54 = vsyncadd [#allocation5], %s53
      %s55 = sshll.u32 [#allocation6], 4
      %s56 = int_to_ptr.vmem [resolvable:$true] %s55
      %61 = dma.hbm_to_vmem [thread:$0]  %s4, 3200, %s56, [#allocation5], 64, 64, 4
    $region21: #{cnn_cifar_forward.1} parent=1 // pred_fallthru
      _
    // Predicated region
    $region22: #{cnn_cifar_forward.1} parent=1 // pred_check
      _
    $region23: #{cnn_cifar_forward.1} parent=1 // pred_check_branch
      %63 = sbr.rel (0) target = $region25
    $region24: #{cnn_cifar_forward.1} parent=1 // pred_region
      _
    $region25: #{cnn_cifar_forward.1} parent=1 // pred_fallthru
      _
    // Predicated region
    $region26: #{cnn_cifar_forward.1} parent=1 // pred_check
      _
    $region27: #{cnn_cifar_forward.1} parent=1 // pred_check_branch
      %65 = sbr.rel (0) target = $region29
    $region28: #{cnn_cifar_forward.1} parent=1 // pred_region
      _
    $region29: #{cnn_cifar_forward.1} parent=1 // pred_fallthru
      _
    // Predicated region
    $region30: #{cnn_cifar_forward.1} parent=1 // pred_check
      _
    $region31: #{cnn_cifar_forward.1} parent=1 // pred_check_branch
      %67 = sbr.rel (0) target = $region33
    $region32: #{cnn_cifar_forward.1} parent=1 // pred_region
      _
    $region33: #{cnn_cifar_forward.1} parent=1 // pred_fallthru
      _
    // Predicated region
    $region34: #{cnn_cifar_forward.1} parent=1 // pred_check
      _
    $region35: #{cnn_cifar_forward.1} parent=1 // pred_check_branch
      %69 = sbr.rel (0) target = $region37
    $region36: #{cnn_cifar_forward.1} parent=1 // pred_region
      %s71 = ssub.s32 5120, 5120
      %72 = vsyncadd [#allocation8], %s71
      %s73 = sshll.u32 [#allocation7], 4
      %s74 = int_to_ptr.vmem [resolvable:$true] %s73
      %79 = dma.hbm_to_vmem [thread:$0]  %s8, 5120, %s74, [#allocation8], 64, 64, 4
    $region37: #{cnn_cifar_forward.1} parent=1 // pred_fallthru
      _
    // Predicated region
    $region38: #{cnn_cifar_forward.1} parent=1 // pred_check
      _
    $region39: #{cnn_cifar_forward.1} parent=1 // pred_check_branch
      %81 = sbr.rel (0) target = $region41
    $region40: #{cnn_cifar_forward.1} parent=1 // pred_region
      _
    $region41: #{cnn_cifar_forward.1} parent=1 // pred_fallthru
      _
    // Predicated region
    $region42: #{cnn_cifar_forward.1} parent=1 // pred_check
      _
    $region43: #{cnn_cifar_forward.1} parent=1 // pred_check_branch
      %83 = sbr.rel (0) target = $region45
    $region44: #{cnn_cifar_forward.1} parent=1 // pred_region
      _
    $region45: #{cnn_cifar_forward.1} parent=1 // pred_fallthru
      _
    // Predicated region
    $region46: #{cnn_cifar_forward.1} parent=1 // pred_check
      _
    $region47: #{cnn_cifar_forward.1} parent=1 // pred_check_branch
      %85 = sbr.rel (0) target = $region49
    $region48: #{cnn_cifar_forward.1} parent=1 // pred_region
      _
    $region49: #{cnn_cifar_forward.1} parent=1 // pred_fallthru
      _
    // Predicated region
    $region50: #{cnn_cifar_forward.1} parent=1 // pred_check
      _
    $region51: #{cnn_cifar_forward.1} parent=1 // pred_check_branch
      %87 = sbr.rel (0) target = $region53
    $region52: #{cnn_cifar_forward.1} parent=1 // pred_region
      _
    $region53: #{cnn_cifar_forward.1} parent=1 // pred_fallthru
      _
    // Predicated region
    $region54: #{cnn_cifar_forward.1} parent=1 // pred_check
      _
    $region55: #{cnn_cifar_forward.1} parent=1 // pred_check_branch
      %89 = sbr.rel (0) target = $region57
    $region56: #{cnn_cifar_forward.1} parent=1 // pred_region
      _
    $region57: #{cnn_cifar_forward.1} parent=1 // pred_fallthru
      _
    // Predicated region
    $region58: #{cnn_cifar_forward.1} parent=1 // pred_check
      _
    $region59: #{cnn_cifar_forward.1} parent=1 // pred_check_branch
      %91 = sbr.rel (0) target = $region61
    $region60: #{cnn_cifar_forward.1} parent=1 // pred_region
      %92 = dma.done [#allocation3], 17920
    $region61: #{cnn_cifar_forward.1} parent=1 // pred_fallthru
      _
    // Predicated region
    $region62: #{cnn_cifar_forward.1} parent=1 // pred_check
      _
    $region63: #{cnn_cifar_forward.1} parent=1 // pred_check_branch
      %94 = sbr.rel (0) target = $region65
    $region64: #{cnn_cifar_forward.1} parent=1 // pred_region
      %95 = dma.done [#allocation5], 7680
    $region65: #{cnn_cifar_forward.1} parent=1 // pred_fallthru
      _
    // Predicated region
    $region66: #{cnn_cifar_forward.1} parent=1 // pred_check
      _
    $region67: #{cnn_cifar_forward.1} parent=1 // pred_check_branch
      %97 = sbr.rel (0) target = $region69
    $region68: #{cnn_cifar_forward.1} parent=1 // pred_region
      %98 = dma.done [#allocation5], 3200
    $region69: #{cnn_cifar_forward.1} parent=1 // pred_fallthru
      _
    // Predicated region
    $region70: #{cnn_cifar_forward.1} parent=1 // pred_check
      _
    $region71: #{cnn_cifar_forward.1} parent=1 // pred_check_branch
      %100 = sbr.rel (0) target = $region73
    $region72: #{cnn_cifar_forward.1} parent=1 // pred_region
      %101 = dma.done [#allocation8], 5120
    $region73: #{cnn_cifar_forward.1} parent=1 // pred_fallthru
      _
    %v103 = vld [vmem:[%s0] sm:$0xf]
    %v104 = vld [vmem:[%s0 + $0x4] sm:$0xf]
    %v105 = vld [vmem:[%s0 + $0x8] sm:$0xf]
    %v106 = vld [vmem:[%s0 + $0xc] sm:$0xf]
    %v107 = vld [vmem:[%s0 + $0x10] sm:$0xf]
    %v108 = vld [vmem:[%s0 + $0x14] sm:$0xf]
    %v109 = vld [vmem:[%s0 + $0x18] sm:$0xf]
    %v110 = vld [vmem:[%s0 + $0x1c] sm:$0xf]
    %v111 = vld [vmem:[%s0 + $0x20] sm:$0xf]
    %v112 = vld [vmem:[%s0 + $0x24] sm:$0xf]
    %v113 = vld [vmem:[%s0 + $0x28] sm:$0xf]
    %v114 = vld [vmem:[%s0 + $0x2c] sm:$0xf]
    %v115 = vld [vmem:[%s0 + $0x30] sm:$0xf]
    %v116 = vld [vmem:[%s0 + $0x34] sm:$0xf]
    %v117 = vld [vmem:[%s0 + $0x38] sm:$0xf]
    %v118 = vld [vmem:[%s0 + $0x3c] sm:$0xf]
    %v119 = vld [vmem:[%s0 + $0x40] sm:$0xf]
    %v120 = vld [vmem:[%s0 + $0x44] sm:$0xf]
    %v121 = vld [vmem:[%s0 + $0x48] sm:$0xf]
    %v122 = vld [vmem:[%s0 + $0x4c] sm:$0xf]
    %v123 = vld [vmem:[%s0 + $0x50] sm:$0xf]
    %v124 = vld [vmem:[%s0 + $0x54] sm:$0xf]
    %v125 = vld [vmem:[%s0 + $0x58] sm:$0xf]
    %v126 = vld [vmem:[%s0 + $0x5c] sm:$0xf]
    %v127 = vld [vmem:[%s0 + $0x60] sm:$0xf]
    %v128 = vld [vmem:[%s0 + $0x64] sm:$0xf]
    %v129 = vld [vmem:[%s0 + $0x68] sm:$0xf]
    %v130 = vld [vmem:[%s0 + $0x6c] sm:$0xf]
    %v131 = vld [vmem:[%s0 + $0x70] sm:$0xf]
    %v132 = vld [vmem:[%s0 + $0x74] sm:$0xf]
    %v133 = vld [vmem:[%s0 + $0x78] sm:$0xf]
    %v134 = vld [vmem:[%s0 + $0x7c] sm:$0xf]
    %v135 = vld [vmem:[#allocation2] sm:$0xff]
    %v136 = vld [vmem:[#allocation2 + $0x8] sm:$0xff]
    %v137 = vld [vmem:[#allocation2 + $0x10] sm:$0xff]
    %v138 = vld [vmem:[#allocation2 + $0x18] sm:$0xff]
    %v139 = vld [vmem:[#allocation2 + $0x20] sm:$0xff]
    %v140 = vld [vmem:[#allocation2 + $0x28] sm:$0xff]
    %v141 = vld [vmem:[#allocation2 + $0x30] sm:$0xff]
    %v142 = vld [vmem:[#allocation2 + $0x38] sm:$0xff]
    %v143 = vld [vmem:[#allocation2 + $0x40] sm:$0xff]
    %v144 = vld [vmem:[#allocation2 + $0x48] sm:$0xff]
    %v145 = vld [vmem:[#allocation2 + $0x50] sm:$0xff]
    %v146 = vld [vmem:[#allocation2 + $0x58] sm:$0xff]
    %v147 = vld [vmem:[#allocation2 + $0x60] sm:$0xff]
    %v148 = vld [vmem:[#allocation2 + $0x68] sm:$0xff]
    %v149 = vld [vmem:[#allocation2 + $0x70] sm:$0xff]
    %v150 = vld [vmem:[#allocation2 + $0x78] sm:$0xff]
    %v151 = vld [vmem:[#allocation2 + $0x80] sm:$0xff]
    %v152 = vld [vmem:[#allocation2 + $0x88] sm:$0xff]
    %v153 = vld [vmem:[#allocation2 + $0x90] sm:$0xff]
    %v154 = vld [vmem:[#allocation2 + $0x98] sm:$0xff]
    %v155 = vld [vmem:[#allocation2 + $0xa0] sm:$0xff]
    %v156 = vld [vmem:[#allocation2 + $0xa8] sm:$0xff]
    %v157 = vld [vmem:[#allocation2 + $0xb0] sm:$0xff]
    %v158 = vld [vmem:[#allocation2 + $0xb8] sm:$0xff]
    %v159 = vld [vmem:[#allocation2 + $0xc0] sm:$0xff]
    %v160 = vld [vmem:[#allocation2 + $0xc8] sm:$0xff]
    %v161 = vld [vmem:[#allocation2 + $0xd0] sm:$0xff]
    %v162 = vld [vmem:[#allocation2 + $0xd8] sm:$0xff]
    %v191 = vunpack.c.l.b16 %v135
    %v192 = vunpack.c.h.b16 %v135
    %v193 = vunpack.c.l.b16 %v136
    %v194 = vunpack.c.h.b16 %v136
    %v195 = vunpack.c.l.b16 %v137
    %v196 = vunpack.c.h.b16 %v137
    %v197 = vunpack.c.l.b16 %v138
    %v198 = vunpack.c.h.b16 %v138
    %v199 = vunpack.c.l.b16 %v139
    %v200 = vunpack.c.h.b16 %v139
    %v201 = vunpack.c.l.b16 %v140
    %v202 = vunpack.c.h.b16 %v140
    %v203 = vunpack.c.l.b16 %v141
    %v204 = vunpack.c.h.b16 %v141
    %v205 = vunpack.c.l.b16 %v142
    %v206 = vunpack.c.h.b16 %v142
    %v207 = vunpack.c.l.b16 %v143
    %v208 = vunpack.c.h.b16 %v143
    %v209 = vunpack.c.l.b16 %v144
    %v210 = vunpack.c.h.b16 %v144
    %v211 = vunpack.c.l.b16 %v145
    %v212 = vunpack.c.h.b16 %v145
    %v213 = vunpack.c.l.b16 %v146
    %v214 = vunpack.c.h.b16 %v146
    %v215 = vunpack.c.l.b16 %v147
    %v216 = vunpack.c.h.b16 %v147
    %v217 = vunpack.c.l.b16 %v148
    %v218 = vunpack.c.h.b16 %v148
    %v219 = vunpack.c.l.b16 %v149
    %v220 = vunpack.c.h.b16 %v149
    %v221 = vunpack.c.l.b16 %v150
    %v222 = vunpack.c.h.b16 %v150
    %v223 = vunpack.c.l.b16 %v151
    %v224 = vunpack.c.h.b16 %v151
    %v225 = vunpack.c.l.b16 %v152
    %v226 = vunpack.c.h.b16 %v152
    %v227 = vunpack.c.l.b16 %v153
    %v228 = vunpack.c.h.b16 %v153
    %v229 = vunpack.c.l.b16 %v154
    %v230 = vunpack.c.h.b16 %v154
    %v231 = vunpack.c.l.b16 %v155
    %v232 = vunpack.c.h.b16 %v155
    %v233 = vunpack.c.l.b16 %v156
    %v234 = vunpack.c.h.b16 %v156
    %v235 = vunpack.c.l.b16 %v157
    %v236 = vunpack.c.h.b16 %v157
    %v237 = vunpack.c.l.b16 %v158
    %v238 = vunpack.c.h.b16 %v158
    %v239 = vunpack.c.l.b16 %v159
    %v240 = vunpack.c.h.b16 %v159
    %v241 = vunpack.c.l.b16 %v160
    %v242 = vunpack.c.h.b16 %v160
    %v243 = vunpack.c.l.b16 %v161
    %v244 = vunpack.c.h.b16 %v161
    %v245 = vunpack.c.l.b16 %v162
    %v246 = vunpack.c.h.b16 %v162
    %v247 = vpack.c.b16 %v193, %v191
    %v248 = vpack.c.b16 %v194, %v192
    %v249 = vpack.c.b16 %v197, %v195
    %v250 = vpack.c.b16 %v198, %v196
    %v251 = vpack.c.b16 %v201, %v199
    %v252 = vpack.c.b16 %v202, %v200
    %v253 = vpack.c.b16 %v205, %v203
    %v254 = vpack.c.b16 %v206, %v204
    %v255 = vpack.c.b16 %v209, %v207
    %v256 = vpack.c.b16 %v210, %v208
    %v257 = vpack.c.b16 %v213, %v211
    %v258 = vpack.c.b16 %v214, %v212
    %v259 = vpack.c.b16 %v217, %v215
    %v260 = vpack.c.b16 %v218, %v216
    %v261 = vpack.c.b16 %v221, %v219
    %v262 = vpack.c.b16 %v222, %v220
    %v263 = vpack.c.b16 %v225, %v223
    %v264 = vpack.c.b16 %v226, %v224
    %v265 = vpack.c.b16 %v229, %v227
    %v266 = vpack.c.b16 %v230, %v228
    %v267 = vpack.c.b16 %v233, %v231
    %v268 = vpack.c.b16 %v234, %v232
    %v269 = vpack.c.b16 %v237, %v235
    %v270 = vpack.c.b16 %v238, %v236
    %v271 = vpack.c.b16 %v241, %v239
    %v272 = vpack.c.b16 %v242, %v240
    %v273 = vpack.c.b16 %v245, %v243
    %v274 = vpack.c.b16 %v246, %v244
    %v335 = vunpack.c.l.b16 %v103
    %v336 = vunpack.c.l.b16 %v104
    %v337 = vunpack.c.l.b16 %v105
    %v338 = vunpack.c.l.b16 %v106
    %v339 = vunpack.c.l.b16 %v107
    %v340 = vunpack.c.l.b16 %v108
    %v341 = vunpack.c.l.b16 %v109
    %v342 = vunpack.c.l.b16 %v110
    %v343 = vunpack.c.l.b16 %v111
    %v344 = vunpack.c.l.b16 %v112
    %v345 = vunpack.c.l.b16 %v113
    %v346 = vunpack.c.l.b16 %v114
    %v347 = vunpack.c.l.b16 %v115
    %v348 = vunpack.c.l.b16 %v116
    %v349 = vunpack.c.l.b16 %v117
    %v350 = vunpack.c.l.b16 %v118
    %v351 = vunpack.c.l.b16 %v119
    %v352 = vunpack.c.l.b16 %v120
    %v353 = vunpack.c.l.b16 %v121
    %v354 = vunpack.c.l.b16 %v122
    %v355 = vunpack.c.l.b16 %v123
    %v356 = vunpack.c.l.b16 %v124
    %v357 = vunpack.c.l.b16 %v125
    %v358 = vunpack.c.l.b16 %v126
    %v359 = vunpack.c.l.b16 %v127
    %v360 = vunpack.c.l.b16 %v128
    %v361 = vunpack.c.l.b16 %v129
    %v362 = vunpack.c.l.b16 %v130
    %v363 = vunpack.c.l.b16 %v131
    %v364 = vunpack.c.l.b16 %v132
    %v365 = vunpack.c.l.b16 %v133
    %v366 = vunpack.c.l.b16 %v134
    %v367 = vpack.c.b16 %v336, %v335
    %v368 = vpack.c.b16 %v338, %v337
    %v369 = vpack.c.b16 %v340, %v339
    %v370 = vpack.c.b16 %v342, %v341
    %v371 = vpack.c.b16 %v344, %v343
    %v372 = vpack.c.b16 %v346, %v345
    %v373 = vpack.c.b16 %v348, %v347
    %v374 = vpack.c.b16 %v350, %v349
    %v375 = vpack.c.b16 %v352, %v351
    %v376 = vpack.c.b16 %v354, %v353
    %v377 = vpack.c.b16 %v356, %v355
    %v378 = vpack.c.b16 %v358, %v357
    %v379 = vpack.c.b16 %v360, %v359
    %v380 = vpack.c.b16 %v362, %v361
    %v381 = vpack.c.b16 %v364, %v363
    %v382 = vpack.c.b16 %v366, %v365
    %399 = vmatprep.subr.bf16.mxu0 0
    %400 = vmatpush1.bf16.msra.mxu0 %v367
    %401 = vmatprep.subr.bf16.mxu0 0
    %402 = vmatpush1.bf16.msra.mxu0 %v368
    %403 = vmatprep.subr.bf16.mxu0 0
    %404 = vmatpush1.bf16.msra.mxu0 %v369
    %405 = vmatprep.subr.bf16.mxu0 0
    %406 = vmatpush1.bf16.msra.mxu0 %v370
    %407 = vmatprep.subr.bf16.mxu0 0
    %408 = vmatpush1.bf16.msra.mxu0 %v371
    %409 = vmatprep.subr.bf16.mxu0 0
    %410 = vmatpush1.bf16.msra.mxu0 %v372
    %411 = vmatprep.subr.bf16.mxu0 0
    %412 = vmatpush1.bf16.msra.mxu0 %v373
    %413 = vmatprep.subr.bf16.mxu0 0
    %414 = vmatpush1.bf16.msra.mxu0 %v374
    %415 = vmatprep.subr.bf16.mxu0 0
    %416 = vmatpush1.bf16.msra.mxu0 %v375
    %417 = vmatprep.subr.bf16.mxu0 0
    %418 = vmatpush1.bf16.msra.mxu0 %v376
    %419 = vmatprep.subr.bf16.mxu0 0
    %420 = vmatpush1.bf16.msra.mxu0 %v377
    %421 = vmatprep.subr.bf16.mxu0 0
    %422 = vmatpush1.bf16.msra.mxu0 %v378
    %423 = vmatprep.subr.bf16.mxu0 0
    %424 = vmatpush1.bf16.msra.mxu0 %v379
    %425 = vmatprep.subr.bf16.mxu0 0
    %426 = vmatpush1.bf16.msra.mxu0 %v380
    %427 = vmatprep.subr.bf16.mxu0 0
    %428 = vmatpush1.bf16.msra.mxu0 %v381
    %429 = vmatprep.subr.bf16.mxu0 0
    %430 = vmatpush1.bf16.msra.mxu0 %v382
    %431 = vmatprep.mubr.bf16.mxu0 %v248
    %432 = vmatmul.mubr.bf16.gmra.mrb[0].mxu0 %v247
    %v433 = vpop.f32.mrb[0].mxu0
    %v434 = vadd.f32 0.0, %v433
    %v435 = vpop.f32.mrb[0].mxu0
    %v436 = vpop.f32.mrb[0].mxu0
    %v437 = vadd.f32 0.0, %v436
    %v438 = vpop.f32.mrb[0].mxu0
    %439 = vmatprep.mubr.bf16.mxu0 %v250
    %440 = vmatmul.mubr.bf16.gmra.mrb[0].mxu0 %v249
    %v441 = vpop.f32.mrb[0].mxu0
    %v442 = vadd.f32 0.0, %v441
    %v443 = vpop.f32.mrb[0].mxu0
    %v444 = vpop.f32.mrb[0].mxu0
    %v445 = vadd.f32 0.0, %v444
    %v446 = vpop.f32.mrb[0].mxu0
    %447 = vmatprep.mubr.bf16.mxu0 %v252
    %448 = vmatmul.mubr.bf16.gmra.mrb[0].mxu0 %v251
    %v449 = vpop.f32.mrb[0].mxu0
    %v450 = vadd.f32 0.0, %v449
    %v451 = vpop.f32.mrb[0].mxu0
    %v452 = vpop.f32.mrb[0].mxu0
    %v453 = vadd.f32 0.0, %v452
    %v454 = vpop.f32.mrb[0].mxu0
    %455 = vmatprep.mubr.bf16.mxu0 %v254
    %456 = vmatmul.mubr.bf16.gmra.mrb[0].mxu0 %v253
    %v457 = vpop.f32.mrb[0].mxu0
    %v458 = vadd.f32 0.0, %v457
    %v459 = vpop.f32.mrb[0].mxu0
    %v460 = vpop.f32.mrb[0].mxu0
    %v461 = vadd.f32 0.0, %v460
    %v462 = vpop.f32.mrb[0].mxu0
    %463 = vmatprep.mubr.bf16.mxu0 %v256
    %464 = vmatmul.mubr.bf16.gmra.mrb[0].mxu0 %v255
    %v465 = vpop.f32.mrb[0].mxu0
    %v466 = vadd.f32 0.0, %v465
    %v467 = vpop.f32.mrb[0].mxu0
    %v468 = vpop.f32.mrb[0].mxu0
    %v469 = vadd.f32 0.0, %v468
    %v470 = vpop.f32.mrb[0].mxu0
    %471 = vmatprep.mubr.bf16.mxu0 %v258
    %472 = vmatmul.mubr.bf16.gmra.mrb[0].mxu0 %v257
    %v473 = vpop.f32.mrb[0].mxu0
    %v474 = vadd.f32 0.0, %v473
    %v475 = vpop.f32.mrb[0].mxu0
    %v476 = vpop.f32.mrb[0].mxu0
    %v477 = vadd.f32 0.0, %v476
    %v478 = vpop.f32.mrb[0].mxu0
    %479 = vmatprep.mubr.bf16.mxu0 %v260
    %480 = vmatmul.mubr.bf16.gmra.mrb[0].mxu0 %v259
    %v481 = vpop.f32.mrb[0].mxu0
    %v482 = vadd.f32 0.0, %v481
    %v483 = vpop.f32.mrb[0].mxu0
    %v484 = vpop.f32.mrb[0].mxu0
    %v485 = vadd.f32 0.0, %v484
    %v486 = vpop.f32.mrb[0].mxu0
    %487 = vmatprep.mubr.bf16.mxu0 %v262
    %488 = vmatmul.mubr.bf16.gmra.mrb[0].mxu0 %v261
    %v489 = vpop.f32.mrb[0].mxu0
    %v490 = vadd.f32 0.0, %v489
    %v491 = vpop.f32.mrb[0].mxu0
    %v492 = vpop.f32.mrb[0].mxu0
    %v493 = vadd.f32 0.0, %v492
    %v494 = vpop.f32.mrb[0].mxu0
    %495 = vmatprep.mubr.bf16.mxu0 %v264
    %496 = vmatmul.mubr.bf16.gmra.mrb[0].mxu0 %v263
    %v497 = vpop.f32.mrb[0].mxu0
    %v498 = vadd.f32 0.0, %v497
    %v499 = vpop.f32.mrb[0].mxu0
    %v500 = vpop.f32.mrb[0].mxu0
    %v501 = vadd.f32 0.0, %v500
    %v502 = vpop.f32.mrb[0].mxu0
    %503 = vmatprep.mubr.bf16.mxu0 %v266
    %504 = vmatmul.mubr.bf16.gmra.mrb[0].mxu0 %v265
    %v505 = vpop.f32.mrb[0].mxu0
    %v506 = vadd.f32 0.0, %v505
    %v507 = vpop.f32.mrb[0].mxu0
    %v508 = vpop.f32.mrb[0].mxu0
    %v509 = vadd.f32 0.0, %v508
    %v510 = vpop.f32.mrb[0].mxu0
    %511 = vmatprep.mubr.bf16.mxu0 %v268
    %512 = vmatmul.mubr.bf16.gmra.mrb[0].mxu0 %v267
    %v513 = vpop.f32.mrb[0].mxu0
    %v514 = vadd.f32 0.0, %v513
    %v515 = vpop.f32.mrb[0].mxu0
    %v516 = vpop.f32.mrb[0].mxu0
    %v517 = vadd.f32 0.0, %v516
    %v518 = vpop.f32.mrb[0].mxu0
    %519 = vmatprep.mubr.bf16.mxu0 %v270
    %520 = vmatmul.mubr.bf16.gmra.mrb[0].mxu0 %v269
    %v521 = vpop.f32.mrb[0].mxu0
    %v522 = vadd.f32 0.0, %v521
    %v523 = vpop.f32.mrb[0].mxu0
    %v524 = vpop.f32.mrb[0].mxu0
    %v525 = vadd.f32 0.0, %v524
    %v526 = vpop.f32.mrb[0].mxu0
    %527 = vmatprep.mubr.bf16.mxu0 %v272
    %528 = vmatmul.mubr.bf16.gmra.mrb[0].mxu0 %v271
    %v529 = vpop.f32.mrb[0].mxu0
    %v530 = vadd.f32 0.0, %v529
    %v531 = vpop.f32.mrb[0].mxu0
    %v532 = vpop.f32.mrb[0].mxu0
    %v533 = vadd.f32 0.0, %v532
    %v534 = vpop.f32.mrb[0].mxu0
    %535 = vmatprep.mubr.bf16.mxu0 %v274
    %536 = vmatmul.mubr.bf16.gmra.mrb[0].mxu0 %v273
    %v537 = vpop.f32.mrb[0].mxu0
    %v538 = vadd.f32 0.0, %v537
    %v539 = vpop.f32.mrb[0].mxu0
    %v540 = vpop.f32.mrb[0].mxu0
    %v541 = vadd.f32 0.0, %v540
    %v542 = vpop.f32.mrb[0].mxu0
    %543 = vdwg.mxu0
    %v544 = vpack.c.bf16 %v437, %v434
    %v545 = vpack.c.bf16 %v445, %v442
    %v546 = vpack.c.bf16 %v453, %v450
    %v547 = vpack.c.bf16 %v461, %v458
    %v548 = vpack.c.bf16 %v469, %v466
    %v549 = vpack.c.bf16 %v477, %v474
    %v550 = vpack.c.bf16 %v485, %v482
    %v551 = vpack.c.bf16 %v493, %v490
    %v552 = vpack.c.bf16 %v501, %v498
    %v553 = vpack.c.bf16 %v509, %v506
    %v554 = vpack.c.bf16 %v517, %v514
    %v555 = vpack.c.bf16 %v525, %v522
    %v556 = vpack.c.bf16 %v533, %v530
    %v557 = vpack.c.bf16 %v541, %v538
    %v558 = vld [vmem:[#allocation4] sm:$0xff]
    %v559 = vld [vmem:[#allocation4 + $0x8] sm:$0xff]
    %v560 = vld [vmem:[#allocation4 + $0x10] sm:$0xff]
    %v561 = vld [vmem:[#allocation4 + $0x18] sm:$0xff]
    %v562 = vld [vmem:[#allocation4 + $0x20] sm:$0xff]
    %v563 = vld [vmem:[#allocation4 + $0x28] sm:$0xff]
    %v564 = vld [vmem:[#allocation4 + $0x30] sm:$0xff]
    %v565 = vld [vmem:[#allocation4 + $0x38] sm:$0xff]
    %v566 = vld [vmem:[#allocation4 + $0x40] sm:$0xff]
    %v567 = vld [vmem:[#allocation4 + $0x48] sm:$0xff]
    %v568 = vld [vmem:[#allocation4 + $0x50] sm:$0xff]
    %v569 = vld [vmem:[#allocation4 + $0x58] sm:$0xff]
    %s570 = scalar_lea.vmem [#allocation2], 224
    %v571 = vld [vmem:[%s570] sm:$0xff]
    %v572 = vld [vmem:[%s570 + $0x8] sm:$0xff]
    %v573 = vld [vmem:[%s570 + $0x10] sm:$0xff]
    %v574 = vld [vmem:[%s570 + $0x18] sm:$0xff]
    %v575 = vld [vmem:[%s570 + $0x20] sm:$0xff]
    %v576 = vld [vmem:[%s570 + $0x28] sm:$0xff]
    %v577 = vld [vmem:[%s570 + $0x30] sm:$0xff]
    %v578 = vld [vmem:[%s570 + $0x38] sm:$0xff]
    %v579 = vld [vmem:[%s570 + $0x40] sm:$0xff]
    %v580 = vld [vmem:[%s570 + $0x48] sm:$0xff]
    %v581 = vld [vmem:[%s570 + $0x50] sm:$0xff]
    %v582 = vld [vmem:[%s570 + $0x58] sm:$0xff]
    %v583 = vld [vmem:[%s570 + $0x60] sm:$0xff]
    %v584 = vld [vmem:[%s570 + $0x68] sm:$0xff]
    %v585 = vld [vmem:[%s570 + $0x70] sm:$0xff]
    %v586 = vld [vmem:[%s570 + $0x78] sm:$0xff]
    %v587 = vld [vmem:[%s570 + $0x80] sm:$0xff]
    %v588 = vld [vmem:[%s570 + $0x88] sm:$0xff]
    %v589 = vld [vmem:[%s570 + $0x90] sm:$0xff]
    %v590 = vld [vmem:[%s570 + $0x98] sm:$0xff]
    %v591 = vld [vmem:[%s570 + $0xa0] sm:$0xff]
    %v592 = vld [vmem:[%s570 + $0xa8] sm:$0xff]
    %v593 = vld [vmem:[%s570 + $0xb0] sm:$0xff]
    %v594 = vld [vmem:[%s570 + $0xb8] sm:$0xff]
    %v595 = vld [vmem:[%s570 + $0xc0] sm:$0xff]
    %v596 = vld [vmem:[%s570 + $0xc8] sm:$0xff]
    %v597 = vld [vmem:[%s570 + $0xd0] sm:$0xff]
    %v598 = vld [vmem:[%s570 + $0xd8] sm:$0xff]
    %v627 = vunpack.c.l.b16 %v571
    %v628 = vunpack.c.h.b16 %v571
    %v629 = vunpack.c.l.b16 %v572
    %v630 = vunpack.c.h.b16 %v572
    %v631 = vunpack.c.l.b16 %v573
    %v632 = vunpack.c.h.b16 %v573
    %v633 = vunpack.c.l.b16 %v574
    %v634 = vunpack.c.h.b16 %v574
    %v635 = vunpack.c.l.b16 %v575
    %v636 = vunpack.c.h.b16 %v575
    %v637 = vunpack.c.l.b16 %v576
    %v638 = vunpack.c.h.b16 %v576
    %v639 = vunpack.c.l.b16 %v577
    %v640 = vunpack.c.h.b16 %v577
    %v641 = vunpack.c.l.b16 %v578
    %v642 = vunpack.c.h.b16 %v578
    %v643 = vunpack.c.l.b16 %v579
    %v644 = vunpack.c.h.b16 %v579
    %v645 = vunpack.c.l.b16 %v580
    %v646 = vunpack.c.h.b16 %v580
    %v647 = vunpack.c.l.b16 %v581
    %v648 = vunpack.c.h.b16 %v581
    %v649 = vunpack.c.l.b16 %v582
    %v650 = vunpack.c.h.b16 %v582
    %v651 = vunpack.c.l.b16 %v583
    %v652 = vunpack.c.h.b16 %v583
    %v653 = vunpack.c.l.b16 %v584
    %v654 = vunpack.c.h.b16 %v584
    %v655 = vunpack.c.l.b16 %v585
    %v656 = vunpack.c.h.b16 %v585
    %v657 = vunpack.c.l.b16 %v586
    %v658 = vunpack.c.h.b16 %v586
    %v659 = vunpack.c.l.b16 %v587
    %v660 = vunpack.c.h.b16 %v587
    %v661 = vunpack.c.l.b16 %v588
    %v662 = vunpack.c.h.b16 %v588
    %v663 = vunpack.c.l.b16 %v589
    %v664 = vunpack.c.h.b16 %v589
    %v665 = vunpack.c.l.b16 %v590
    %v666 = vunpack.c.h.b16 %v590
    %v667 = vunpack.c.l.b16 %v591
    %v668 = vunpack.c.h.b16 %v591
    %v669 = vunpack.c.l.b16 %v592
    %v670 = vunpack.c.h.b16 %v592
    %v671 = vunpack.c.l.b16 %v593
    %v672 = vunpack.c.h.b16 %v593
    %v673 = vunpack.c.l.b16 %v594
    %v674 = vunpack.c.h.b16 %v594
    %v675 = vunpack.c.l.b16 %v595
    %v676 = vunpack.c.h.b16 %v595
    %v677 = vunpack.c.l.b16 %v596
    %v678 = vunpack.c.h.b16 %v596
    %v679 = vunpack.c.l.b16 %v597
    %v680 = vunpack.c.h.b16 %v597
    %v681 = vunpack.c.l.b16 %v598
    %v682 = vunpack.c.h.b16 %v598
    %v683 = vpack.c.b16 %v629, %v627
    %v684 = vpack.c.b16 %v630, %v628
    %v685 = vpack.c.b16 %v633, %v631
    %v686 = vpack.c.b16 %v634, %v632
    %v687 = vpack.c.b16 %v637, %v635
    %v688 = vpack.c.b16 %v638, %v636
    %v689 = vpack.c.b16 %v641, %v639
    %v690 = vpack.c.b16 %v642, %v640
    %v691 = vpack.c.b16 %v645, %v643
    %v692 = vpack.c.b16 %v646, %v644
    %v693 = vpack.c.b16 %v649, %v647
    %v694 = vpack.c.b16 %v650, %v648
    %v695 = vpack.c.b16 %v653, %v651
    %v696 = vpack.c.b16 %v654, %v652
    %v697 = vpack.c.b16 %v657, %v655
    %v698 = vpack.c.b16 %v658, %v656
    %v699 = vpack.c.b16 %v661, %v659
    %v700 = vpack.c.b16 %v662, %v660
    %v701 = vpack.c.b16 %v665, %v663
    %v702 = vpack.c.b16 %v666, %v664
    %v703 = vpack.c.b16 %v669, %v667
    %v704 = vpack.c.b16 %v670, %v668
    %v705 = vpack.c.b16 %v673, %v671
    %v706 = vpack.c.b16 %v674, %v672
    %v707 = vpack.c.b16 %v677, %v675
    %v708 = vpack.c.b16 %v678, %v676
    %v709 = vpack.c.b16 %v681, %v679
    %v710 = vpack.c.b16 %v682, %v680
    %739 = vmatprep.subr.bf16.mxu0 0
    %740 = vmatpush1.bf16.msra.mxu0 %v367
    %741 = vmatprep.subr.bf16.mxu0 0
    %742 = vmatpush1.bf16.msra.mxu0 %v368
    %743 = vmatprep.subr.bf16.mxu0 0
    %744 = vmatpush1.bf16.msra.mxu0 %v369
    %745 = vmatprep.subr.bf16.mxu0 0
    %746 = vmatpush1.bf16.msra.mxu0 %v370
    %747 = vmatprep.subr.bf16.mxu0 0
    %748 = vmatpush1.bf16.msra.mxu0 %v371
    %749 = vmatprep.subr.bf16.mxu0 0
    %750 = vmatpush1.bf16.msra.mxu0 %v372
    %751 = vmatprep.subr.bf16.mxu0 0
    %752 = vmatpush1.bf16.msra.mxu0 %v373
    %753 = vmatprep.subr.bf16.mxu0 0
    %754 = vmatpush1.bf16.msra.mxu0 %v374
    %755 = vmatprep.subr.bf16.mxu0 0
    %756 = vmatpush1.bf16.msra.mxu0 %v375
    %757 = vmatprep.subr.bf16.mxu0 0
    %758 = vmatpush1.bf16.msra.mxu0 %v376
    %759 = vmatprep.subr.bf16.mxu0 0
    %760 = vmatpush1.bf16.msra.mxu0 %v377
    %761 = vmatprep.subr.bf16.mxu0 0
    %762 = vmatpush1.bf16.msra.mxu0 %v378
    %763 = vmatprep.subr.bf16.mxu0 0
    %764 = vmatpush1.bf16.msra.mxu0 %v379
    %765 = vmatprep.subr.bf16.mxu0 0
    %766 = vmatpush1.bf16.msra.mxu0 %v380
    %767 = vmatprep.subr.bf16.mxu0 0
    %768 = vmatpush1.bf16.msra.mxu0 %v381
    %769 = vmatprep.subr.bf16.mxu0 0
    %770 = vmatpush1.bf16.msra.mxu0 %v382
    %771 = vmatprep.mubr.bf16.mxu0 %v684
    %772 = vmatmul.mubr.bf16.gmra.mrb[0].mxu0 %v683
    %v773 = vpop.f32.mrb[0].mxu0
    %v774 = vadd.f32 0.0, %v773
    %v775 = vpop.f32.mrb[0].mxu0
    %v776 = vpop.f32.mrb[0].mxu0
    %v777 = vadd.f32 0.0, %v776
    %v778 = vpop.f32.mrb[0].mxu0
    %779 = vmatprep.mubr.bf16.mxu0 %v686
    %780 = vmatmul.mubr.bf16.gmra.mrb[0].mxu0 %v685
    %v781 = vpop.f32.mrb[0].mxu0
    %v782 = vadd.f32 0.0, %v781
    %v783 = vpop.f32.mrb[0].mxu0
    %v784 = vpop.f32.mrb[0].mxu0
    %v785 = vadd.f32 0.0, %v784
    %v786 = vpop.f32.mrb[0].mxu0
    %787 = vmatprep.mubr.bf16.mxu0 %v688
    %788 = vmatmul.mubr.bf16.gmra.mrb[0].mxu0 %v687
    %v789 = vpop.f32.mrb[0].mxu0
    %v790 = vadd.f32 0.0, %v789
    %v791 = vpop.f32.mrb[0].mxu0
    %v792 = vpop.f32.mrb[0].mxu0
    %v793 = vadd.f32 0.0, %v792
    %v794 = vpop.f32.mrb[0].mxu0
    %795 = vmatprep.mubr.bf16.mxu0 %v690
    %796 = vmatmul.mubr.bf16.gmra.mrb[0].mxu0 %v689
    %v797 = vpop.f32.mrb[0].mxu0
    %v798 = vadd.f32 0.0, %v797
    %v799 = vpop.f32.mrb[0].mxu0
    %v800 = vpop.f32.mrb[0].mxu0
    %v801 = vadd.f32 0.0, %v800
    %v802 = vpop.f32.mrb[0].mxu0
    %803 = vmatprep.mubr.bf16.mxu0 %v692
    %804 = vmatmul.mubr.bf16.gmra.mrb[0].mxu0 %v691
    %v805 = vpop.f32.mrb[0].mxu0
    %v806 = vadd.f32 0.0, %v805
    %v807 = vpop.f32.mrb[0].mxu0
    %v808 = vpop.f32.mrb[0].mxu0
    %v809 = vadd.f32 0.0, %v808
    %v810 = vpop.f32.mrb[0].mxu0
    %811 = vmatprep.mubr.bf16.mxu0 %v694
    %812 = vmatmul.mubr.bf16.gmra.mrb[0].mxu0 %v693
    %v813 = vpop.f32.mrb[0].mxu0
    %v814 = vadd.f32 0.0, %v813
    %v815 = vpop.f32.mrb[0].mxu0
    %v816 = vpop.f32.mrb[0].mxu0
    %v817 = vadd.f32 0.0, %v816
    %v818 = vpop.f32.mrb[0].mxu0
    %819 = vmatprep.mubr.bf16.mxu0 %v696
    %820 = vmatmul.mubr.bf16.gmra.mrb[0].mxu0 %v695
    %v821 = vpop.f32.mrb[0].mxu0
    %v822 = vadd.f32 0.0, %v821
    %v823 = vpop.f32.mrb[0].mxu0
    %v824 = vpop.f32.mrb[0].mxu0
    %v825 = vadd.f32 0.0, %v824
    %v826 = vpop.f32.mrb[0].mxu0
    %827 = vmatprep.mubr.bf16.mxu0 %v698
    %828 = vmatmul.mubr.bf16.gmra.mrb[0].mxu0 %v697
    %v829 = vpop.f32.mrb[0].mxu0
    %v830 = vadd.f32 0.0, %v829
    %v831 = vpop.f32.mrb[0].mxu0
    %v832 = vpop.f32.mrb[0].mxu0
    %v833 = vadd.f32 0.0, %v832
    %v834 = vpop.f32.mrb[0].mxu0
    %835 = vmatprep.mubr.bf16.mxu0 %v700
    %836 = vmatmul.mubr.bf16.gmra.mrb[0].mxu0 %v699
    %v837 = vpop.f32.mrb[0].mxu0
    %v838 = vadd.f32 0.0, %v837
    %v839 = vpop.f32.mrb[0].mxu0
    %v840 = vpop.f32.mrb[0].mxu0
    %v841 = vadd.f32 0.0, %v840
    %v842 = vpop.f32.mrb[0].mxu0
    %843 = vmatprep.mubr.bf16.mxu0 %v702
    %844 = vmatmul.mubr.bf16.gmra.mrb[0].mxu0 %v701
    %v845 = vpop.f32.mrb[0].mxu0
    %v846 = vadd.f32 0.0, %v845
    %v847 = vpop.f32.mrb[0].mxu0
    %v848 = vpop.f32.mrb[0].mxu0
    %v849 = vadd.f32 0.0, %v848
    %v850 = vpop.f32.mrb[0].mxu0
    %851 = vmatprep.mubr.bf16.mxu0 %v704
    %852 = vmatmul.mubr.bf16.gmra.mrb[0].mxu0 %v703
    %v853 = vpop.f32.mrb[0].mxu0
    %v854 = vadd.f32 0.0, %v853
    %v855 = vpop.f32.mrb[0].mxu0
    %v856 = vpop.f32.mrb[0].mxu0
    %v857 = vadd.f32 0.0, %v856
    %v858 = vpop.f32.mrb[0].mxu0
    %859 = vmatprep.mubr.bf16.mxu0 %v706
    %860 = vmatmul.mubr.bf16.gmra.mrb[0].mxu0 %v705
    %v861 = vpop.f32.mrb[0].mxu0
    %v862 = vadd.f32 0.0, %v861
    %v863 = vpop.f32.mrb[0].mxu0
    %v864 = vpop.f32.mrb[0].mxu0
    %v865 = vadd.f32 0.0, %v864
    %v866 = vpop.f32.mrb[0].mxu0
    %867 = vmatprep.mubr.bf16.mxu0 %v708
    %868 = vmatmul.mubr.bf16.gmra.mrb[0].mxu0 %v707
    %v869 = vpop.f32.mrb[0].mxu0
    %v870 = vadd.f32 0.0, %v869
    %v871 = vpop.f32.mrb[0].mxu0
    %v872 = vpop.f32.mrb[0].mxu0
    %v873 = vadd.f32 0.0, %v872
    %v874 = vpop.f32.mrb[0].mxu0
    %875 = vmatprep.mubr.bf16.mxu0 %v710
    %876 = vmatmul.mubr.bf16.gmra.mrb[0].mxu0 %v709
    %v877 = vpop.f32.mrb[0].mxu0
    %v878 = vadd.f32 0.0, %v877
    %v879 = vpop.f32.mrb[0].mxu0
    %v880 = vpop.f32.mrb[0].mxu0
    %v881 = vadd.f32 0.0, %v880
    %v882 = vpop.f32.mrb[0].mxu0
    %883 = vdwg.mxu0
    %v884 = vpack.c.bf16 %v777, %v774
    %v885 = vpack.c.bf16 %v785, %v782
    %v886 = vpack.c.bf16 %v793, %v790
    %v887 = vpack.c.bf16 %v801, %v798
    %v888 = vpack.c.bf16 %v809, %v806
    %v889 = vpack.c.bf16 %v817, %v814
    %v890 = vpack.c.bf16 %v825, %v822
    %v891 = vpack.c.bf16 %v833, %v830
    %v892 = vpack.c.bf16 %v841, %v838
    %v893 = vpack.c.bf16 %v849, %v846
    %v894 = vpack.c.bf16 %v857, %v854
    %v895 = vpack.c.bf16 %v865, %v862
    %v896 = vpack.c.bf16 %v873, %v870
    %v897 = vpack.c.bf16 %v881, %v878
    %s898 = scalar_lea.vmem [#allocation4], 96
    %v899 = vld [vmem:[%s898] sm:$0xff]
    %v900 = vld [vmem:[%s898 + $0x8] sm:$0xff]
    %v901 = vld [vmem:[%s898 + $0x10] sm:$0xff]
    %v902 = vld [vmem:[%s898 + $0x18] sm:$0xff]
    %v903 = vld [vmem:[%s898 + $0x20] sm:$0xff]
    %v904 = vld [vmem:[%s898 + $0x28] sm:$0xff]
    %v905 = vld [vmem:[%s898 + $0x30] sm:$0xff]
    %v906 = vld [vmem:[%s898 + $0x38] sm:$0xff]
    %v907 = vld [vmem:[%s898 + $0x40] sm:$0xff]
    %v908 = vld [vmem:[%s898 + $0x48] sm:$0xff]
    %v909 = vld [vmem:[%s898 + $0x50] sm:$0xff]
    %v910 = vld [vmem:[%s898 + $0x58] sm:$0xff]
    %v923 = vunpack.c.l.b16 %v899
    %v924 = vunpack.c.h.b16 %v899
    %v925 = vunpack.c.l.b16 %v900
    %v926 = vunpack.c.h.b16 %v900
    %v927 = vunpack.c.l.b16 %v901
    %v928 = vunpack.c.h.b16 %v901
    %v929 = vunpack.c.l.b16 %v902
    %v930 = vunpack.c.h.b16 %v902
    %v931 = vunpack.c.l.b16 %v903
    %v932 = vunpack.c.h.b16 %v903
    %v933 = vunpack.c.l.b16 %v904
    %v934 = vunpack.c.h.b16 %v904
    %v935 = vunpack.c.l.b16 %v905
    %v936 = vunpack.c.h.b16 %v905
    %v937 = vunpack.c.l.b16 %v906
    %v938 = vunpack.c.h.b16 %v906
    %v939 = vunpack.c.l.b16 %v907
    %v940 = vunpack.c.h.b16 %v907
    %v941 = vunpack.c.l.b16 %v908
    %v942 = vunpack.c.h.b16 %v908
    %v943 = vunpack.c.l.b16 %v909
    %v944 = vunpack.c.h.b16 %v909
    %v945 = vunpack.c.l.b16 %v910
    %v946 = vunpack.c.h.b16 %v910
    %v947 = vpack.c.b16 %v925, %v923
    %v948 = vpack.c.b16 %v926, %v924
    %v949 = vpack.c.b16 %v929, %v927
    %v950 = vpack.c.b16 %v930, %v928
    %v951 = vpack.c.b16 %v933, %v931
    %v952 = vpack.c.b16 %v934, %v932
    %v953 = vpack.c.b16 %v937, %v935
    %v954 = vpack.c.b16 %v938, %v936
    %v955 = vpack.c.b16 %v941, %v939
    %v956 = vpack.c.b16 %v942, %v940
    %v957 = vpack.c.b16 %v945, %v943
    %v958 = vpack.c.b16 %v946, %v944
    %vm971 = vcmask 785408
    %v973 = vsel %vm971, %v884, 0
    %v976 = vsel %vm971, %v885, 0
    %v979 = vsel %vm971, %v886, 0
    %v982 = vsel %vm971, %v887, 0
    %v985 = vsel %vm971, %v888, 0
    %v988 = vsel %vm971, %v889, 0
    %v991 = vsel %vm971, %v890, 0
    %v994 = vsel %vm971, %v891, 0
    %v997 = vsel %vm971, %v892, 0
    %v1000 = vsel %vm971, %v893, 0
    %v1003 = vsel %vm971, %v894, 0
    %v1006 = vsel %vm971, %v895, 0
    %v1009 = vsel %vm971, %v896, 0
    %v1012 = vsel %vm971, %v897, 0
    %1014 = vmatprep.subr.bf16.mxu0 %v948
    %1015 = vmatpush1.bf16.msra.mxu0 %v947
    %1016 = vmatprep.subr.bf16.mxu0 %v950
    %1017 = vmatpush1.bf16.msra.mxu0 %v949
    %1018 = vmatprep.subr.bf16.mxu0 %v952
    %1019 = vmatpush1.bf16.msra.mxu0 %v951
    %1020 = vmatprep.subr.bf16.mxu0 %v954
    %1021 = vmatpush1.bf16.msra.mxu0 %v953
    %1022 = vmatprep.subr.bf16.mxu0 %v956
    %1023 = vmatpush1.bf16.msra.mxu0 %v955
    %1024 = vmatprep.subr.bf16.mxu0 %v958
    %1025 = vmatpush1.bf16.msra.mxu0 %v957
    %1026 = vmatprep.subr.bf16.mxu0 0
    %1027 = vmatpush1.bf16.msra.mxu0 0
    %1028 = vmatprep.subr.bf16.mxu0 0
    %1029 = vmatpush1.bf16.msra.mxu0 0
    %1030 = vmatprep.subr.bf16.mxu0 0
    %1031 = vmatpush1.bf16.msra.mxu0 0
    %1032 = vmatprep.subr.bf16.mxu0 0
    %1033 = vmatpush1.bf16.msra.mxu0 0
    %1034 = vmatprep.subr.bf16.mxu0 0
    %1035 = vmatpush1.bf16.msra.mxu0 0
    %1036 = vmatprep.subr.bf16.mxu0 0
    %1037 = vmatpush1.bf16.msra.mxu0 0
    %1038 = vmatprep.subr.bf16.mxu0 0
    %1039 = vmatpush1.bf16.msra.mxu0 0
    %1040 = vmatprep.subr.bf16.mxu0 0
    %1041 = vmatpush1.bf16.msra.mxu0 0
    %1042 = vmatprep.subr.bf16.mxu0 0
    %1043 = vmatpush1.bf16.msra.mxu0 0
    %1044 = vmatprep.subr.bf16.mxu0 0
    %1045 = vmatpush1.bf16.msra.mxu0 0
    %1046 = vmatprep.mubr.bf16.mxu0 0
    %1047 = vmatmul.mubr.bf16.gmra.mrb[0].mxu0 %v973
    %v1048 = vpop.f32.mrb[0].mxu0
    %v1049 = vadd.f32 0.0, %v1048
    %v1050 = vpop.f32.mrb[0].mxu0
    %v1051 = vadd.f32 0.0, %v1050
    %v1052 = vpop.f32.mrb[0].mxu0
    %v1053 = vadd.f32 0.0, %v1052
    %v1054 = vpop.f32.mrb[0].mxu0
    %v1055 = vadd.f32 0.0, %v1054
    %1056 = vmatprep.mubr.bf16.mxu0 0
    %1057 = vmatmul.mubr.bf16.gmra.mrb[0].mxu0 %v976
    %v1058 = vpop.f32.mrb[0].mxu0
    %v1059 = vadd.f32 0.0, %v1058
    %v1060 = vpop.f32.mrb[0].mxu0
    %v1061 = vadd.f32 0.0, %v1060
    %v1062 = vpop.f32.mrb[0].mxu0
    %v1063 = vadd.f32 0.0, %v1062
    %v1064 = vpop.f32.mrb[0].mxu0
    %v1065 = vadd.f32 0.0, %v1064
    %1066 = vmatprep.mubr.bf16.mxu0 0
    %1067 = vmatmul.mubr.bf16.gmra.mrb[0].mxu0 %v979
    %v1068 = vpop.f32.mrb[0].mxu0
    %v1069 = vadd.f32 0.0, %v1068
    %v1070 = vpop.f32.mrb[0].mxu0
    %v1071 = vadd.f32 0.0, %v1070
    %v1072 = vpop.f32.mrb[0].mxu0
    %v1073 = vadd.f32 0.0, %v1072
    %v1074 = vpop.f32.mrb[0].mxu0
    %v1075 = vadd.f32 0.0, %v1074
    %1076 = vmatprep.mubr.bf16.mxu0 0
    %1077 = vmatmul.mubr.bf16.gmra.mrb[0].mxu0 %v982
    %v1078 = vpop.f32.mrb[0].mxu0
    %v1079 = vadd.f32 0.0, %v1078
    %v1080 = vpop.f32.mrb[0].mxu0
    %v1081 = vadd.f32 0.0, %v1080
    %v1082 = vpop.f32.mrb[0].mxu0
    %v1083 = vadd.f32 0.0, %v1082
    %v1084 = vpop.f32.mrb[0].mxu0
    %v1085 = vadd.f32 0.0, %v1084
    %1086 = vmatprep.mubr.bf16.mxu0 0
    %1087 = vmatmul.mubr.bf16.gmra.mrb[0].mxu0 %v985
    %v1088 = vpop.f32.mrb[0].mxu0
    %v1089 = vadd.f32 0.0, %v1088
    %v1090 = vpop.f32.mrb[0].mxu0
    %v1091 = vadd.f32 0.0, %v1090
    %v1092 = vpop.f32.mrb[0].mxu0
    %v1093 = vadd.f32 0.0, %v1092
    %v1094 = vpop.f32.mrb[0].mxu0
    %v1095 = vadd.f32 0.0, %v1094
    %1096 = vmatprep.mubr.bf16.mxu0 0
    %1097 = vmatmul.mubr.bf16.gmra.mrb[0].mxu0 %v988
    %v1098 = vpop.f32.mrb[0].mxu0
    %v1099 = vadd.f32 0.0, %v1098
    %v1100 = vpop.f32.mrb[0].mxu0
    %v1101 = vadd.f32 0.0, %v1100
    %v1102 = vpop.f32.mrb[0].mxu0
    %v1103 = vadd.f32 0.0, %v1102
    %v1104 = vpop.f32.mrb[0].mxu0
    %v1105 = vadd.f32 0.0, %v1104
    %1106 = vmatprep.mubr.bf16.mxu0 0
    %1107 = vmatmul.mubr.bf16.gmra.mrb[0].mxu0 %v991
    %v1108 = vpop.f32.mrb[0].mxu0
    %v1109 = vadd.f32 0.0, %v1108
    %v1110 = vpop.f32.mrb[0].mxu0
    %v1111 = vadd.f32 0.0, %v1110
    %v1112 = vpop.f32.mrb[0].mxu0
    %v1113 = vadd.f32 0.0, %v1112
    %v1114 = vpop.f32.mrb[0].mxu0
    %v1115 = vadd.f32 0.0, %v1114
    %1116 = vmatprep.mubr.bf16.mxu0 0
    %1117 = vmatmul.mubr.bf16.gmra.mrb[0].mxu0 %v994
    %v1118 = vpop.f32.mrb[0].mxu0
    %v1119 = vadd.f32 0.0, %v1118
    %v1120 = vpop.f32.mrb[0].mxu0
    %v1121 = vadd.f32 0.0, %v1120
    %v1122 = vpop.f32.mrb[0].mxu0
    %v1123 = vadd.f32 0.0, %v1122
    %v1124 = vpop.f32.mrb[0].mxu0
    %v1125 = vadd.f32 0.0, %v1124
    %1126 = vmatprep.mubr.bf16.mxu0 0
    %1127 = vmatmul.mubr.bf16.gmra.mrb[0].mxu0 %v997
    %v1128 = vpop.f32.mrb[0].mxu0
    %v1129 = vadd.f32 0.0, %v1128
    %v1130 = vpop.f32.mrb[0].mxu0
    %v1131 = vadd.f32 0.0, %v1130
    %v1132 = vpop.f32.mrb[0].mxu0
    %v1133 = vadd.f32 0.0, %v1132
    %v1134 = vpop.f32.mrb[0].mxu0
    %v1135 = vadd.f32 0.0, %v1134
    %1136 = vmatprep.mubr.bf16.mxu0 0
    %1137 = vmatmul.mubr.bf16.gmra.mrb[0].mxu0 %v1000
    %v1138 = vpop.f32.mrb[0].mxu0
    %v1139 = vadd.f32 0.0, %v1138
    %v1140 = vpop.f32.mrb[0].mxu0
    %v1141 = vadd.f32 0.0, %v1140
    %v1142 = vpop.f32.mrb[0].mxu0
    %v1143 = vadd.f32 0.0, %v1142
    %v1144 = vpop.f32.mrb[0].mxu0
    %v1145 = vadd.f32 0.0, %v1144
    %1146 = vmatprep.mubr.bf16.mxu0 0
    %1147 = vmatmul.mubr.bf16.gmra.mrb[0].mxu0 %v1003
    %v1148 = vpop.f32.mrb[0].mxu0
    %v1149 = vadd.f32 0.0, %v1148
    %v1150 = vpop.f32.mrb[0].mxu0
    %v1151 = vadd.f32 0.0, %v1150
    %v1152 = vpop.f32.mrb[0].mxu0
    %v1153 = vadd.f32 0.0, %v1152
    %v1154 = vpop.f32.mrb[0].mxu0
    %v1155 = vadd.f32 0.0, %v1154
    %1156 = vmatprep.mubr.bf16.mxu0 0
    %1157 = vmatmul.mubr.bf16.gmra.mrb[0].mxu0 %v1006
    %v1158 = vpop.f32.mrb[0].mxu0
    %v1159 = vadd.f32 0.0, %v1158
    %v1160 = vpop.f32.mrb[0].mxu0
    %v1161 = vadd.f32 0.0, %v1160
    %v1162 = vpop.f32.mrb[0].mxu0
    %v1163 = vadd.f32 0.0, %v1162
    %v1164 = vpop.f32.mrb[0].mxu0
    %v1165 = vadd.f32 0.0, %v1164
    %1166 = vmatprep.mubr.bf16.mxu0 0
    %1167 = vmatmul.mubr.bf16.gmra.mrb[0].mxu0 %v1009
    %v1168 = vpop.f32.mrb[0].mxu0
    %v1169 = vadd.f32 0.0, %v1168
    %v1170 = vpop.f32.mrb[0].mxu0
    %v1171 = vadd.f32 0.0, %v1170
    %v1172 = vpop.f32.mrb[0].mxu0
    %v1173 = vadd.f32 0.0, %v1172
    %v1174 = vpop.f32.mrb[0].mxu0
    %v1175 = vadd.f32 0.0, %v1174
    %1176 = vmatprep.mubr.bf16.mxu0 0
    %1177 = vmatmul.mubr.bf16.gmra.mrb[0].mxu0 %v1012
    %v1178 = vpop.f32.mrb[0].mxu0
    %v1179 = vadd.f32 0.0, %v1178
    %v1180 = vpop.f32.mrb[0].mxu0
    %v1181 = vadd.f32 0.0, %v1180
    %v1182 = vpop.f32.mrb[0].mxu0
    %v1183 = vadd.f32 0.0, %v1182
    %v1184 = vpop.f32.mrb[0].mxu0
    %v1185 = vadd.f32 0.0, %v1184
    %1186 = vdwg.mxu0
    %v1199 = vunpack.c.l.b16 %v558
    %v1200 = vunpack.c.h.b16 %v558
    %v1201 = vunpack.c.l.b16 %v559
    %v1202 = vunpack.c.h.b16 %v559
    %v1203 = vunpack.c.l.b16 %v560
    %v1204 = vunpack.c.h.b16 %v560
    %v1205 = vunpack.c.l.b16 %v561
    %v1206 = vunpack.c.h.b16 %v561
    %v1207 = vunpack.c.l.b16 %v562
    %v1208 = vunpack.c.h.b16 %v562
    %v1209 = vunpack.c.l.b16 %v563
    %v1210 = vunpack.c.h.b16 %v563
    %v1211 = vunpack.c.l.b16 %v564
    %v1212 = vunpack.c.h.b16 %v564
    %v1213 = vunpack.c.l.b16 %v565
    %v1214 = vunpack.c.h.b16 %v565
    %v1215 = vunpack.c.l.b16 %v566
    %v1216 = vunpack.c.h.b16 %v566
    %v1217 = vunpack.c.l.b16 %v567
    %v1218 = vunpack.c.h.b16 %v567
    %v1219 = vunpack.c.l.b16 %v568
    %v1220 = vunpack.c.h.b16 %v568
    %v1221 = vunpack.c.l.b16 %v569
    %v1222 = vunpack.c.h.b16 %v569
    %v1223 = vpack.c.b16 %v1201, %v1199
    %v1224 = vpack.c.b16 %v1202, %v1200
    %v1225 = vpack.c.b16 %v1205, %v1203
    %v1226 = vpack.c.b16 %v1206, %v1204
    %v1227 = vpack.c.b16 %v1209, %v1207
    %v1228 = vpack.c.b16 %v1210, %v1208
    %v1229 = vpack.c.b16 %v1213, %v1211
    %v1230 = vpack.c.b16 %v1214, %v1212
    %v1231 = vpack.c.b16 %v1217, %v1215
    %v1232 = vpack.c.b16 %v1218, %v1216
    %v1233 = vpack.c.b16 %v1221, %v1219
    %v1234 = vpack.c.b16 %v1222, %v1220
    %v1248 = vsel %vm971, %v544, 0
    %v1251 = vsel %vm971, %v545, 0
    %v1254 = vsel %vm971, %v546, 0
    %v1257 = vsel %vm971, %v547, 0
    %v1260 = vsel %vm971, %v548, 0
    %v1263 = vsel %vm971, %v549, 0
    %v1266 = vsel %vm971, %v550, 0
    %v1269 = vsel %vm971, %v551, 0
    %v1272 = vsel %vm971, %v552, 0
    %v1275 = vsel %vm971, %v553, 0
    %v1278 = vsel %vm971, %v554, 0
    %v1281 = vsel %vm971, %v555, 0
    %v1284 = vsel %vm971, %v556, 0
    %v1287 = vsel %vm971, %v557, 0
    %1289 = vmatprep.subr.bf16.mxu0 %v1224
    %1290 = vmatpush1.bf16.msra.mxu0 %v1223
    %1291 = vmatprep.subr.bf16.mxu0 %v1226
    %1292 = vmatpush1.bf16.msra.mxu0 %v1225
    %1293 = vmatprep.subr.bf16.mxu0 %v1228
    %1294 = vmatpush1.bf16.msra.mxu0 %v1227
    %1295 = vmatprep.subr.bf16.mxu0 %v1230
    %1296 = vmatpush1.bf16.msra.mxu0 %v1229
    %1297 = vmatprep.subr.bf16.mxu0 %v1232
    %1298 = vmatpush1.bf16.msra.mxu0 %v1231
    %1299 = vmatprep.subr.bf16.mxu0 %v1234
    %1300 = vmatpush1.bf16.msra.mxu0 %v1233
    %1301 = vmatprep.subr.bf16.mxu0 0
    %1302 = vmatpush1.bf16.msra.mxu0 0
    %1303 = vmatprep.subr.bf16.mxu0 0
    %1304 = vmatpush1.bf16.msra.mxu0 0
    %1305 = vmatprep.subr.bf16.mxu0 0
    %1306 = vmatpush1.bf16.msra.mxu0 0
    %1307 = vmatprep.subr.bf16.mxu0 0
    %1308 = vmatpush1.bf16.msra.mxu0 0
    %1309 = vmatprep.subr.bf16.mxu0 0
    %1310 = vmatpush1.bf16.msra.mxu0 0
    %1311 = vmatprep.subr.bf16.mxu0 0
    %1312 = vmatpush1.bf16.msra.mxu0 0
    %1313 = vmatprep.subr.bf16.mxu0 0
    %1314 = vmatpush1.bf16.msra.mxu0 0
    %1315 = vmatprep.subr.bf16.mxu0 0
    %1316 = vmatpush1.bf16.msra.mxu0 0
    %1317 = vmatprep.subr.bf16.mxu0 0
    %1318 = vmatpush1.bf16.msra.mxu0 0
    %1319 = vmatprep.subr.bf16.mxu0 0
    %1320 = vmatpush1.bf16.msra.mxu0 0
    %1321 = vmatprep.mubr.bf16.mxu0 0
    %1322 = vmatmul.mubr.bf16.gmra.mrb[0].mxu0 %v1248
    %v1323 = vpop.f32.mrb[0].mxu0
    %v1324 = vadd.f32 %v1049, %v1323
    %v1325 = vpop.f32.mrb[0].mxu0
    %v1326 = vadd.f32 %v1051, %v1325
    %v1327 = vpop.f32.mrb[0].mxu0
    %v1328 = vadd.f32 %v1053, %v1327
    %v1329 = vpop.f32.mrb[0].mxu0
    %v1330 = vadd.f32 %v1055, %v1329
    %1331 = vmatprep.mubr.bf16.mxu0 0
    %1332 = vmatmul.mubr.bf16.gmra.mrb[0].mxu0 %v1251
    %v1333 = vpop.f32.mrb[0].mxu0
    %v1334 = vadd.f32 %v1059, %v1333
    %v1335 = vpop.f32.mrb[0].mxu0
    %v1336 = vadd.f32 %v1061, %v1335
    %v1337 = vpop.f32.mrb[0].mxu0
    %v1338 = vadd.f32 %v1063, %v1337
    %v1339 = vpop.f32.mrb[0].mxu0
    %v1340 = vadd.f32 %v1065, %v1339
    %1341 = vmatprep.mubr.bf16.mxu0 0
    %1342 = vmatmul.mubr.bf16.gmra.mrb[0].mxu0 %v1254
    %v1343 = vpop.f32.mrb[0].mxu0
    %v1344 = vadd.f32 %v1069, %v1343
    %v1345 = vpop.f32.mrb[0].mxu0
    %v1346 = vadd.f32 %v1071, %v1345
    %v1347 = vpop.f32.mrb[0].mxu0
    %v1348 = vadd.f32 %v1073, %v1347
    %v1349 = vpop.f32.mrb[0].mxu0
    %v1350 = vadd.f32 %v1075, %v1349
    %1351 = vmatprep.mubr.bf16.mxu0 0
    %1352 = vmatmul.mubr.bf16.gmra.mrb[0].mxu0 %v1257
    %v1353 = vpop.f32.mrb[0].mxu0
    %v1354 = vadd.f32 %v1079, %v1353
    %v1355 = vpop.f32.mrb[0].mxu0
    %v1356 = vadd.f32 %v1081, %v1355
    %v1357 = vpop.f32.mrb[0].mxu0
    %v1358 = vadd.f32 %v1083, %v1357
    %v1359 = vpop.f32.mrb[0].mxu0
    %v1360 = vadd.f32 %v1085, %v1359
    %1361 = vmatprep.mubr.bf16.mxu0 0
    %1362 = vmatmul.mubr.bf16.gmra.mrb[0].mxu0 %v1260
    %v1363 = vpop.f32.mrb[0].mxu0
    %v1364 = vadd.f32 %v1089, %v1363
    %v1365 = vpop.f32.mrb[0].mxu0
    %v1366 = vadd.f32 %v1091, %v1365
    %v1367 = vpop.f32.mrb[0].mxu0
    %v1368 = vadd.f32 %v1093, %v1367
    %v1369 = vpop.f32.mrb[0].mxu0
    %v1370 = vadd.f32 %v1095, %v1369
    %1371 = vmatprep.mubr.bf16.mxu0 0
    %1372 = vmatmul.mubr.bf16.gmra.mrb[0].mxu0 %v1263
    %v1373 = vpop.f32.mrb[0].mxu0
    %v1374 = vadd.f32 %v1099, %v1373
    %v1375 = vpop.f32.mrb[0].mxu0
    %v1376 = vadd.f32 %v1101, %v1375
    %v1377 = vpop.f32.mrb[0].mxu0
    %v1378 = vadd.f32 %v1103, %v1377
    %v1379 = vpop.f32.mrb[0].mxu0
    %v1380 = vadd.f32 %v1105, %v1379
    %1381 = vmatprep.mubr.bf16.mxu0 0
    %1382 = vmatmul.mubr.bf16.gmra.mrb[0].mxu0 %v1266
    %v1383 = vpop.f32.mrb[0].mxu0
    %v1384 = vadd.f32 %v1109, %v1383
    %v1385 = vpop.f32.mrb[0].mxu0
    %v1386 = vadd.f32 %v1111, %v1385
    %v1387 = vpop.f32.mrb[0].mxu0
    %v1388 = vadd.f32 %v1113, %v1387
    %v1389 = vpop.f32.mrb[0].mxu0
    %v1390 = vadd.f32 %v1115, %v1389
    %1391 = vmatprep.mubr.bf16.mxu0 0
    %1392 = vmatmul.mubr.bf16.gmra.mrb[0].mxu0 %v1269
    %v1393 = vpop.f32.mrb[0].mxu0
    %v1394 = vadd.f32 %v1119, %v1393
    %v1395 = vpop.f32.mrb[0].mxu0
    %v1396 = vadd.f32 %v1121, %v1395
    %v1397 = vpop.f32.mrb[0].mxu0
    %v1398 = vadd.f32 %v1123, %v1397
    %v1399 = vpop.f32.mrb[0].mxu0
    %v1400 = vadd.f32 %v1125, %v1399
    %1401 = vmatprep.mubr.bf16.mxu0 0
    %1402 = vmatmul.mubr.bf16.gmra.mrb[0].mxu0 %v1272
    %v1403 = vpop.f32.mrb[0].mxu0
    %v1404 = vadd.f32 %v1129, %v1403
    %v1405 = vpop.f32.mrb[0].mxu0
    %v1406 = vadd.f32 %v1131, %v1405
    %v1407 = vpop.f32.mrb[0].mxu0
    %v1408 = vadd.f32 %v1133, %v1407
    %v1409 = vpop.f32.mrb[0].mxu0
    %v1410 = vadd.f32 %v1135, %v1409
    %1411 = vmatprep.mubr.bf16.mxu0 0
    %1412 = vmatmul.mubr.bf16.gmra.mrb[0].mxu0 %v1275
    %v1413 = vpop.f32.mrb[0].mxu0
    %v1414 = vadd.f32 %v1139, %v1413
    %v1415 = vpop.f32.mrb[0].mxu0
    %v1416 = vadd.f32 %v1141, %v1415
    %v1417 = vpop.f32.mrb[0].mxu0
    %v1418 = vadd.f32 %v1143, %v1417
    %v1419 = vpop.f32.mrb[0].mxu0
    %v1420 = vadd.f32 %v1145, %v1419
    %1421 = vmatprep.mubr.bf16.mxu0 0
    %1422 = vmatmul.mubr.bf16.gmra.mrb[0].mxu0 %v1278
    %v1423 = vpop.f32.mrb[0].mxu0
    %v1424 = vadd.f32 %v1149, %v1423
    %v1425 = vpop.f32.mrb[0].mxu0
    %v1426 = vadd.f32 %v1151, %v1425
    %v1427 = vpop.f32.mrb[0].mxu0
    %v1428 = vadd.f32 %v1153, %v1427
    %v1429 = vpop.f32.mrb[0].mxu0
    %v1430 = vadd.f32 %v1155, %v1429
    %1431 = vmatprep.mubr.bf16.mxu0 0
    %1432 = vmatmul.mubr.bf16.gmra.mrb[0].mxu0 %v1281
    %v1433 = vpop.f32.mrb[0].mxu0
    %v1434 = vadd.f32 %v1159, %v1433
    %v1435 = vpop.f32.mrb[0].mxu0
    %v1436 = vadd.f32 %v1161, %v1435
    %v1437 = vpop.f32.mrb[0].mxu0
    %v1438 = vadd.f32 %v1163, %v1437
    %v1439 = vpop.f32.mrb[0].mxu0
    %v1440 = vadd.f32 %v1165, %v1439
    %1441 = vmatprep.mubr.bf16.mxu0 0
    %1442 = vmatmul.mubr.bf16.gmra.mrb[0].mxu0 %v1284
    %v1443 = vpop.f32.mrb[0].mxu0
    %v1444 = vadd.f32 %v1169, %v1443
    %v1445 = vpop.f32.mrb[0].mxu0
    %v1446 = vadd.f32 %v1171, %v1445
    %v1447 = vpop.f32.mrb[0].mxu0
    %v1448 = vadd.f32 %v1173, %v1447
    %v1449 = vpop.f32.mrb[0].mxu0
    %v1450 = vadd.f32 %v1175, %v1449
    %1451 = vmatprep.mubr.bf16.mxu0 0
    %1452 = vmatmul.mubr.bf16.gmra.mrb[0].mxu0 %v1287
    %v1453 = vpop.f32.mrb[0].mxu0
    %v1454 = vadd.f32 %v1179, %v1453
    %v1455 = vpop.f32.mrb[0].mxu0
    %v1456 = vadd.f32 %v1181, %v1455
    %v1457 = vpop.f32.mrb[0].mxu0
    %v1458 = vadd.f32 %v1183, %v1457
    %v1459 = vpop.f32.mrb[0].mxu0
    %v1460 = vadd.f32 %v1185, %v1459
    %1461 = vdwg.mxu0
    %s1462 = scalar_lea.vmem [#allocation2], 448
    %v1463 = vld [vmem:[%s1462] sm:$0xff]
    %v1464 = vld [vmem:[%s1462 + $0x8] sm:$0xff]
    %v1465 = vld [vmem:[%s1462 + $0x10] sm:$0xff]
    %v1466 = vld [vmem:[%s1462 + $0x18] sm:$0xff]
    %v1467 = vld [vmem:[%s1462 + $0x20] sm:$0xff]
    %v1468 = vld [vmem:[%s1462 + $0x28] sm:$0xff]
    %v1469 = vld [vmem:[%s1462 + $0x30] sm:$0xff]
    %v1470 = vld [vmem:[%s1462 + $0x38] sm:$0xff]
    %v1471 = vld [vmem:[%s1462 + $0x40] sm:$0xff]
    %v1472 = vld [vmem:[%s1462 + $0x48] sm:$0xff]
    %v1473 = vld [vmem:[%s1462 + $0x50] sm:$0xff]
    %v1474 = vld [vmem:[%s1462 + $0x58] sm:$0xff]
    %v1475 = vld [vmem:[%s1462 + $0x60] sm:$0xff]
    %v1476 = vld [vmem:[%s1462 + $0x68] sm:$0xff]
    %v1477 = vld [vmem:[%s1462 + $0x70] sm:$0xff]
    %v1478 = vld [vmem:[%s1462 + $0x78] sm:$0xff]
    %v1479 = vld [vmem:[%s1462 + $0x80] sm:$0xff]
    %v1480 = vld [vmem:[%s1462 + $0x88] sm:$0xff]
    %v1481 = vld [vmem:[%s1462 + $0x90] sm:$0xff]
    %v1482 = vld [vmem:[%s1462 + $0x98] sm:$0xff]
    %v1483 = vld [vmem:[%s1462 + $0xa0] sm:$0xff]
    %v1484 = vld [vmem:[%s1462 + $0xa8] sm:$0xff]
    %v1485 = vld [vmem:[%s1462 + $0xb0] sm:$0xff]
    %v1486 = vld [vmem:[%s1462 + $0xb8] sm:$0xff]
    %v1487 = vld [vmem:[%s1462 + $0xc0] sm:$0xff]
    %v1488 = vld [vmem:[%s1462 + $0xc8] sm:$0xff]
    %v1489 = vld [vmem:[%s1462 + $0xd0] sm:$0xff]
    %v1490 = vld [vmem:[%s1462 + $0xd8] sm:$0xff]
    %v1519 = vunpack.c.l.b16 %v1463
    %v1520 = vunpack.c.h.b16 %v1463
    %v1521 = vunpack.c.l.b16 %v1464
    %v1522 = vunpack.c.h.b16 %v1464
    %v1523 = vunpack.c.l.b16 %v1465
    %v1524 = vunpack.c.h.b16 %v1465
    %v1525 = vunpack.c.l.b16 %v1466
    %v1526 = vunpack.c.h.b16 %v1466
    %v1527 = vunpack.c.l.b16 %v1467
    %v1528 = vunpack.c.h.b16 %v1467
    %v1529 = vunpack.c.l.b16 %v1468
    %v1530 = vunpack.c.h.b16 %v1468
    %v1531 = vunpack.c.l.b16 %v1469
    %v1532 = vunpack.c.h.b16 %v1469
    %v1533 = vunpack.c.l.b16 %v1470
    %v1534 = vunpack.c.h.b16 %v1470
    %v1535 = vunpack.c.l.b16 %v1471
    %v1536 = vunpack.c.h.b16 %v1471
    %v1537 = vunpack.c.l.b16 %v1472
    %v1538 = vunpack.c.h.b16 %v1472
    %v1539 = vunpack.c.l.b16 %v1473
    %v1540 = vunpack.c.h.b16 %v1473
    %v1541 = vunpack.c.l.b16 %v1474
    %v1542 = vunpack.c.h.b16 %v1474
    %v1543 = vunpack.c.l.b16 %v1475
    %v1544 = vunpack.c.h.b16 %v1475
    %v1545 = vunpack.c.l.b16 %v1476
    %v1546 = vunpack.c.h.b16 %v1476
    %v1547 = vunpack.c.l.b16 %v1477
    %v1548 = vunpack.c.h.b16 %v1477
    %v1549 = vunpack.c.l.b16 %v1478
    %v1550 = vunpack.c.h.b16 %v1478
    %v1551 = vunpack.c.l.b16 %v1479
    %v1552 = vunpack.c.h.b16 %v1479
    %v1553 = vunpack.c.l.b16 %v1480
    %v1554 = vunpack.c.h.b16 %v1480
    %v1555 = vunpack.c.l.b16 %v1481
    %v1556 = vunpack.c.h.b16 %v1481
    %v1557 = vunpack.c.l.b16 %v1482
    %v1558 = vunpack.c.h.b16 %v1482
    %v1559 = vunpack.c.l.b16 %v1483
    %v1560 = vunpack.c.h.b16 %v1483
    %v1561 = vunpack.c.l.b16 %v1484
    %v1562 = vunpack.c.h.b16 %v1484
    %v1563 = vunpack.c.l.b16 %v1485
    %v1564 = vunpack.c.h.b16 %v1485
    %v1565 = vunpack.c.l.b16 %v1486
    %v1566 = vunpack.c.h.b16 %v1486
    %v1567 = vunpack.c.l.b16 %v1487
    %v1568 = vunpack.c.h.b16 %v1487
    %v1569 = vunpack.c.l.b16 %v1488
    %v1570 = vunpack.c.h.b16 %v1488
    %v1571 = vunpack.c.l.b16 %v1489
    %v1572 = vunpack.c.h.b16 %v1489
    %v1573 = vunpack.c.l.b16 %v1490
    %v1574 = vunpack.c.h.b16 %v1490
    %v1575 = vpack.c.b16 %v1521, %v1519
    %v1576 = vpack.c.b16 %v1522, %v1520
    %v1577 = vpack.c.b16 %v1525, %v1523
    %v1578 = vpack.c.b16 %v1526, %v1524
    %v1579 = vpack.c.b16 %v1529, %v1527
    %v1580 = vpack.c.b16 %v1530, %v1528
    %v1581 = vpack.c.b16 %v1533, %v1531
    %v1582 = vpack.c.b16 %v1534, %v1532
    %v1583 = vpack.c.b16 %v1537, %v1535
    %v1584 = vpack.c.b16 %v1538, %v1536
    %v1585 = vpack.c.b16 %v1541, %v1539
    %v1586 = vpack.c.b16 %v1542, %v1540
    %v1587 = vpack.c.b16 %v1545, %v1543
    %v1588 = vpack.c.b16 %v1546, %v1544
    %v1589 = vpack.c.b16 %v1549, %v1547
    %v1590 = vpack.c.b16 %v1550, %v1548
    %v1591 = vpack.c.b16 %v1553, %v1551
    %v1592 = vpack.c.b16 %v1554, %v1552
    %v1593 = vpack.c.b16 %v1557, %v1555
    %v1594 = vpack.c.b16 %v1558, %v1556
    %v1595 = vpack.c.b16 %v1561, %v1559
    %v1596 = vpack.c.b16 %v1562, %v1560
    %v1597 = vpack.c.b16 %v1565, %v1563
    %v1598 = vpack.c.b16 %v1566, %v1564
    %v1599 = vpack.c.b16 %v1569, %v1567
    %v1600 = vpack.c.b16 %v1570, %v1568
    %v1601 = vpack.c.b16 %v1573, %v1571
    %v1602 = vpack.c.b16 %v1574, %v1572
    %1631 = vmatprep.subr.bf16.mxu0 0
    %1632 = vmatpush1.bf16.msra.mxu0 %v367
    %1633 = vmatprep.subr.bf16.mxu0 0
    %1634 = vmatpush1.bf16.msra.mxu0 %v368
    %1635 = vmatprep.subr.bf16.mxu0 0
    %1636 = vmatpush1.bf16.msra.mxu0 %v369
    %1637 = vmatprep.subr.bf16.mxu0 0
    %1638 = vmatpush1.bf16.msra.mxu0 %v370
    %1639 = vmatprep.subr.bf16.mxu0 0
    %1640 = vmatpush1.bf16.msra.mxu0 %v371
    %1641 = vmatprep.subr.bf16.mxu0 0
    %1642 = vmatpush1.bf16.msra.mxu0 %v372
    %1643 = vmatprep.subr.bf16.mxu0 0
    %1644 = vmatpush1.bf16.msra.mxu0 %v373
    %1645 = vmatprep.subr.bf16.mxu0 0
    %1646 = vmatpush1.bf16.msra.mxu0 %v374
    %1647 = vmatprep.subr.bf16.mxu0 0
    %1648 = vmatpush1.bf16.msra.mxu0 %v375
    %1649 = vmatprep.subr.bf16.mxu0 0
    %1650 = vmatpush1.bf16.msra.mxu0 %v376
    %1651 = vmatprep.subr.bf16.mxu0 0
    %1652 = vmatpush1.bf16.msra.mxu0 %v377
    %1653 = vmatprep.subr.bf16.mxu0 0
    %1654 = vmatpush1.bf16.msra.mxu0 %v378
    %1655 = vmatprep.subr.bf16.mxu0 0
    %1656 = vmatpush1.bf16.msra.mxu0 %v379
    %1657 = vmatprep.subr.bf16.mxu0 0
    %1658 = vmatpush1.bf16.msra.mxu0 %v380
    %1659 = vmatprep.subr.bf16.mxu0 0
    %1660 = vmatpush1.bf16.msra.mxu0 %v381
    %1661 = vmatprep.subr.bf16.mxu0 0
    %1662 = vmatpush1.bf16.msra.mxu0 %v382
    %1663 = vmatprep.mubr.bf16.mxu0 %v1576
    %1664 = vmatmul.mubr.bf16.gmra.mrb[0].mxu0 %v1575
    %v1665 = vpop.f32.mrb[0].mxu0
    %v1666 = vadd.f32 0.0, %v1665
    %v1667 = vpop.f32.mrb[0].mxu0
    %v1668 = vpop.f32.mrb[0].mxu0
    %v1669 = vadd.f32 0.0, %v1668
    %v1670 = vpop.f32.mrb[0].mxu0
    %1671 = vmatprep.mubr.bf16.mxu0 %v1578
    %1672 = vmatmul.mubr.bf16.gmra.mrb[0].mxu0 %v1577
    %v1673 = vpop.f32.mrb[0].mxu0
    %v1674 = vadd.f32 0.0, %v1673
    %v1675 = vpop.f32.mrb[0].mxu0
    %v1676 = vpop.f32.mrb[0].mxu0
    %v1677 = vadd.f32 0.0, %v1676
    %v1678 = vpop.f32.mrb[0].mxu0
    %1679 = vmatprep.mubr.bf16.mxu0 %v1580
    %1680 = vmatmul.mubr.bf16.gmra.mrb[0].mxu0 %v1579
    %v1681 = vpop.f32.mrb[0].mxu0
    %v1682 = vadd.f32 0.0, %v1681
    %v1683 = vpop.f32.mrb[0].mxu0
    %v1684 = vpop.f32.mrb[0].mxu0
    %v1685 = vadd.f32 0.0, %v1684
    %v1686 = vpop.f32.mrb[0].mxu0
    %1687 = vmatprep.mubr.bf16.mxu0 %v1582
    %1688 = vmatmul.mubr.bf16.gmra.mrb[0].mxu0 %v1581
    %v1689 = vpop.f32.mrb[0].mxu0
    %v1690 = vadd.f32 0.0, %v1689
    %v1691 = vpop.f32.mrb[0].mxu0
    %v1692 = vpop.f32.mrb[0].mxu0
    %v1693 = vadd.f32 0.0, %v1692
    %v1694 = vpop.f32.mrb[0].mxu0
    %1695 = vmatprep.mubr.bf16.mxu0 %v1584
    %1696 = vmatmul.mubr.bf16.gmra.mrb[0].mxu0 %v1583
    %v1697 = vpop.f32.mrb[0].mxu0
    %v1698 = vadd.f32 0.0, %v1697
    %v1699 = vpop.f32.mrb[0].mxu0
    %v1700 = vpop.f32.mrb[0].mxu0
    %v1701 = vadd.f32 0.0, %v1700
    %v1702 = vpop.f32.mrb[0].mxu0
    %1703 = vmatprep.mubr.bf16.mxu0 %v1586
    %1704 = vmatmul.mubr.bf16.gmra.mrb[0].mxu0 %v1585
    %v1705 = vpop.f32.mrb[0].mxu0
    %v1706 = vadd.f32 0.0, %v1705
    %v1707 = vpop.f32.mrb[0].mxu0
    %v1708 = vpop.f32.mrb[0].mxu0
    %v1709 = vadd.f32 0.0, %v1708
    %v1710 = vpop.f32.mrb[0].mxu0
    %1711 = vmatprep.mubr.bf16.mxu0 %v1588
    %1712 = vmatmul.mubr.bf16.gmra.mrb[0].mxu0 %v1587
    %v1713 = vpop.f32.mrb[0].mxu0
    %v1714 = vadd.f32 0.0, %v1713
    %v1715 = vpop.f32.mrb[0].mxu0
    %v1716 = vpop.f32.mrb[0].mxu0
    %v1717 = vadd.f32 0.0, %v1716
    %v1718 = vpop.f32.mrb[0].mxu0
    %1719 = vmatprep.mubr.bf16.mxu0 %v1590
    %1720 = vmatmul.mubr.bf16.gmra.mrb[0].mxu0 %v1589
    %v1721 = vpop.f32.mrb[0].mxu0
    %v1722 = vadd.f32 0.0, %v1721
    %v1723 = vpop.f32.mrb[0].mxu0
    %v1724 = vpop.f32.mrb[0].mxu0
    %v1725 = vadd.f32 0.0, %v1724
    %v1726 = vpop.f32.mrb[0].mxu0
    %1727 = vmatprep.mubr.bf16.mxu0 %v1592
    %1728 = vmatmul.mubr.bf16.gmra.mrb[0].mxu0 %v1591
    %v1729 = vpop.f32.mrb[0].mxu0
    %v1730 = vadd.f32 0.0, %v1729
    %v1731 = vpop.f32.mrb[0].mxu0
    %v1732 = vpop.f32.mrb[0].mxu0
    %v1733 = vadd.f32 0.0, %v1732
    %v1734 = vpop.f32.mrb[0].mxu0
    %1735 = vmatprep.mubr.bf16.mxu0 %v1594
    %1736 = vmatmul.mubr.bf16.gmra.mrb[0].mxu0 %v1593
    %v1737 = vpop.f32.mrb[0].mxu0
    %v1738 = vadd.f32 0.0, %v1737
    %v1739 = vpop.f32.mrb[0].mxu0
    %v1740 = vpop.f32.mrb[0].mxu0
    %v1741 = vadd.f32 0.0, %v1740
    %v1742 = vpop.f32.mrb[0].mxu0
    %1743 = vmatprep.mubr.bf16.mxu0 %v1596
    %1744 = vmatmul.mubr.bf16.gmra.mrb[0].mxu0 %v1595
    %v1745 = vpop.f32.mrb[0].mxu0
    %v1746 = vadd.f32 0.0, %v1745
    %v1747 = vpop.f32.mrb[0].mxu0
    %v1748 = vpop.f32.mrb[0].mxu0
    %v1749 = vadd.f32 0.0, %v1748
    %v1750 = vpop.f32.mrb[0].mxu0
    %1751 = vmatprep.mubr.bf16.mxu0 %v1598
    %1752 = vmatmul.mubr.bf16.gmra.mrb[0].mxu0 %v1597
    %v1753 = vpop.f32.mrb[0].mxu0
    %v1754 = vadd.f32 0.0, %v1753
    %v1755 = vpop.f32.mrb[0].mxu0
    %v1756 = vpop.f32.mrb[0].mxu0
    %v1757 = vadd.f32 0.0, %v1756
    %v1758 = vpop.f32.mrb[0].mxu0
    %1759 = vmatprep.mubr.bf16.mxu0 %v1600
    %1760 = vmatmul.mubr.bf16.gmra.mrb[0].mxu0 %v1599
    %v1761 = vpop.f32.mrb[0].mxu0
    %v1762 = vadd.f32 0.0, %v1761
    %v1763 = vpop.f32.mrb[0].mxu0
    %v1764 = vpop.f32.mrb[0].mxu0
    %v1765 = vadd.f32 0.0, %v1764
    %v1766 = vpop.f32.mrb[0].mxu0
    %1767 = vmatprep.mubr.bf16.mxu0 %v1602
    %1768 = vmatmul.mubr.bf16.gmra.mrb[0].mxu0 %v1601
    %v1769 = vpop.f32.mrb[0].mxu0
    %v1770 = vadd.f32 0.0, %v1769
    %v1771 = vpop.f32.mrb[0].mxu0
    %v1772 = vpop.f32.mrb[0].mxu0
    %v1773 = vadd.f32 0.0, %v1772
    %v1774 = vpop.f32.mrb[0].mxu0
    %1775 = vdwg.mxu0
    %v1776 = vpack.c.bf16 %v1669, %v1666
    %v1777 = vpack.c.bf16 %v1677, %v1674
    %v1778 = vpack.c.bf16 %v1685, %v1682
    %v1779 = vpack.c.bf16 %v1693, %v1690
    %v1780 = vpack.c.bf16 %v1701, %v1698
    %v1781 = vpack.c.bf16 %v1709, %v1706
    %v1782 = vpack.c.bf16 %v1717, %v1714
    %v1783 = vpack.c.bf16 %v1725, %v1722
    %v1784 = vpack.c.bf16 %v1733, %v1730
    %v1785 = vpack.c.bf16 %v1741, %v1738
    %v1786 = vpack.c.bf16 %v1749, %v1746
    %v1787 = vpack.c.bf16 %v1757, %v1754
    %v1788 = vpack.c.bf16 %v1765, %v1762
    %v1789 = vpack.c.bf16 %v1773, %v1770
    %s1790 = scalar_lea.vmem [#allocation4], 192
    %v1791 = vld [vmem:[%s1790] sm:$0xff]
    %v1792 = vld [vmem:[%s1790 + $0x8] sm:$0xff]
    %v1793 = vld [vmem:[%s1790 + $0x10] sm:$0xff]
    %v1794 = vld [vmem:[%s1790 + $0x18] sm:$0xff]
    %v1795 = vld [vmem:[%s1790 + $0x20] sm:$0xff]
    %v1796 = vld [vmem:[%s1790 + $0x28] sm:$0xff]
    %v1797 = vld [vmem:[%s1790 + $0x30] sm:$0xff]
    %v1798 = vld [vmem:[%s1790 + $0x38] sm:$0xff]
    %v1799 = vld [vmem:[%s1790 + $0x40] sm:$0xff]
    %v1800 = vld [vmem:[%s1790 + $0x48] sm:$0xff]
    %v1801 = vld [vmem:[%s1790 + $0x50] sm:$0xff]
    %v1802 = vld [vmem:[%s1790 + $0x58] sm:$0xff]
    %v1815 = vunpack.c.l.b16 %v1791
    %v1816 = vunpack.c.h.b16 %v1791
    %v1817 = vunpack.c.l.b16 %v1792
    %v1818 = vunpack.c.h.b16 %v1792
    %v1819 = vunpack.c.l.b16 %v1793
    %v1820 = vunpack.c.h.b16 %v1793
    %v1821 = vunpack.c.l.b16 %v1794
    %v1822 = vunpack.c.h.b16 %v1794
    %v1823 = vunpack.c.l.b16 %v1795
    %v1824 = vunpack.c.h.b16 %v1795
    %v1825 = vunpack.c.l.b16 %v1796
    %v1826 = vunpack.c.h.b16 %v1796
    %v1827 = vunpack.c.l.b16 %v1797
    %v1828 = vunpack.c.h.b16 %v1797
    %v1829 = vunpack.c.l.b16 %v1798
    %v1830 = vunpack.c.h.b16 %v1798
    %v1831 = vunpack.c.l.b16 %v1799
    %v1832 = vunpack.c.h.b16 %v1799
    %v1833 = vunpack.c.l.b16 %v1800
    %v1834 = vunpack.c.h.b16 %v1800
    %v1835 = vunpack.c.l.b16 %v1801
    %v1836 = vunpack.c.h.b16 %v1801
    %v1837 = vunpack.c.l.b16 %v1802
    %v1838 = vunpack.c.h.b16 %v1802
    %v1839 = vpack.c.b16 %v1817, %v1815
    %v1840 = vpack.c.b16 %v1818, %v1816
    %v1841 = vpack.c.b16 %v1821, %v1819
    %v1842 = vpack.c.b16 %v1822, %v1820
    %v1843 = vpack.c.b16 %v1825, %v1823
    %v1844 = vpack.c.b16 %v1826, %v1824
    %v1845 = vpack.c.b16 %v1829, %v1827
    %v1846 = vpack.c.b16 %v1830, %v1828
    %v1847 = vpack.c.b16 %v1833, %v1831
    %v1848 = vpack.c.b16 %v1834, %v1832
    %v1849 = vpack.c.b16 %v1837, %v1835
    %v1850 = vpack.c.b16 %v1838, %v1836
    %v1864 = vsel %vm971, %v1776, 0
    %v1867 = vsel %vm971, %v1777, 0
    %v1870 = vsel %vm971, %v1778, 0
    %v1873 = vsel %vm971, %v1779, 0
    %v1876 = vsel %vm971, %v1780, 0
    %v1879 = vsel %vm971, %v1781, 0
    %v1882 = vsel %vm971, %v1782, 0
    %v1885 = vsel %vm971, %v1783, 0
    %v1888 = vsel %vm971, %v1784, 0
    %v1891 = vsel %vm971, %v1785, 0
    %v1894 = vsel %vm971, %v1786, 0
    %v1897 = vsel %vm971, %v1787, 0
    %v1900 = vsel %vm971, %v1788, 0
    %v1903 = vsel %vm971, %v1789, 0
    %1905 = vmatprep.subr.bf16.mxu0 %v1840
    %1906 = vmatpush1.bf16.msra.mxu0 %v1839
    %1907 = vmatprep.subr.bf16.mxu0 %v1842
    %1908 = vmatpush1.bf16.msra.mxu0 %v1841
    %1909 = vmatprep.subr.bf16.mxu0 %v1844
    %1910 = vmatpush1.bf16.msra.mxu0 %v1843
    %1911 = vmatprep.subr.bf16.mxu0 %v1846
    %1912 = vmatpush1.bf16.msra.mxu0 %v1845
    %1913 = vmatprep.subr.bf16.mxu0 %v1848
    %1914 = vmatpush1.bf16.msra.mxu0 %v1847
    %1915 = vmatprep.subr.bf16.mxu0 %v1850
    %1916 = vmatpush1.bf16.msra.mxu0 %v1849
    %1917 = vmatprep.subr.bf16.mxu0 0
    %1918 = vmatpush1.bf16.msra.mxu0 0
    %1919 = vmatprep.subr.bf16.mxu0 0
    %1920 = vmatpush1.bf16.msra.mxu0 0
    %1921 = vmatprep.subr.bf16.mxu0 0
    %1922 = vmatpush1.bf16.msra.mxu0 0
    %1923 = vmatprep.subr.bf16.mxu0 0
    %1924 = vmatpush1.bf16.msra.mxu0 0
    %1925 = vmatprep.subr.bf16.mxu0 0
    %1926 = vmatpush1.bf16.msra.mxu0 0
    %1927 = vmatprep.subr.bf16.mxu0 0
    %1928 = vmatpush1.bf16.msra.mxu0 0
    %1929 = vmatprep.subr.bf16.mxu0 0
    %1930 = vmatpush1.bf16.msra.mxu0 0
    %1931 = vmatprep.subr.bf16.mxu0 0
    %1932 = vmatpush1.bf16.msra.mxu0 0
    %1933 = vmatprep.subr.bf16.mxu0 0
    %1934 = vmatpush1.bf16.msra.mxu0 0
    %1935 = vmatprep.subr.bf16.mxu0 0
    %1936 = vmatpush1.bf16.msra.mxu0 0
    %1937 = vmatprep.mubr.bf16.mxu0 0
    %1938 = vmatmul.mubr.bf16.gmra.mrb[0].mxu0 %v1864
    %v1939 = vpop.f32.mrb[0].mxu0
    %v1940 = vadd.f32 0.0, %v1939
    %v1941 = vpop.f32.mrb[0].mxu0
    %v1942 = vadd.f32 0.0, %v1941
    %v1943 = vpop.f32.mrb[0].mxu0
    %v1944 = vadd.f32 0.0, %v1943
    %v1945 = vpop.f32.mrb[0].mxu0
    %v1946 = vadd.f32 0.0, %v1945
    %1947 = vmatprep.mubr.bf16.mxu0 0
    %1948 = vmatmul.mubr.bf16.gmra.mrb[0].mxu0 %v1867
    %v1949 = vpop.f32.mrb[0].mxu0
    %v1950 = vadd.f32 0.0, %v1949
    %v1951 = vpop.f32.mrb[0].mxu0
    %v1952 = vadd.f32 0.0, %v1951
    %v1953 = vpop.f32.mrb[0].mxu0
    %v1954 = vadd.f32 0.0, %v1953
    %v1955 = vpop.f32.mrb[0].mxu0
    %v1956 = vadd.f32 0.0, %v1955
    %1957 = vmatprep.mubr.bf16.mxu0 0
    %1958 = vmatmul.mubr.bf16.gmra.mrb[0].mxu0 %v1870
    %v1959 = vpop.f32.mrb[0].mxu0
    %v1960 = vadd.f32 0.0, %v1959
    %v1961 = vpop.f32.mrb[0].mxu0
    %v1962 = vadd.f32 0.0, %v1961
    %v1963 = vpop.f32.mrb[0].mxu0
    %v1964 = vadd.f32 0.0, %v1963
    %v1965 = vpop.f32.mrb[0].mxu0
    %v1966 = vadd.f32 0.0, %v1965
    %1967 = vmatprep.mubr.bf16.mxu0 0
    %1968 = vmatmul.mubr.bf16.gmra.mrb[0].mxu0 %v1873
    %v1969 = vpop.f32.mrb[0].mxu0
    %v1970 = vadd.f32 0.0, %v1969
    %v1971 = vpop.f32.mrb[0].mxu0
    %v1972 = vadd.f32 0.0, %v1971
    %v1973 = vpop.f32.mrb[0].mxu0
    %v1974 = vadd.f32 0.0, %v1973
    %v1975 = vpop.f32.mrb[0].mxu0
    %v1976 = vadd.f32 0.0, %v1975
    %1977 = vmatprep.mubr.bf16.mxu0 0
    %1978 = vmatmul.mubr.bf16.gmra.mrb[0].mxu0 %v1876
    %v1979 = vpop.f32.mrb[0].mxu0
    %v1980 = vadd.f32 0.0, %v1979
    %v1981 = vpop.f32.mrb[0].mxu0
    %v1982 = vadd.f32 0.0, %v1981
    %v1983 = vpop.f32.mrb[0].mxu0
    %v1984 = vadd.f32 0.0, %v1983
    %v1985 = vpop.f32.mrb[0].mxu0
    %v1986 = vadd.f32 0.0, %v1985
    %1987 = vmatprep.mubr.bf16.mxu0 0
    %1988 = vmatmul.mubr.bf16.gmra.mrb[0].mxu0 %v1879
    %v1989 = vpop.f32.mrb[0].mxu0
    %v1990 = vadd.f32 0.0, %v1989
    %v1991 = vpop.f32.mrb[0].mxu0
    %v1992 = vadd.f32 0.0, %v1991
    %v1993 = vpop.f32.mrb[0].mxu0
    %v1994 = vadd.f32 0.0, %v1993
    %v1995 = vpop.f32.mrb[0].mxu0
    %v1996 = vadd.f32 0.0, %v1995
    %1997 = vmatprep.mubr.bf16.mxu0 0
    %1998 = vmatmul.mubr.bf16.gmra.mrb[0].mxu0 %v1882
    %v1999 = vpop.f32.mrb[0].mxu0
    %v2000 = vadd.f32 0.0, %v1999
    %v2001 = vpop.f32.mrb[0].mxu0
    %v2002 = vadd.f32 0.0, %v2001
    %v2003 = vpop.f32.mrb[0].mxu0
    %v2004 = vadd.f32 0.0, %v2003
    %v2005 = vpop.f32.mrb[0].mxu0
    %v2006 = vadd.f32 0.0, %v2005
    %2007 = vmatprep.mubr.bf16.mxu0 0
    %2008 = vmatmul.mubr.bf16.gmra.mrb[0].mxu0 %v1885
    %v2009 = vpop.f32.mrb[0].mxu0
    %v2010 = vadd.f32 0.0, %v2009
    %v2011 = vpop.f32.mrb[0].mxu0
    %v2012 = vadd.f32 0.0, %v2011
    %v2013 = vpop.f32.mrb[0].mxu0
    %v2014 = vadd.f32 0.0, %v2013
    %v2015 = vpop.f32.mrb[0].mxu0
    %v2016 = vadd.f32 0.0, %v2015
    %2017 = vmatprep.mubr.bf16.mxu0 0
    %2018 = vmatmul.mubr.bf16.gmra.mrb[0].mxu0 %v1888
    %v2019 = vpop.f32.mrb[0].mxu0
    %v2020 = vadd.f32 0.0, %v2019
    %v2021 = vpop.f32.mrb[0].mxu0
    %v2022 = vadd.f32 0.0, %v2021
    %v2023 = vpop.f32.mrb[0].mxu0
    %v2024 = vadd.f32 0.0, %v2023
    %v2025 = vpop.f32.mrb[0].mxu0
    %v2026 = vadd.f32 0.0, %v2025
    %2027 = vmatprep.mubr.bf16.mxu0 0
    %2028 = vmatmul.mubr.bf16.gmra.mrb[0].mxu0 %v1891
    %v2029 = vpop.f32.mrb[0].mxu0
    %v2030 = vadd.f32 0.0, %v2029
    %v2031 = vpop.f32.mrb[0].mxu0
    %v2032 = vadd.f32 0.0, %v2031
    %v2033 = vpop.f32.mrb[0].mxu0
    %v2034 = vadd.f32 0.0, %v2033
    %v2035 = vpop.f32.mrb[0].mxu0
    %v2036 = vadd.f32 0.0, %v2035
    %2037 = vmatprep.mubr.bf16.mxu0 0
    %2038 = vmatmul.mubr.bf16.gmra.mrb[0].mxu0 %v1894
    %v2039 = vpop.f32.mrb[0].mxu0
    %v2040 = vadd.f32 0.0, %v2039
    %v2041 = vpop.f32.mrb[0].mxu0
    %v2042 = vadd.f32 0.0, %v2041
    %v2043 = vpop.f32.mrb[0].mxu0
    %v2044 = vadd.f32 0.0, %v2043
    %v2045 = vpop.f32.mrb[0].mxu0
    %v2046 = vadd.f32 0.0, %v2045
    %2047 = vmatprep.mubr.bf16.mxu0 0
    %2048 = vmatmul.mubr.bf16.gmra.mrb[0].mxu0 %v1897
    %v2049 = vpop.f32.mrb[0].mxu0
    %v2050 = vadd.f32 0.0, %v2049
    %v2051 = vpop.f32.mrb[0].mxu0
    %v2052 = vadd.f32 0.0, %v2051
    %v2053 = vpop.f32.mrb[0].mxu0
    %v2054 = vadd.f32 0.0, %v2053
    %v2055 = vpop.f32.mrb[0].mxu0
    %v2056 = vadd.f32 0.0, %v2055
    %2057 = vmatprep.mubr.bf16.mxu0 0
    %2058 = vmatmul.mubr.bf16.gmra.mrb[0].mxu0 %v1900
    %v2059 = vpop.f32.mrb[0].mxu0
    %v2060 = vadd.f32 0.0, %v2059
    %v2061 = vpop.f32.mrb[0].mxu0
    %v2062 = vadd.f32 0.0, %v2061
    %v2063 = vpop.f32.mrb[0].mxu0
    %v2064 = vadd.f32 0.0, %v2063
    %v2065 = vpop.f32.mrb[0].mxu0
    %v2066 = vadd.f32 0.0, %v2065
    %2067 = vmatprep.mubr.bf16.mxu0 0
    %2068 = vmatmul.mubr.bf16.gmra.mrb[0].mxu0 %v1903
    %v2069 = vpop.f32.mrb[0].mxu0
    %v2070 = vadd.f32 0.0, %v2069
    %v2071 = vpop.f32.mrb[0].mxu0
    %v2072 = vadd.f32 0.0, %v2071
    %v2073 = vpop.f32.mrb[0].mxu0
    %v2074 = vadd.f32 0.0, %v2073
    %v2075 = vpop.f32.mrb[0].mxu0
    %v2076 = vadd.f32 0.0, %v2075
    %2077 = vdwg.mxu0
    %v2078 = vadd.f32 %v1324, %v1940
    %v2079 = vadd.f32 %v1326, %v1942
    %v2080 = vadd.f32 %v1328, %v1944
    %v2081 = vadd.f32 %v1330, %v1946
    %v2082 = vadd.f32 %v1334, %v1950
    %v2083 = vadd.f32 %v1336, %v1952
    %v2084 = vadd.f32 %v1338, %v1954
    %v2085 = vadd.f32 %v1340, %v1956
    %v2086 = vadd.f32 %v1344, %v1960
    %v2087 = vadd.f32 %v1346, %v1962
    %v2088 = vadd.f32 %v1348, %v1964
    %v2089 = vadd.f32 %v1350, %v1966
    %v2090 = vadd.f32 %v1354, %v1970
    %v2091 = vadd.f32 %v1356, %v1972
    %v2092 = vadd.f32 %v1358, %v1974
    %v2093 = vadd.f32 %v1360, %v1976
    %v2094 = vadd.f32 %v1364, %v1980
    %v2095 = vadd.f32 %v1366, %v1982
    %v2096 = vadd.f32 %v1368, %v1984
    %v2097 = vadd.f32 %v1370, %v1986
    %v2098 = vadd.f32 %v1374, %v1990
    %v2099 = vadd.f32 %v1376, %v1992
    %v2100 = vadd.f32 %v1378, %v1994
    %v2101 = vadd.f32 %v1380, %v1996
    %v2102 = vadd.f32 %v1384, %v2000
    %v2103 = vadd.f32 %v1386, %v2002
    %v2104 = vadd.f32 %v1388, %v2004
    %v2105 = vadd.f32 %v1390, %v2006
    %v2106 = vadd.f32 %v1394, %v2010
    %v2107 = vadd.f32 %v1396, %v2012
    %v2108 = vadd.f32 %v1398, %v2014
    %v2109 = vadd.f32 %v1400, %v2016
    %v2110 = vadd.f32 %v1404, %v2020
    %v2111 = vadd.f32 %v1406, %v2022
    %v2112 = vadd.f32 %v1408, %v2024
    %v2113 = vadd.f32 %v1410, %v2026
    %v2114 = vadd.f32 %v1414, %v2030
    %v2115 = vadd.f32 %v1416, %v2032
    %v2116 = vadd.f32 %v1418, %v2034
    %v2117 = vadd.f32 %v1420, %v2036
    %v2118 = vadd.f32 %v1424, %v2040
    %v2119 = vadd.f32 %v1426, %v2042
    %v2120 = vadd.f32 %v1428, %v2044
    %v2121 = vadd.f32 %v1430, %v2046
    %v2122 = vadd.f32 %v1434, %v2050
    %v2123 = vadd.f32 %v1436, %v2052
    %v2124 = vadd.f32 %v1438, %v2054
    %v2125 = vadd.f32 %v1440, %v2056
    %v2126 = vadd.f32 %v1444, %v2060
    %v2127 = vadd.f32 %v1446, %v2062
    %v2128 = vadd.f32 %v1448, %v2064
    %v2129 = vadd.f32 %v1450, %v2066
    %v2130 = vadd.f32 %v1454, %v2070
    %v2131 = vadd.f32 %v1456, %v2072
    %v2132 = vadd.f32 %v1458, %v2074
    %v2133 = vadd.f32 %v1460, %v2076
    %s2134 = scalar_lea.vmem [#allocation2], 672
    %v2135 = vld [vmem:[%s2134] sm:$0xff]
    %v2136 = vld [vmem:[%s2134 + $0x8] sm:$0xff]
    %v2137 = vld [vmem:[%s2134 + $0x10] sm:$0xff]
    %v2138 = vld [vmem:[%s2134 + $0x18] sm:$0xff]
    %v2139 = vld [vmem:[%s2134 + $0x20] sm:$0xff]
    %v2140 = vld [vmem:[%s2134 + $0x28] sm:$0xff]
    %v2141 = vld [vmem:[%s2134 + $0x30] sm:$0xff]
    %v2142 = vld [vmem:[%s2134 + $0x38] sm:$0xff]
    %v2143 = vld [vmem:[%s2134 + $0x40] sm:$0xff]
    %v2144 = vld [vmem:[%s2134 + $0x48] sm:$0xff]
    %v2145 = vld [vmem:[%s2134 + $0x50] sm:$0xff]
    %v2146 = vld [vmem:[%s2134 + $0x58] sm:$0xff]
    %v2147 = vld [vmem:[%s2134 + $0x60] sm:$0xff]
    %v2148 = vld [vmem:[%s2134 + $0x68] sm:$0xff]
    %v2149 = vld [vmem:[%s2134 + $0x70] sm:$0xff]
    %v2150 = vld [vmem:[%s2134 + $0x78] sm:$0xff]
    %v2151 = vld [vmem:[%s2134 + $0x80] sm:$0xff]
    %v2152 = vld [vmem:[%s2134 + $0x88] sm:$0xff]
    %v2153 = vld [vmem:[%s2134 + $0x90] sm:$0xff]
    %v2154 = vld [vmem:[%s2134 + $0x98] sm:$0xff]
    %v2155 = vld [vmem:[%s2134 + $0xa0] sm:$0xff]
    %v2156 = vld [vmem:[%s2134 + $0xa8] sm:$0xff]
    %v2157 = vld [vmem:[%s2134 + $0xb0] sm:$0xff]
    %v2158 = vld [vmem:[%s2134 + $0xb8] sm:$0xff]
    %v2159 = vld [vmem:[%s2134 + $0xc0] sm:$0xff]
    %v2160 = vld [vmem:[%s2134 + $0xc8] sm:$0xff]
    %v2161 = vld [vmem:[%s2134 + $0xd0] sm:$0xff]
    %v2162 = vld [vmem:[%s2134 + $0xd8] sm:$0xff]
    %v2191 = vunpack.c.l.b16 %v2135
    %v2192 = vunpack.c.h.b16 %v2135
    %v2193 = vunpack.c.l.b16 %v2136
    %v2194 = vunpack.c.h.b16 %v2136
    %v2195 = vunpack.c.l.b16 %v2137
    %v2196 = vunpack.c.h.b16 %v2137
    %v2197 = vunpack.c.l.b16 %v2138
    %v2198 = vunpack.c.h.b16 %v2138
    %v2199 = vunpack.c.l.b16 %v2139
    %v2200 = vunpack.c.h.b16 %v2139
    %v2201 = vunpack.c.l.b16 %v2140
    %v2202 = vunpack.c.h.b16 %v2140
    %v2203 = vunpack.c.l.b16 %v2141
    %v2204 = vunpack.c.h.b16 %v2141
    %v2205 = vunpack.c.l.b16 %v2142
    %v2206 = vunpack.c.h.b16 %v2142
    %v2207 = vunpack.c.l.b16 %v2143
    %v2208 = vunpack.c.h.b16 %v2143
    %v2209 = vunpack.c.l.b16 %v2144
    %v2210 = vunpack.c.h.b16 %v2144
    %v2211 = vunpack.c.l.b16 %v2145
    %v2212 = vunpack.c.h.b16 %v2145
    %v2213 = vunpack.c.l.b16 %v2146
    %v2214 = vunpack.c.h.b16 %v2146
    %v2215 = vunpack.c.l.b16 %v2147
    %v2216 = vunpack.c.h.b16 %v2147
    %v2217 = vunpack.c.l.b16 %v2148
    %v2218 = vunpack.c.h.b16 %v2148
    %v2219 = vunpack.c.l.b16 %v2149
    %v2220 = vunpack.c.h.b16 %v2149
    %v2221 = vunpack.c.l.b16 %v2150
    %v2222 = vunpack.c.h.b16 %v2150
    %v2223 = vunpack.c.l.b16 %v2151
    %v2224 = vunpack.c.h.b16 %v2151
    %v2225 = vunpack.c.l.b16 %v2152
    %v2226 = vunpack.c.h.b16 %v2152
    %v2227 = vunpack.c.l.b16 %v2153
    %v2228 = vunpack.c.h.b16 %v2153
    %v2229 = vunpack.c.l.b16 %v2154
    %v2230 = vunpack.c.h.b16 %v2154
    %v2231 = vunpack.c.l.b16 %v2155
    %v2232 = vunpack.c.h.b16 %v2155
    %v2233 = vunpack.c.l.b16 %v2156
    %v2234 = vunpack.c.h.b16 %v2156
    %v2235 = vunpack.c.l.b16 %v2157
    %v2236 = vunpack.c.h.b16 %v2157
    %v2237 = vunpack.c.l.b16 %v2158
    %v2238 = vunpack.c.h.b16 %v2158
    %v2239 = vunpack.c.l.b16 %v2159
    %v2240 = vunpack.c.h.b16 %v2159
    %v2241 = vunpack.c.l.b16 %v2160
    %v2242 = vunpack.c.h.b16 %v2160
    %v2243 = vunpack.c.l.b16 %v2161
    %v2244 = vunpack.c.h.b16 %v2161
    %v2245 = vunpack.c.l.b16 %v2162
    %v2246 = vunpack.c.h.b16 %v2162
    %v2247 = vpack.c.b16 %v2193, %v2191
    %v2248 = vpack.c.b16 %v2194, %v2192
    %v2249 = vpack.c.b16 %v2197, %v2195
    %v2250 = vpack.c.b16 %v2198, %v2196
    %v2251 = vpack.c.b16 %v2201, %v2199
    %v2252 = vpack.c.b16 %v2202, %v2200
    %v2253 = vpack.c.b16 %v2205, %v2203
    %v2254 = vpack.c.b16 %v2206, %v2204
    %v2255 = vpack.c.b16 %v2209, %v2207
    %v2256 = vpack.c.b16 %v2210, %v2208
    %v2257 = vpack.c.b16 %v2213, %v2211
    %v2258 = vpack.c.b16 %v2214, %v2212
    %v2259 = vpack.c.b16 %v2217, %v2215
    %v2260 = vpack.c.b16 %v2218, %v2216
    %v2261 = vpack.c.b16 %v2221, %v2219
    %v2262 = vpack.c.b16 %v2222, %v2220
    %v2263 = vpack.c.b16 %v2225, %v2223
    %v2264 = vpack.c.b16 %v2226, %v2224
    %v2265 = vpack.c.b16 %v2229, %v2227
    %v2266 = vpack.c.b16 %v2230, %v2228
    %v2267 = vpack.c.b16 %v2233, %v2231
    %v2268 = vpack.c.b16 %v2234, %v2232
    %v2269 = vpack.c.b16 %v2237, %v2235
    %v2270 = vpack.c.b16 %v2238, %v2236
    %v2271 = vpack.c.b16 %v2241, %v2239
    %v2272 = vpack.c.b16 %v2242, %v2240
    %v2273 = vpack.c.b16 %v2245, %v2243
    %v2274 = vpack.c.b16 %v2246, %v2244
    %2303 = vmatprep.subr.bf16.mxu0 0
    %2304 = vmatpush1.bf16.msra.mxu0 %v367
    %2305 = vmatprep.subr.bf16.mxu0 0
    %2306 = vmatpush1.bf16.msra.mxu0 %v368
    %2307 = vmatprep.subr.bf16.mxu0 0
    %2308 = vmatpush1.bf16.msra.mxu0 %v369
    %2309 = vmatprep.subr.bf16.mxu0 0
    %2310 = vmatpush1.bf16.msra.mxu0 %v370
    %2311 = vmatprep.subr.bf16.mxu0 0
    %2312 = vmatpush1.bf16.msra.mxu0 %v371
    %2313 = vmatprep.subr.bf16.mxu0 0
    %2314 = vmatpush1.bf16.msra.mxu0 %v372
    %2315 = vmatprep.subr.bf16.mxu0 0
    %2316 = vmatpush1.bf16.msra.mxu0 %v373
    %2317 = vmatprep.subr.bf16.mxu0 0
    %2318 = vmatpush1.bf16.msra.mxu0 %v374
    %2319 = vmatprep.subr.bf16.mxu0 0
    %2320 = vmatpush1.bf16.msra.mxu0 %v375
    %2321 = vmatprep.subr.bf16.mxu0 0
    %2322 = vmatpush1.bf16.msra.mxu0 %v376
    %2323 = vmatprep.subr.bf16.mxu0 0
    %2324 = vmatpush1.bf16.msra.mxu0 %v377
    %2325 = vmatprep.subr.bf16.mxu0 0
    %2326 = vmatpush1.bf16.msra.mxu0 %v378
    %2327 = vmatprep.subr.bf16.mxu0 0
    %2328 = vmatpush1.bf16.msra.mxu0 %v379
    %2329 = vmatprep.subr.bf16.mxu0 0
    %2330 = vmatpush1.bf16.msra.mxu0 %v380
    %2331 = vmatprep.subr.bf16.mxu0 0
    %2332 = vmatpush1.bf16.msra.mxu0 %v381
    %2333 = vmatprep.subr.bf16.mxu0 0
    %2334 = vmatpush1.bf16.msra.mxu0 %v382
    %2335 = vmatprep.mubr.bf16.mxu0 %v2248
    %2336 = vmatmul.mubr.bf16.gmra.mrb[0].mxu0 %v2247
    %v2337 = vpop.f32.mrb[0].mxu0
    %v2338 = vadd.f32 0.0, %v2337
    %v2339 = vpop.f32.mrb[0].mxu0
    %v2340 = vpop.f32.mrb[0].mxu0
    %v2341 = vadd.f32 0.0, %v2340
    %v2342 = vpop.f32.mrb[0].mxu0
    %2343 = vmatprep.mubr.bf16.mxu0 %v2250
    %2344 = vmatmul.mubr.bf16.gmra.mrb[0].mxu0 %v2249
    %v2345 = vpop.f32.mrb[0].mxu0
    %v2346 = vadd.f32 0.0, %v2345
    %v2347 = vpop.f32.mrb[0].mxu0
    %v2348 = vpop.f32.mrb[0].mxu0
    %v2349 = vadd.f32 0.0, %v2348
    %v2350 = vpop.f32.mrb[0].mxu0
    %2351 = vmatprep.mubr.bf16.mxu0 %v2252
    %2352 = vmatmul.mubr.bf16.gmra.mrb[0].mxu0 %v2251
    %v2353 = vpop.f32.mrb[0].mxu0
    %v2354 = vadd.f32 0.0, %v2353
    %v2355 = vpop.f32.mrb[0].mxu0
    %v2356 = vpop.f32.mrb[0].mxu0
    %v2357 = vadd.f32 0.0, %v2356
    %v2358 = vpop.f32.mrb[0].mxu0
    %2359 = vmatprep.mubr.bf16.mxu0 %v2254
    %2360 = vmatmul.mubr.bf16.gmra.mrb[0].mxu0 %v2253
    %v2361 = vpop.f32.mrb[0].mxu0
    %v2362 = vadd.f32 0.0, %v2361
    %v2363 = vpop.f32.mrb[0].mxu0
    %v2364 = vpop.f32.mrb[0].mxu0
    %v2365 = vadd.f32 0.0, %v2364
    %v2366 = vpop.f32.mrb[0].mxu0
    %2367 = vmatprep.mubr.bf16.mxu0 %v2256
    %2368 = vmatmul.mubr.bf16.gmra.mrb[0].mxu0 %v2255
    %v2369 = vpop.f32.mrb[0].mxu0
    %v2370 = vadd.f32 0.0, %v2369
    %v2371 = vpop.f32.mrb[0].mxu0
    %v2372 = vpop.f32.mrb[0].mxu0
    %v2373 = vadd.f32 0.0, %v2372
    %v2374 = vpop.f32.mrb[0].mxu0
    %2375 = vmatprep.mubr.bf16.mxu0 %v2258
    %2376 = vmatmul.mubr.bf16.gmra.mrb[0].mxu0 %v2257
    %v2377 = vpop.f32.mrb[0].mxu0
    %v2378 = vadd.f32 0.0, %v2377
    %v2379 = vpop.f32.mrb[0].mxu0
    %v2380 = vpop.f32.mrb[0].mxu0
    %v2381 = vadd.f32 0.0, %v2380
    %v2382 = vpop.f32.mrb[0].mxu0
    %2383 = vmatprep.mubr.bf16.mxu0 %v2260
    %2384 = vmatmul.mubr.bf16.gmra.mrb[0].mxu0 %v2259
    %v2385 = vpop.f32.mrb[0].mxu0
    %v2386 = vadd.f32 0.0, %v2385
    %v2387 = vpop.f32.mrb[0].mxu0
    %v2388 = vpop.f32.mrb[0].mxu0
    %v2389 = vadd.f32 0.0, %v2388
    %v2390 = vpop.f32.mrb[0].mxu0
    %2391 = vmatprep.mubr.bf16.mxu0 %v2262
    %2392 = vmatmul.mubr.bf16.gmra.mrb[0].mxu0 %v2261
    %v2393 = vpop.f32.mrb[0].mxu0
    %v2394 = vadd.f32 0.0, %v2393
    %v2395 = vpop.f32.mrb[0].mxu0
    %v2396 = vpop.f32.mrb[0].mxu0
    %v2397 = vadd.f32 0.0, %v2396
    %v2398 = vpop.f32.mrb[0].mxu0
    %2399 = vmatprep.mubr.bf16.mxu0 %v2264
    %2400 = vmatmul.mubr.bf16.gmra.mrb[0].mxu0 %v2263
    %v2401 = vpop.f32.mrb[0].mxu0
    %v2402 = vadd.f32 0.0, %v2401
    %v2403 = vpop.f32.mrb[0].mxu0
    %v2404 = vpop.f32.mrb[0].mxu0
    %v2405 = vadd.f32 0.0, %v2404
    %v2406 = vpop.f32.mrb[0].mxu0
    %2407 = vmatprep.mubr.bf16.mxu0 %v2266
    %2408 = vmatmul.mubr.bf16.gmra.mrb[0].mxu0 %v2265
    %v2409 = vpop.f32.mrb[0].mxu0
    %v2410 = vadd.f32 0.0, %v2409
    %v2411 = vpop.f32.mrb[0].mxu0
    %v2412 = vpop.f32.mrb[0].mxu0
    %v2413 = vadd.f32 0.0, %v2412
    %v2414 = vpop.f32.mrb[0].mxu0
    %2415 = vmatprep.mubr.bf16.mxu0 %v2268
    %2416 = vmatmul.mubr.bf16.gmra.mrb[0].mxu0 %v2267
    %v2417 = vpop.f32.mrb[0].mxu0
    %v2418 = vadd.f32 0.0, %v2417
    %v2419 = vpop.f32.mrb[0].mxu0
    %v2420 = vpop.f32.mrb[0].mxu0
    %v2421 = vadd.f32 0.0, %v2420
    %v2422 = vpop.f32.mrb[0].mxu0
    %2423 = vmatprep.mubr.bf16.mxu0 %v2270
    %2424 = vmatmul.mubr.bf16.gmra.mrb[0].mxu0 %v2269
    %v2425 = vpop.f32.mrb[0].mxu0
    %v2426 = vadd.f32 0.0, %v2425
    %v2427 = vpop.f32.mrb[0].mxu0
    %v2428 = vpop.f32.mrb[0].mxu0
    %v2429 = vadd.f32 0.0, %v2428
    %v2430 = vpop.f32.mrb[0].mxu0
    %2431 = vmatprep.mubr.bf16.mxu0 %v2272
    %2432 = vmatmul.mubr.bf16.gmra.mrb[0].mxu0 %v2271
    %v2433 = vpop.f32.mrb[0].mxu0
    %v2434 = vadd.f32 0.0, %v2433
    %v2435 = vpop.f32.mrb[0].mxu0
    %v2436 = vpop.f32.mrb[0].mxu0
    %v2437 = vadd.f32 0.0, %v2436
    %v2438 = vpop.f32.mrb[0].mxu0
    %2439 = vmatprep.mubr.bf16.mxu0 %v2274
    %2440 = vmatmul.mubr.bf16.gmra.mrb[0].mxu0 %v2273
    %v2441 = vpop.f32.mrb[0].mxu0
    %v2442 = vadd.f32 0.0, %v2441
    %v2443 = vpop.f32.mrb[0].mxu0
    %v2444 = vpop.f32.mrb[0].mxu0
    %v2445 = vadd.f32 0.0, %v2444
    %v2446 = vpop.f32.mrb[0].mxu0
    %2447 = vdwg.mxu0
    %v2448 = vpack.c.bf16 %v2341, %v2338
    %v2449 = vpack.c.bf16 %v2349, %v2346
    %v2450 = vpack.c.bf16 %v2357, %v2354
    %v2451 = vpack.c.bf16 %v2365, %v2362
    %v2452 = vpack.c.bf16 %v2373, %v2370
    %v2453 = vpack.c.bf16 %v2381, %v2378
    %v2454 = vpack.c.bf16 %v2389, %v2386
    %v2455 = vpack.c.bf16 %v2397, %v2394
    %v2456 = vpack.c.bf16 %v2405, %v2402
    %v2457 = vpack.c.bf16 %v2413, %v2410
    %v2458 = vpack.c.bf16 %v2421, %v2418
    %v2459 = vpack.c.bf16 %v2429, %v2426
    %v2460 = vpack.c.bf16 %v2437, %v2434
    %v2461 = vpack.c.bf16 %v2445, %v2442
    %s2462 = scalar_lea.vmem [#allocation4], 288
    %v2463 = vld [vmem:[%s2462] sm:$0xff]
    %v2464 = vld [vmem:[%s2462 + $0x8] sm:$0xff]
    %v2465 = vld [vmem:[%s2462 + $0x10] sm:$0xff]
    %v2466 = vld [vmem:[%s2462 + $0x18] sm:$0xff]
    %v2467 = vld [vmem:[%s2462 + $0x20] sm:$0xff]
    %v2468 = vld [vmem:[%s2462 + $0x28] sm:$0xff]
    %v2469 = vld [vmem:[%s2462 + $0x30] sm:$0xff]
    %v2470 = vld [vmem:[%s2462 + $0x38] sm:$0xff]
    %v2471 = vld [vmem:[%s2462 + $0x40] sm:$0xff]
    %v2472 = vld [vmem:[%s2462 + $0x48] sm:$0xff]
    %v2473 = vld [vmem:[%s2462 + $0x50] sm:$0xff]
    %v2474 = vld [vmem:[%s2462 + $0x58] sm:$0xff]
    %v2487 = vunpack.c.l.b16 %v2463
    %v2488 = vunpack.c.h.b16 %v2463
    %v2489 = vunpack.c.l.b16 %v2464
    %v2490 = vunpack.c.h.b16 %v2464
    %v2491 = vunpack.c.l.b16 %v2465
    %v2492 = vunpack.c.h.b16 %v2465
    %v2493 = vunpack.c.l.b16 %v2466
    %v2494 = vunpack.c.h.b16 %v2466
    %v2495 = vunpack.c.l.b16 %v2467
    %v2496 = vunpack.c.h.b16 %v2467
    %v2497 = vunpack.c.l.b16 %v2468
    %v2498 = vunpack.c.h.b16 %v2468
    %v2499 = vunpack.c.l.b16 %v2469
    %v2500 = vunpack.c.h.b16 %v2469
    %v2501 = vunpack.c.l.b16 %v2470
    %v2502 = vunpack.c.h.b16 %v2470
    %v2503 = vunpack.c.l.b16 %v2471
    %v2504 = vunpack.c.h.b16 %v2471
    %v2505 = vunpack.c.l.b16 %v2472
    %v2506 = vunpack.c.h.b16 %v2472
    %v2507 = vunpack.c.l.b16 %v2473
    %v2508 = vunpack.c.h.b16 %v2473
    %v2509 = vunpack.c.l.b16 %v2474
    %v2510 = vunpack.c.h.b16 %v2474
    %v2511 = vpack.c.b16 %v2489, %v2487
    %v2512 = vpack.c.b16 %v2490, %v2488
    %v2513 = vpack.c.b16 %v2493, %v2491
    %v2514 = vpack.c.b16 %v2494, %v2492
    %v2515 = vpack.c.b16 %v2497, %v2495
    %v2516 = vpack.c.b16 %v2498, %v2496
    %v2517 = vpack.c.b16 %v2501, %v2499
    %v2518 = vpack.c.b16 %v2502, %v2500
    %v2519 = vpack.c.b16 %v2505, %v2503
    %v2520 = vpack.c.b16 %v2506, %v2504
    %v2521 = vpack.c.b16 %v2509, %v2507
    %v2522 = vpack.c.b16 %v2510, %v2508
    %v2536 = vsel %vm971, %v2448, 0
    %v2539 = vsel %vm971, %v2449, 0
    %v2542 = vsel %vm971, %v2450, 0
    %v2545 = vsel %vm971, %v2451, 0
    %v2548 = vsel %vm971, %v2452, 0
    %v2551 = vsel %vm971, %v2453, 0
    %v2554 = vsel %vm971, %v2454, 0
    %v2557 = vsel %vm971, %v2455, 0
    %v2560 = vsel %vm971, %v2456, 0
    %v2563 = vsel %vm971, %v2457, 0
    %v2566 = vsel %vm971, %v2458, 0
    %v2569 = vsel %vm971, %v2459, 0
    %v2572 = vsel %vm971, %v2460, 0
    %v2575 = vsel %vm971, %v2461, 0
    %2577 = vmatprep.subr.bf16.mxu0 %v2512
    %2578 = vmatpush1.bf16.msra.mxu0 %v2511
    %2579 = vmatprep.subr.bf16.mxu0 %v2514
    %2580 = vmatpush1.bf16.msra.mxu0 %v2513
    %2581 = vmatprep.subr.bf16.mxu0 %v2516
    %2582 = vmatpush1.bf16.msra.mxu0 %v2515
    %2583 = vmatprep.subr.bf16.mxu0 %v2518
    %2584 = vmatpush1.bf16.msra.mxu0 %v2517
    %2585 = vmatprep.subr.bf16.mxu0 %v2520
    %2586 = vmatpush1.bf16.msra.mxu0 %v2519
    %2587 = vmatprep.subr.bf16.mxu0 %v2522
    %2588 = vmatpush1.bf16.msra.mxu0 %v2521
    %2589 = vmatprep.subr.bf16.mxu0 0
    %2590 = vmatpush1.bf16.msra.mxu0 0
    %2591 = vmatprep.subr.bf16.mxu0 0
    %2592 = vmatpush1.bf16.msra.mxu0 0
    %2593 = vmatprep.subr.bf16.mxu0 0
    %2594 = vmatpush1.bf16.msra.mxu0 0
    %2595 = vmatprep.subr.bf16.mxu0 0
    %2596 = vmatpush1.bf16.msra.mxu0 0
    %2597 = vmatprep.subr.bf16.mxu0 0
    %2598 = vmatpush1.bf16.msra.mxu0 0
    %2599 = vmatprep.subr.bf16.mxu0 0
    %2600 = vmatpush1.bf16.msra.mxu0 0
    %2601 = vmatprep.subr.bf16.mxu0 0
    %2602 = vmatpush1.bf16.msra.mxu0 0
    %2603 = vmatprep.subr.bf16.mxu0 0
    %2604 = vmatpush1.bf16.msra.mxu0 0
    %2605 = vmatprep.subr.bf16.mxu0 0
    %2606 = vmatpush1.bf16.msra.mxu0 0
    %2607 = vmatprep.subr.bf16.mxu0 0
    %2608 = vmatpush1.bf16.msra.mxu0 0
    %2609 = vmatprep.mubr.bf16.mxu0 0
    %2610 = vmatmul.mubr.bf16.gmra.mrb[0].mxu0 %v2536
    %v2611 = vpop.f32.mrb[0].mxu0
    %v2612 = vadd.f32 0.0, %v2611
    %v2613 = vpop.f32.mrb[0].mxu0
    %v2614 = vadd.f32 0.0, %v2613
    %v2615 = vpop.f32.mrb[0].mxu0
    %v2616 = vadd.f32 0.0, %v2615
    %v2617 = vpop.f32.mrb[0].mxu0
    %v2618 = vadd.f32 0.0, %v2617
    %2619 = vmatprep.mubr.bf16.mxu0 0
    %2620 = vmatmul.mubr.bf16.gmra.mrb[0].mxu0 %v2539
    %v2621 = vpop.f32.mrb[0].mxu0
    %v2622 = vadd.f32 0.0, %v2621
    %v2623 = vpop.f32.mrb[0].mxu0
    %v2624 = vadd.f32 0.0, %v2623
    %v2625 = vpop.f32.mrb[0].mxu0
    %v2626 = vadd.f32 0.0, %v2625
    %v2627 = vpop.f32.mrb[0].mxu0
    %v2628 = vadd.f32 0.0, %v2627
    %2629 = vmatprep.mubr.bf16.mxu0 0
    %2630 = vmatmul.mubr.bf16.gmra.mrb[0].mxu0 %v2542
    %v2631 = vpop.f32.mrb[0].mxu0
    %v2632 = vadd.f32 0.0, %v2631
    %v2633 = vpop.f32.mrb[0].mxu0
    %v2634 = vadd.f32 0.0, %v2633
    %v2635 = vpop.f32.mrb[0].mxu0
    %v2636 = vadd.f32 0.0, %v2635
    %v2637 = vpop.f32.mrb[0].mxu0
    %v2638 = vadd.f32 0.0, %v2637
    %2639 = vmatprep.mubr.bf16.mxu0 0
    %2640 = vmatmul.mubr.bf16.gmra.mrb[0].mxu0 %v2545
    %v2641 = vpop.f32.mrb[0].mxu0
    %v2642 = vadd.f32 0.0, %v2641
    %v2643 = vpop.f32.mrb[0].mxu0
    %v2644 = vadd.f32 0.0, %v2643
    %v2645 = vpop.f32.mrb[0].mxu0
    %v2646 = vadd.f32 0.0, %v2645
    %v2647 = vpop.f32.mrb[0].mxu0
    %v2648 = vadd.f32 0.0, %v2647
    %2649 = vmatprep.mubr.bf16.mxu0 0
    %2650 = vmatmul.mubr.bf16.gmra.mrb[0].mxu0 %v2548
    %v2651 = vpop.f32.mrb[0].mxu0
    %v2652 = vadd.f32 0.0, %v2651
    %v2653 = vpop.f32.mrb[0].mxu0
    %v2654 = vadd.f32 0.0, %v2653
    %v2655 = vpop.f32.mrb[0].mxu0
    %v2656 = vadd.f32 0.0, %v2655
    %v2657 = vpop.f32.mrb[0].mxu0
    %v2658 = vadd.f32 0.0, %v2657
    %2659 = vmatprep.mubr.bf16.mxu0 0
    %2660 = vmatmul.mubr.bf16.gmra.mrb[0].mxu0 %v2551
    %v2661 = vpop.f32.mrb[0].mxu0
    %v2662 = vadd.f32 0.0, %v2661
    %v2663 = vpop.f32.mrb[0].mxu0
    %v2664 = vadd.f32 0.0, %v2663
    %v2665 = vpop.f32.mrb[0].mxu0
    %v2666 = vadd.f32 0.0, %v2665
    %v2667 = vpop.f32.mrb[0].mxu0
    %v2668 = vadd.f32 0.0, %v2667
    %2669 = vmatprep.mubr.bf16.mxu0 0
    %2670 = vmatmul.mubr.bf16.gmra.mrb[0].mxu0 %v2554
    %v2671 = vpop.f32.mrb[0].mxu0
    %v2672 = vadd.f32 0.0, %v2671
    %v2673 = vpop.f32.mrb[0].mxu0
    %v2674 = vadd.f32 0.0, %v2673
    %v2675 = vpop.f32.mrb[0].mxu0
    %v2676 = vadd.f32 0.0, %v2675
    %v2677 = vpop.f32.mrb[0].mxu0
    %v2678 = vadd.f32 0.0, %v2677
    %2679 = vmatprep.mubr.bf16.mxu0 0
    %2680 = vmatmul.mubr.bf16.gmra.mrb[0].mxu0 %v2557
    %v2681 = vpop.f32.mrb[0].mxu0
    %v2682 = vadd.f32 0.0, %v2681
    %v2683 = vpop.f32.mrb[0].mxu0
    %v2684 = vadd.f32 0.0, %v2683
    %v2685 = vpop.f32.mrb[0].mxu0
    %v2686 = vadd.f32 0.0, %v2685
    %v2687 = vpop.f32.mrb[0].mxu0
    %v2688 = vadd.f32 0.0, %v2687
    %2689 = vmatprep.mubr.bf16.mxu0 0
    %2690 = vmatmul.mubr.bf16.gmra.mrb[0].mxu0 %v2560
    %v2691 = vpop.f32.mrb[0].mxu0
    %v2692 = vadd.f32 0.0, %v2691
    %v2693 = vpop.f32.mrb[0].mxu0
    %v2694 = vadd.f32 0.0, %v2693
    %v2695 = vpop.f32.mrb[0].mxu0
    %v2696 = vadd.f32 0.0, %v2695
    %v2697 = vpop.f32.mrb[0].mxu0
    %v2698 = vadd.f32 0.0, %v2697
    %2699 = vmatprep.mubr.bf16.mxu0 0
    %2700 = vmatmul.mubr.bf16.gmra.mrb[0].mxu0 %v2563
    %v2701 = vpop.f32.mrb[0].mxu0
    %v2702 = vadd.f32 0.0, %v2701
    %v2703 = vpop.f32.mrb[0].mxu0
    %v2704 = vadd.f32 0.0, %v2703
    %v2705 = vpop.f32.mrb[0].mxu0
    %v2706 = vadd.f32 0.0, %v2705
    %v2707 = vpop.f32.mrb[0].mxu0
    %v2708 = vadd.f32 0.0, %v2707
    %2709 = vmatprep.mubr.bf16.mxu0 0
    %2710 = vmatmul.mubr.bf16.gmra.mrb[0].mxu0 %v2566
    %v2711 = vpop.f32.mrb[0].mxu0
    %v2712 = vadd.f32 0.0, %v2711
    %v2713 = vpop.f32.mrb[0].mxu0
    %v2714 = vadd.f32 0.0, %v2713
    %v2715 = vpop.f32.mrb[0].mxu0
    %v2716 = vadd.f32 0.0, %v2715
    %v2717 = vpop.f32.mrb[0].mxu0
    %v2718 = vadd.f32 0.0, %v2717
    %2719 = vmatprep.mubr.bf16.mxu0 0
    %2720 = vmatmul.mubr.bf16.gmra.mrb[0].mxu0 %v2569
    %v2721 = vpop.f32.mrb[0].mxu0
    %v2722 = vadd.f32 0.0, %v2721
    %v2723 = vpop.f32.mrb[0].mxu0
    %v2724 = vadd.f32 0.0, %v2723
    %v2725 = vpop.f32.mrb[0].mxu0
    %v2726 = vadd.f32 0.0, %v2725
    %v2727 = vpop.f32.mrb[0].mxu0
    %v2728 = vadd.f32 0.0, %v2727
    %2729 = vmatprep.mubr.bf16.mxu0 0
    %2730 = vmatmul.mubr.bf16.gmra.mrb[0].mxu0 %v2572
    %v2731 = vpop.f32.mrb[0].mxu0
    %v2732 = vadd.f32 0.0, %v2731
    %v2733 = vpop.f32.mrb[0].mxu0
    %v2734 = vadd.f32 0.0, %v2733
    %v2735 = vpop.f32.mrb[0].mxu0
    %v2736 = vadd.f32 0.0, %v2735
    %v2737 = vpop.f32.mrb[0].mxu0
    %v2738 = vadd.f32 0.0, %v2737
    %2739 = vmatprep.mubr.bf16.mxu0 0
    %2740 = vmatmul.mubr.bf16.gmra.mrb[0].mxu0 %v2575
    %v2741 = vpop.f32.mrb[0].mxu0
    %v2742 = vadd.f32 0.0, %v2741
    %v2743 = vpop.f32.mrb[0].mxu0
    %v2744 = vadd.f32 0.0, %v2743
    %v2745 = vpop.f32.mrb[0].mxu0
    %v2746 = vadd.f32 0.0, %v2745
    %v2747 = vpop.f32.mrb[0].mxu0
    %v2748 = vadd.f32 0.0, %v2747
    %2749 = vdwg.mxu0
    %v2750 = vadd.f32 %v2078, %v2612
    %v2751 = vadd.f32 %v2079, %v2614
    %v2752 = vadd.f32 %v2080, %v2616
    %v2753 = vadd.f32 %v2081, %v2618
    %v2754 = vadd.f32 %v2082, %v2622
    %v2755 = vadd.f32 %v2083, %v2624
    %v2756 = vadd.f32 %v2084, %v2626
    %v2757 = vadd.f32 %v2085, %v2628
    %v2758 = vadd.f32 %v2086, %v2632
    %v2759 = vadd.f32 %v2087, %v2634
    %v2760 = vadd.f32 %v2088, %v2636
    %v2761 = vadd.f32 %v2089, %v2638
    %v2762 = vadd.f32 %v2090, %v2642
    %v2763 = vadd.f32 %v2091, %v2644
    %v2764 = vadd.f32 %v2092, %v2646
    %v2765 = vadd.f32 %v2093, %v2648
    %v2766 = vadd.f32 %v2094, %v2652
    %v2767 = vadd.f32 %v2095, %v2654
    %v2768 = vadd.f32 %v2096, %v2656
    %v2769 = vadd.f32 %v2097, %v2658
    %v2770 = vadd.f32 %v2098, %v2662
    %v2771 = vadd.f32 %v2099, %v2664
    %v2772 = vadd.f32 %v2100, %v2666
    %v2773 = vadd.f32 %v2101, %v2668
    %v2774 = vadd.f32 %v2102, %v2672
    %v2775 = vadd.f32 %v2103, %v2674
    %v2776 = vadd.f32 %v2104, %v2676
    %v2777 = vadd.f32 %v2105, %v2678
    %v2778 = vadd.f32 %v2106, %v2682
    %v2779 = vadd.f32 %v2107, %v2684
    %v2780 = vadd.f32 %v2108, %v2686
    %v2781 = vadd.f32 %v2109, %v2688
    %v2782 = vadd.f32 %v2110, %v2692
    %v2783 = vadd.f32 %v2111, %v2694
    %v2784 = vadd.f32 %v2112, %v2696
    %v2785 = vadd.f32 %v2113, %v2698
    %v2786 = vadd.f32 %v2114, %v2702
    %v2787 = vadd.f32 %v2115, %v2704
    %v2788 = vadd.f32 %v2116, %v2706
    %v2789 = vadd.f32 %v2117, %v2708
    %v2790 = vadd.f32 %v2118, %v2712
    %v2791 = vadd.f32 %v2119, %v2714
    %v2792 = vadd.f32 %v2120, %v2716
    %v2793 = vadd.f32 %v2121, %v2718
    %v2794 = vadd.f32 %v2122, %v2722
    %v2795 = vadd.f32 %v2123, %v2724
    %v2796 = vadd.f32 %v2124, %v2726
    %v2797 = vadd.f32 %v2125, %v2728
    %v2798 = vadd.f32 %v2126, %v2732
    %v2799 = vadd.f32 %v2127, %v2734
    %v2800 = vadd.f32 %v2128, %v2736
    %v2801 = vadd.f32 %v2129, %v2738
    %v2802 = vadd.f32 %v2130, %v2742
    %v2803 = vadd.f32 %v2131, %v2744
    %v2804 = vadd.f32 %v2132, %v2746
    %v2805 = vadd.f32 %v2133, %v2748
    %s2806 = scalar_lea.vmem [#allocation2], 896
    %v2807 = vld [vmem:[%s2806] sm:$0xff]
    %v2808 = vld [vmem:[%s2806 + $0x8] sm:$0xff]
    %v2809 = vld [vmem:[%s2806 + $0x10] sm:$0xff]
    %v2810 = vld [vmem:[%s2806 + $0x18] sm:$0xff]
    %v2811 = vld [vmem:[%s2806 + $0x20] sm:$0xff]
    %v2812 = vld [vmem:[%s2806 + $0x28] sm:$0xff]
    %v2813 = vld [vmem:[%s2806 + $0x30] sm:$0xff]
    %v2814 = vld [vmem:[%s2806 + $0x38] sm:$0xff]
    %v2815 = vld [vmem:[%s2806 + $0x40] sm:$0xff]
    %v2816 = vld [vmem:[%s2806 + $0x48] sm:$0xff]
    %v2817 = vld [vmem:[%s2806 + $0x50] sm:$0xff]
    %v2818 = vld [vmem:[%s2806 + $0x58] sm:$0xff]
    %v2819 = vld [vmem:[%s2806 + $0x60] sm:$0xff]
    %v2820 = vld [vmem:[%s2806 + $0x68] sm:$0xff]
    %v2821 = vld [vmem:[%s2806 + $0x70] sm:$0xff]
    %v2822 = vld [vmem:[%s2806 + $0x78] sm:$0xff]
    %v2823 = vld [vmem:[%s2806 + $0x80] sm:$0xff]
    %v2824 = vld [vmem:[%s2806 + $0x88] sm:$0xff]
    %v2825 = vld [vmem:[%s2806 + $0x90] sm:$0xff]
    %v2826 = vld [vmem:[%s2806 + $0x98] sm:$0xff]
    %v2827 = vld [vmem:[%s2806 + $0xa0] sm:$0xff]
    %v2828 = vld [vmem:[%s2806 + $0xa8] sm:$0xff]
    %v2829 = vld [vmem:[%s2806 + $0xb0] sm:$0xff]
    %v2830 = vld [vmem:[%s2806 + $0xb8] sm:$0xff]
    %v2831 = vld [vmem:[%s2806 + $0xc0] sm:$0xff]
    %v2832 = vld [vmem:[%s2806 + $0xc8] sm:$0xff]
    %v2833 = vld [vmem:[%s2806 + $0xd0] sm:$0xff]
    %v2834 = vld [vmem:[%s2806 + $0xd8] sm:$0xff]
    %v2863 = vunpack.c.l.b16 %v2807
    %v2864 = vunpack.c.h.b16 %v2807
    %v2865 = vunpack.c.l.b16 %v2808
    %v2866 = vunpack.c.h.b16 %v2808
    %v2867 = vunpack.c.l.b16 %v2809
    %v2868 = vunpack.c.h.b16 %v2809
    %v2869 = vunpack.c.l.b16 %v2810
    %v2870 = vunpack.c.h.b16 %v2810
    %v2871 = vunpack.c.l.b16 %v2811
    %v2872 = vunpack.c.h.b16 %v2811
    %v2873 = vunpack.c.l.b16 %v2812
    %v2874 = vunpack.c.h.b16 %v2812
    %v2875 = vunpack.c.l.b16 %v2813
    %v2876 = vunpack.c.h.b16 %v2813
    %v2877 = vunpack.c.l.b16 %v2814
    %v2878 = vunpack.c.h.b16 %v2814
    %v2879 = vunpack.c.l.b16 %v2815
    %v2880 = vunpack.c.h.b16 %v2815
    %v2881 = vunpack.c.l.b16 %v2816
    %v2882 = vunpack.c.h.b16 %v2816
    %v2883 = vunpack.c.l.b16 %v2817
    %v2884 = vunpack.c.h.b16 %v2817
    %v2885 = vunpack.c.l.b16 %v2818
    %v2886 = vunpack.c.h.b16 %v2818
    %v2887 = vunpack.c.l.b16 %v2819
    %v2888 = vunpack.c.h.b16 %v2819
    %v2889 = vunpack.c.l.b16 %v2820
    %v2890 = vunpack.c.h.b16 %v2820
    %v2891 = vunpack.c.l.b16 %v2821
    %v2892 = vunpack.c.h.b16 %v2821
    %v2893 = vunpack.c.l.b16 %v2822
    %v2894 = vunpack.c.h.b16 %v2822
    %v2895 = vunpack.c.l.b16 %v2823
    %v2896 = vunpack.c.h.b16 %v2823
    %v2897 = vunpack.c.l.b16 %v2824
    %v2898 = vunpack.c.h.b16 %v2824
    %v2899 = vunpack.c.l.b16 %v2825
    %v2900 = vunpack.c.h.b16 %v2825
    %v2901 = vunpack.c.l.b16 %v2826
    %v2902 = vunpack.c.h.b16 %v2826
    %v2903 = vunpack.c.l.b16 %v2827
    %v2904 = vunpack.c.h.b16 %v2827
    %v2905 = vunpack.c.l.b16 %v2828
    %v2906 = vunpack.c.h.b16 %v2828
    %v2907 = vunpack.c.l.b16 %v2829
    %v2908 = vunpack.c.h.b16 %v2829
    %v2909 = vunpack.c.l.b16 %v2830
    %v2910 = vunpack.c.h.b16 %v2830
    %v2911 = vunpack.c.l.b16 %v2831
    %v2912 = vunpack.c.h.b16 %v2831
    %v2913 = vunpack.c.l.b16 %v2832
    %v2914 = vunpack.c.h.b16 %v2832
    %v2915 = vunpack.c.l.b16 %v2833
    %v2916 = vunpack.c.h.b16 %v2833
    %v2917 = vunpack.c.l.b16 %v2834
    %v2918 = vunpack.c.h.b16 %v2834
    %v2919 = vpack.c.b16 %v2865, %v2863
    %v2920 = vpack.c.b16 %v2866, %v2864
    %v2921 = vpack.c.b16 %v2869, %v2867
    %v2922 = vpack.c.b16 %v2870, %v2868
    %v2923 = vpack.c.b16 %v2873, %v2871
    %v2924 = vpack.c.b16 %v2874, %v2872
    %v2925 = vpack.c.b16 %v2877, %v2875
    %v2926 = vpack.c.b16 %v2878, %v2876
    %v2927 = vpack.c.b16 %v2881, %v2879
    %v2928 = vpack.c.b16 %v2882, %v2880
    %v2929 = vpack.c.b16 %v2885, %v2883
    %v2930 = vpack.c.b16 %v2886, %v2884
    %v2931 = vpack.c.b16 %v2889, %v2887
    %v2932 = vpack.c.b16 %v2890, %v2888
    %v2933 = vpack.c.b16 %v2893, %v2891
    %v2934 = vpack.c.b16 %v2894, %v2892
    %v2935 = vpack.c.b16 %v2897, %v2895
    %v2936 = vpack.c.b16 %v2898, %v2896
    %v2937 = vpack.c.b16 %v2901, %v2899
    %v2938 = vpack.c.b16 %v2902, %v2900
    %v2939 = vpack.c.b16 %v2905, %v2903
    %v2940 = vpack.c.b16 %v2906, %v2904
    %v2941 = vpack.c.b16 %v2909, %v2907
    %v2942 = vpack.c.b16 %v2910, %v2908
    %v2943 = vpack.c.b16 %v2913, %v2911
    %v2944 = vpack.c.b16 %v2914, %v2912
    %v2945 = vpack.c.b16 %v2917, %v2915
    %v2946 = vpack.c.b16 %v2918, %v2916
    %2975 = vmatprep.subr.bf16.mxu0 0
    %2976 = vmatpush1.bf16.msra.mxu0 %v367
    %2977 = vmatprep.subr.bf16.mxu0 0
    %2978 = vmatpush1.bf16.msra.mxu0 %v368
    %2979 = vmatprep.subr.bf16.mxu0 0
    %2980 = vmatpush1.bf16.msra.mxu0 %v369
    %2981 = vmatprep.subr.bf16.mxu0 0
    %2982 = vmatpush1.bf16.msra.mxu0 %v370
    %2983 = vmatprep.subr.bf16.mxu0 0
    %2984 = vmatpush1.bf16.msra.mxu0 %v371
    %2985 = vmatprep.subr.bf16.mxu0 0
    %2986 = vmatpush1.bf16.msra.mxu0 %v372
    %2987 = vmatprep.subr.bf16.mxu0 0
    %2988 = vmatpush1.bf16.msra.mxu0 %v373
    %2989 = vmatprep.subr.bf16.mxu0 0
    %2990 = vmatpush1.bf16.msra.mxu0 %v374
    %2991 = vmatprep.subr.bf16.mxu0 0
    %2992 = vmatpush1.bf16.msra.mxu0 %v375
    %2993 = vmatprep.subr.bf16.mxu0 0
    %2994 = vmatpush1.bf16.msra.mxu0 %v376
    %2995 = vmatprep.subr.bf16.mxu0 0
    %2996 = vmatpush1.bf16.msra.mxu0 %v377
    %2997 = vmatprep.subr.bf16.mxu0 0
    %2998 = vmatpush1.bf16.msra.mxu0 %v378
    %2999 = vmatprep.subr.bf16.mxu0 0
    %3000 = vmatpush1.bf16.msra.mxu0 %v379
    %3001 = vmatprep.subr.bf16.mxu0 0
    %3002 = vmatpush1.bf16.msra.mxu0 %v380
    %3003 = vmatprep.subr.bf16.mxu0 0
    %3004 = vmatpush1.bf16.msra.mxu0 %v381
    %3005 = vmatprep.subr.bf16.mxu0 0
    %3006 = vmatpush1.bf16.msra.mxu0 %v382
    %3007 = vmatprep.mubr.bf16.mxu0 %v2920
    %3008 = vmatmul.mubr.bf16.gmra.mrb[0].mxu0 %v2919
    %v3009 = vpop.f32.mrb[0].mxu0
    %v3010 = vadd.f32 0.0, %v3009
    %v3011 = vpop.f32.mrb[0].mxu0
    %v3012 = vpop.f32.mrb[0].mxu0
    %v3013 = vadd.f32 0.0, %v3012
    %v3014 = vpop.f32.mrb[0].mxu0
    %3015 = vmatprep.mubr.bf16.mxu0 %v2922
    %3016 = vmatmul.mubr.bf16.gmra.mrb[0].mxu0 %v2921
    %v3017 = vpop.f32.mrb[0].mxu0
    %v3018 = vadd.f32 0.0, %v3017
    %v3019 = vpop.f32.mrb[0].mxu0
    %v3020 = vpop.f32.mrb[0].mxu0
    %v3021 = vadd.f32 0.0, %v3020
    %v3022 = vpop.f32.mrb[0].mxu0
    %3023 = vmatprep.mubr.bf16.mxu0 %v2924
    %3024 = vmatmul.mubr.bf16.gmra.mrb[0].mxu0 %v2923
    %v3025 = vpop.f32.mrb[0].mxu0
    %v3026 = vadd.f32 0.0, %v3025
    %v3027 = vpop.f32.mrb[0].mxu0
    %v3028 = vpop.f32.mrb[0].mxu0
    %v3029 = vadd.f32 0.0, %v3028
    %v3030 = vpop.f32.mrb[0].mxu0
    %3031 = vmatprep.mubr.bf16.mxu0 %v2926
    %3032 = vmatmul.mubr.bf16.gmra.mrb[0].mxu0 %v2925
    %v3033 = vpop.f32.mrb[0].mxu0
    %v3034 = vadd.f32 0.0, %v3033
    %v3035 = vpop.f32.mrb[0].mxu0
    %v3036 = vpop.f32.mrb[0].mxu0
    %v3037 = vadd.f32 0.0, %v3036
    %v3038 = vpop.f32.mrb[0].mxu0
    %3039 = vmatprep.mubr.bf16.mxu0 %v2928
    %3040 = vmatmul.mubr.bf16.gmra.mrb[0].mxu0 %v2927
    %v3041 = vpop.f32.mrb[0].mxu0
    %v3042 = vadd.f32 0.0, %v3041
    %v3043 = vpop.f32.mrb[0].mxu0
    %v3044 = vpop.f32.mrb[0].mxu0
    %v3045 = vadd.f32 0.0, %v3044
    %v3046 = vpop.f32.mrb[0].mxu0
    %3047 = vmatprep.mubr.bf16.mxu0 %v2930
    %3048 = vmatmul.mubr.bf16.gmra.mrb[0].mxu0 %v2929
    %v3049 = vpop.f32.mrb[0].mxu0
    %v3050 = vadd.f32 0.0, %v3049
    %v3051 = vpop.f32.mrb[0].mxu0
    %v3052 = vpop.f32.mrb[0].mxu0
    %v3053 = vadd.f32 0.0, %v3052
    %v3054 = vpop.f32.mrb[0].mxu0
    %3055 = vmatprep.mubr.bf16.mxu0 %v2932
    %3056 = vmatmul.mubr.bf16.gmra.mrb[0].mxu0 %v2931
    %v3057 = vpop.f32.mrb[0].mxu0
    %v3058 = vadd.f32 0.0, %v3057
    %v3059 = vpop.f32.mrb[0].mxu0
    %v3060 = vpop.f32.mrb[0].mxu0
    %v3061 = vadd.f32 0.0, %v3060
    %v3062 = vpop.f32.mrb[0].mxu0
    %3063 = vmatprep.mubr.bf16.mxu0 %v2934
    %3064 = vmatmul.mubr.bf16.gmra.mrb[0].mxu0 %v2933
    %v3065 = vpop.f32.mrb[0].mxu0
    %v3066 = vadd.f32 0.0, %v3065
    %v3067 = vpop.f32.mrb[0].mxu0
    %v3068 = vpop.f32.mrb[0].mxu0
    %v3069 = vadd.f32 0.0, %v3068
    %v3070 = vpop.f32.mrb[0].mxu0
    %3071 = vmatprep.mubr.bf16.mxu0 %v2936
    %3072 = vmatmul.mubr.bf16.gmra.mrb[0].mxu0 %v2935
    %v3073 = vpop.f32.mrb[0].mxu0
    %v3074 = vadd.f32 0.0, %v3073
    %v3075 = vpop.f32.mrb[0].mxu0
    %v3076 = vpop.f32.mrb[0].mxu0
    %v3077 = vadd.f32 0.0, %v3076
    %v3078 = vpop.f32.mrb[0].mxu0
    %3079 = vmatprep.mubr.bf16.mxu0 %v2938
    %3080 = vmatmul.mubr.bf16.gmra.mrb[0].mxu0 %v2937
    %v3081 = vpop.f32.mrb[0].mxu0
    %v3082 = vadd.f32 0.0, %v3081
    %v3083 = vpop.f32.mrb[0].mxu0
    %v3084 = vpop.f32.mrb[0].mxu0
    %v3085 = vadd.f32 0.0, %v3084
    %v3086 = vpop.f32.mrb[0].mxu0
    %3087 = vmatprep.mubr.bf16.mxu0 %v2940
    %3088 = vmatmul.mubr.bf16.gmra.mrb[0].mxu0 %v2939
    %v3089 = vpop.f32.mrb[0].mxu0
    %v3090 = vadd.f32 0.0, %v3089
    %v3091 = vpop.f32.mrb[0].mxu0
    %v3092 = vpop.f32.mrb[0].mxu0
    %v3093 = vadd.f32 0.0, %v3092
    %v3094 = vpop.f32.mrb[0].mxu0
    %3095 = vmatprep.mubr.bf16.mxu0 %v2942
    %3096 = vmatmul.mubr.bf16.gmra.mrb[0].mxu0 %v2941
    %v3097 = vpop.f32.mrb[0].mxu0
    %v3098 = vadd.f32 0.0, %v3097
    %v3099 = vpop.f32.mrb[0].mxu0
    %v3100 = vpop.f32.mrb[0].mxu0
    %v3101 = vadd.f32 0.0, %v3100
    %v3102 = vpop.f32.mrb[0].mxu0
    %3103 = vmatprep.mubr.bf16.mxu0 %v2944
    %3104 = vmatmul.mubr.bf16.gmra.mrb[0].mxu0 %v2943
    %v3105 = vpop.f32.mrb[0].mxu0
    %v3106 = vadd.f32 0.0, %v3105
    %v3107 = vpop.f32.mrb[0].mxu0
    %v3108 = vpop.f32.mrb[0].mxu0
    %v3109 = vadd.f32 0.0, %v3108
    %v3110 = vpop.f32.mrb[0].mxu0
    %3111 = vmatprep.mubr.bf16.mxu0 %v2946
    %3112 = vmatmul.mubr.bf16.gmra.mrb[0].mxu0 %v2945
    %v3113 = vpop.f32.mrb[0].mxu0
    %v3114 = vadd.f32 0.0, %v3113
    %v3115 = vpop.f32.mrb[0].mxu0
    %v3116 = vpop.f32.mrb[0].mxu0
    %v3117 = vadd.f32 0.0, %v3116
    %v3118 = vpop.f32.mrb[0].mxu0
    %3119 = vdwg.mxu0
    %v3120 = vpack.c.bf16 %v3013, %v3010
    %v3121 = vpack.c.bf16 %v3021, %v3018
    %v3122 = vpack.c.bf16 %v3029, %v3026
    %v3123 = vpack.c.bf16 %v3037, %v3034
    %v3124 = vpack.c.bf16 %v3045, %v3042
    %v3125 = vpack.c.bf16 %v3053, %v3050
    %v3126 = vpack.c.bf16 %v3061, %v3058
    %v3127 = vpack.c.bf16 %v3069, %v3066
    %v3128 = vpack.c.bf16 %v3077, %v3074
    %v3129 = vpack.c.bf16 %v3085, %v3082
    %v3130 = vpack.c.bf16 %v3093, %v3090
    %v3131 = vpack.c.bf16 %v3101, %v3098
    %v3132 = vpack.c.bf16 %v3109, %v3106
    %v3133 = vpack.c.bf16 %v3117, %v3114
    %s3134 = scalar_lea.vmem [#allocation4], 384
    %v3135 = vld [vmem:[%s3134] sm:$0xff]
    %v3136 = vld [vmem:[%s3134 + $0x8] sm:$0xff]
    %v3137 = vld [vmem:[%s3134 + $0x10] sm:$0xff]
    %v3138 = vld [vmem:[%s3134 + $0x18] sm:$0xff]
    %v3139 = vld [vmem:[%s3134 + $0x20] sm:$0xff]
    %v3140 = vld [vmem:[%s3134 + $0x28] sm:$0xff]
    %v3141 = vld [vmem:[%s3134 + $0x30] sm:$0xff]
    %v3142 = vld [vmem:[%s3134 + $0x38] sm:$0xff]
    %v3143 = vld [vmem:[%s3134 + $0x40] sm:$0xff]
    %v3144 = vld [vmem:[%s3134 + $0x48] sm:$0xff]
    %v3145 = vld [vmem:[%s3134 + $0x50] sm:$0xff]
    %v3146 = vld [vmem:[%s3134 + $0x58] sm:$0xff]
    %v3159 = vunpack.c.l.b16 %v3135
    %v3160 = vunpack.c.h.b16 %v3135
    %v3161 = vunpack.c.l.b16 %v3136
    %v3162 = vunpack.c.h.b16 %v3136
    %v3163 = vunpack.c.l.b16 %v3137
    %v3164 = vunpack.c.h.b16 %v3137
    %v3165 = vunpack.c.l.b16 %v3138
    %v3166 = vunpack.c.h.b16 %v3138
    %v3167 = vunpack.c.l.b16 %v3139
    %v3168 = vunpack.c.h.b16 %v3139
    %v3169 = vunpack.c.l.b16 %v3140
    %v3170 = vunpack.c.h.b16 %v3140
    %v3171 = vunpack.c.l.b16 %v3141
    %v3172 = vunpack.c.h.b16 %v3141
    %v3173 = vunpack.c.l.b16 %v3142
    %v3174 = vunpack.c.h.b16 %v3142
    %v3175 = vunpack.c.l.b16 %v3143
    %v3176 = vunpack.c.h.b16 %v3143
    %v3177 = vunpack.c.l.b16 %v3144
    %v3178 = vunpack.c.h.b16 %v3144
    %v3179 = vunpack.c.l.b16 %v3145
    %v3180 = vunpack.c.h.b16 %v3145
    %v3181 = vunpack.c.l.b16 %v3146
    %v3182 = vunpack.c.h.b16 %v3146
    %v3183 = vpack.c.b16 %v3161, %v3159
    %v3184 = vpack.c.b16 %v3162, %v3160
    %v3185 = vpack.c.b16 %v3165, %v3163
    %v3186 = vpack.c.b16 %v3166, %v3164
    %v3187 = vpack.c.b16 %v3169, %v3167
    %v3188 = vpack.c.b16 %v3170, %v3168
    %v3189 = vpack.c.b16 %v3173, %v3171
    %v3190 = vpack.c.b16 %v3174, %v3172
    %v3191 = vpack.c.b16 %v3177, %v3175
    %v3192 = vpack.c.b16 %v3178, %v3176
    %v3193 = vpack.c.b16 %v3181, %v3179
    %v3194 = vpack.c.b16 %v3182, %v3180
    %v3208 = vsel %vm971, %v3120, 0
    %v3211 = vsel %vm971, %v3121, 0
    %v3214 = vsel %vm971, %v3122, 0
    %v3217 = vsel %vm971, %v3123, 0
    %v3220 = vsel %vm971, %v3124, 0
    %v3223 = vsel %vm971, %v3125, 0
    %v3226 = vsel %vm971, %v3126, 0
    %v3229 = vsel %vm971, %v3127, 0
    %v3232 = vsel %vm971, %v3128, 0
    %v3235 = vsel %vm971, %v3129, 0
    %v3238 = vsel %vm971, %v3130, 0
    %v3241 = vsel %vm971, %v3131, 0
    %v3244 = vsel %vm971, %v3132, 0
    %v3247 = vsel %vm971, %v3133, 0
    %3249 = vmatprep.subr.bf16.mxu0 %v3184
    %3250 = vmatpush1.bf16.msra.mxu0 %v3183
    %3251 = vmatprep.subr.bf16.mxu0 %v3186
    %3252 = vmatpush1.bf16.msra.mxu0 %v3185
    %3253 = vmatprep.subr.bf16.mxu0 %v3188
    %3254 = vmatpush1.bf16.msra.mxu0 %v3187
    %3255 = vmatprep.subr.bf16.mxu0 %v3190
    %3256 = vmatpush1.bf16.msra.mxu0 %v3189
    %3257 = vmatprep.subr.bf16.mxu0 %v3192
    %3258 = vmatpush1.bf16.msra.mxu0 %v3191
    %3259 = vmatprep.subr.bf16.mxu0 %v3194
    %3260 = vmatpush1.bf16.msra.mxu0 %v3193
    %3261 = vmatprep.subr.bf16.mxu0 0
    %3262 = vmatpush1.bf16.msra.mxu0 0
    %3263 = vmatprep.subr.bf16.mxu0 0
    %3264 = vmatpush1.bf16.msra.mxu0 0
    %3265 = vmatprep.subr.bf16.mxu0 0
    %3266 = vmatpush1.bf16.msra.mxu0 0
    %3267 = vmatprep.subr.bf16.mxu0 0
    %3268 = vmatpush1.bf16.msra.mxu0 0
    %3269 = vmatprep.subr.bf16.mxu0 0
    %3270 = vmatpush1.bf16.msra.mxu0 0
    %3271 = vmatprep.subr.bf16.mxu0 0
    %3272 = vmatpush1.bf16.msra.mxu0 0
    %3273 = vmatprep.subr.bf16.mxu0 0
    %3274 = vmatpush1.bf16.msra.mxu0 0
    %3275 = vmatprep.subr.bf16.mxu0 0
    %3276 = vmatpush1.bf16.msra.mxu0 0
    %3277 = vmatprep.subr.bf16.mxu0 0
    %3278 = vmatpush1.bf16.msra.mxu0 0
    %3279 = vmatprep.subr.bf16.mxu0 0
    %3280 = vmatpush1.bf16.msra.mxu0 0
    %3281 = vmatprep.mubr.bf16.mxu0 0
    %3282 = vmatmul.mubr.bf16.gmra.mrb[0].mxu0 %v3208
    %v3283 = vpop.f32.mrb[0].mxu0
    %v3284 = vadd.f32 0.0, %v3283
    %v3285 = vpop.f32.mrb[0].mxu0
    %v3286 = vadd.f32 0.0, %v3285
    %v3287 = vpop.f32.mrb[0].mxu0
    %v3288 = vadd.f32 0.0, %v3287
    %v3289 = vpop.f32.mrb[0].mxu0
    %v3290 = vadd.f32 0.0, %v3289
    %3291 = vmatprep.mubr.bf16.mxu0 0
    %3292 = vmatmul.mubr.bf16.gmra.mrb[0].mxu0 %v3211
    %v3293 = vpop.f32.mrb[0].mxu0
    %v3294 = vadd.f32 0.0, %v3293
    %v3295 = vpop.f32.mrb[0].mxu0
    %v3296 = vadd.f32 0.0, %v3295
    %v3297 = vpop.f32.mrb[0].mxu0
    %v3298 = vadd.f32 0.0, %v3297
    %v3299 = vpop.f32.mrb[0].mxu0
    %v3300 = vadd.f32 0.0, %v3299
    %3301 = vmatprep.mubr.bf16.mxu0 0
    %3302 = vmatmul.mubr.bf16.gmra.mrb[0].mxu0 %v3214
    %v3303 = vpop.f32.mrb[0].mxu0
    %v3304 = vadd.f32 0.0, %v3303
    %v3305 = vpop.f32.mrb[0].mxu0
    %v3306 = vadd.f32 0.0, %v3305
    %v3307 = vpop.f32.mrb[0].mxu0
    %v3308 = vadd.f32 0.0, %v3307
    %v3309 = vpop.f32.mrb[0].mxu0
    %v3310 = vadd.f32 0.0, %v3309
    %3311 = vmatprep.mubr.bf16.mxu0 0
    %3312 = vmatmul.mubr.bf16.gmra.mrb[0].mxu0 %v3217
    %v3313 = vpop.f32.mrb[0].mxu0
    %v3314 = vadd.f32 0.0, %v3313
    %v3315 = vpop.f32.mrb[0].mxu0
    %v3316 = vadd.f32 0.0, %v3315
    %v3317 = vpop.f32.mrb[0].mxu0
    %v3318 = vadd.f32 0.0, %v3317
    %v3319 = vpop.f32.mrb[0].mxu0
    %v3320 = vadd.f32 0.0, %v3319
    %3321 = vmatprep.mubr.bf16.mxu0 0
    %3322 = vmatmul.mubr.bf16.gmra.mrb[0].mxu0 %v3220
    %v3323 = vpop.f32.mrb[0].mxu0
    %v3324 = vadd.f32 0.0, %v3323
    %v3325 = vpop.f32.mrb[0].mxu0
    %v3326 = vadd.f32 0.0, %v3325
    %v3327 = vpop.f32.mrb[0].mxu0
    %v3328 = vadd.f32 0.0, %v3327
    %v3329 = vpop.f32.mrb[0].mxu0
    %v3330 = vadd.f32 0.0, %v3329
    %3331 = vmatprep.mubr.bf16.mxu0 0
    %3332 = vmatmul.mubr.bf16.gmra.mrb[0].mxu0 %v3223
    %v3333 = vpop.f32.mrb[0].mxu0
    %v3334 = vadd.f32 0.0, %v3333
    %v3335 = vpop.f32.mrb[0].mxu0
    %v3336 = vadd.f32 0.0, %v3335
    %v3337 = vpop.f32.mrb[0].mxu0
    %v3338 = vadd.f32 0.0, %v3337
    %v3339 = vpop.f32.mrb[0].mxu0
    %v3340 = vadd.f32 0.0, %v3339
    %3341 = vmatprep.mubr.bf16.mxu0 0
    %3342 = vmatmul.mubr.bf16.gmra.mrb[0].mxu0 %v3226
    %v3343 = vpop.f32.mrb[0].mxu0
    %v3344 = vadd.f32 0.0, %v3343
    %v3345 = vpop.f32.mrb[0].mxu0
    %v3346 = vadd.f32 0.0, %v3345
    %v3347 = vpop.f32.mrb[0].mxu0
    %v3348 = vadd.f32 0.0, %v3347
    %v3349 = vpop.f32.mrb[0].mxu0
    %v3350 = vadd.f32 0.0, %v3349
    %3351 = vmatprep.mubr.bf16.mxu0 0
    %3352 = vmatmul.mubr.bf16.gmra.mrb[0].mxu0 %v3229
    %v3353 = vpop.f32.mrb[0].mxu0
    %v3354 = vadd.f32 0.0, %v3353
    %v3355 = vpop.f32.mrb[0].mxu0
    %v3356 = vadd.f32 0.0, %v3355
    %v3357 = vpop.f32.mrb[0].mxu0
    %v3358 = vadd.f32 0.0, %v3357
    %v3359 = vpop.f32.mrb[0].mxu0
    %v3360 = vadd.f32 0.0, %v3359
    %3361 = vmatprep.mubr.bf16.mxu0 0
    %3362 = vmatmul.mubr.bf16.gmra.mrb[0].mxu0 %v3232
    %v3363 = vpop.f32.mrb[0].mxu0
    %v3364 = vadd.f32 0.0, %v3363
    %v3365 = vpop.f32.mrb[0].mxu0
    %v3366 = vadd.f32 0.0, %v3365
    %v3367 = vpop.f32.mrb[0].mxu0
    %v3368 = vadd.f32 0.0, %v3367
    %v3369 = vpop.f32.mrb[0].mxu0
    %v3370 = vadd.f32 0.0, %v3369
    %3371 = vmatprep.mubr.bf16.mxu0 0
    %3372 = vmatmul.mubr.bf16.gmra.mrb[0].mxu0 %v3235
    %v3373 = vpop.f32.mrb[0].mxu0
    %v3374 = vadd.f32 0.0, %v3373
    %v3375 = vpop.f32.mrb[0].mxu0
    %v3376 = vadd.f32 0.0, %v3375
    %v3377 = vpop.f32.mrb[0].mxu0
    %v3378 = vadd.f32 0.0, %v3377
    %v3379 = vpop.f32.mrb[0].mxu0
    %v3380 = vadd.f32 0.0, %v3379
    %3381 = vmatprep.mubr.bf16.mxu0 0
    %3382 = vmatmul.mubr.bf16.gmra.mrb[0].mxu0 %v3238
    %v3383 = vpop.f32.mrb[0].mxu0
    %v3384 = vadd.f32 0.0, %v3383
    %v3385 = vpop.f32.mrb[0].mxu0
    %v3386 = vadd.f32 0.0, %v3385
    %v3387 = vpop.f32.mrb[0].mxu0
    %v3388 = vadd.f32 0.0, %v3387
    %v3389 = vpop.f32.mrb[0].mxu0
    %v3390 = vadd.f32 0.0, %v3389
    %3391 = vmatprep.mubr.bf16.mxu0 0
    %3392 = vmatmul.mubr.bf16.gmra.mrb[0].mxu0 %v3241
    %v3393 = vpop.f32.mrb[0].mxu0
    %v3394 = vadd.f32 0.0, %v3393
    %v3395 = vpop.f32.mrb[0].mxu0
    %v3396 = vadd.f32 0.0, %v3395
    %v3397 = vpop.f32.mrb[0].mxu0
    %v3398 = vadd.f32 0.0, %v3397
    %v3399 = vpop.f32.mrb[0].mxu0
    %v3400 = vadd.f32 0.0, %v3399
    %3401 = vmatprep.mubr.bf16.mxu0 0
    %3402 = vmatmul.mubr.bf16.gmra.mrb[0].mxu0 %v3244
    %v3403 = vpop.f32.mrb[0].mxu0
    %v3404 = vadd.f32 0.0, %v3403
    %v3405 = vpop.f32.mrb[0].mxu0
    %v3406 = vadd.f32 0.0, %v3405
    %v3407 = vpop.f32.mrb[0].mxu0
    %v3408 = vadd.f32 0.0, %v3407
    %v3409 = vpop.f32.mrb[0].mxu0
    %v3410 = vadd.f32 0.0, %v3409
    %3411 = vmatprep.mubr.bf16.mxu0 0
    %3412 = vmatmul.mubr.bf16.gmra.mrb[0].mxu0 %v3247
    %v3413 = vpop.f32.mrb[0].mxu0
    %v3414 = vadd.f32 0.0, %v3413
    %v3415 = vpop.f32.mrb[0].mxu0
    %v3416 = vadd.f32 0.0, %v3415
    %v3417 = vpop.f32.mrb[0].mxu0
    %v3418 = vadd.f32 0.0, %v3417
    %v3419 = vpop.f32.mrb[0].mxu0
    %v3420 = vadd.f32 0.0, %v3419
    %3421 = vdwg.mxu0
    %v3422 = vadd.f32 %v2750, %v3284
    %v3423 = vadd.f32 %v2751, %v3286
    %v3424 = vadd.f32 %v2752, %v3288
    %v3425 = vadd.f32 %v2753, %v3290
    %v3426 = vadd.f32 %v2754, %v3294
    %v3427 = vadd.f32 %v2755, %v3296
    %v3428 = vadd.f32 %v2756, %v3298
    %v3429 = vadd.f32 %v2757, %v3300
    %v3430 = vadd.f32 %v2758, %v3304
    %v3431 = vadd.f32 %v2759, %v3306
    %v3432 = vadd.f32 %v2760, %v3308
    %v3433 = vadd.f32 %v2761, %v3310
    %v3434 = vadd.f32 %v2762, %v3314
    %v3435 = vadd.f32 %v2763, %v3316
    %v3436 = vadd.f32 %v2764, %v3318
    %v3437 = vadd.f32 %v2765, %v3320
    %v3438 = vadd.f32 %v2766, %v3324
    %v3439 = vadd.f32 %v2767, %v3326
    %v3440 = vadd.f32 %v2768, %v3328
    %v3441 = vadd.f32 %v2769, %v3330
    %v3442 = vadd.f32 %v2770, %v3334
    %v3443 = vadd.f32 %v2771, %v3336
    %v3444 = vadd.f32 %v2772, %v3338
    %v3445 = vadd.f32 %v2773, %v3340
    %v3446 = vadd.f32 %v2774, %v3344
    %v3447 = vadd.f32 %v2775, %v3346
    %v3448 = vadd.f32 %v2776, %v3348
    %v3449 = vadd.f32 %v2777, %v3350
    %v3450 = vadd.f32 %v2778, %v3354
    %v3451 = vadd.f32 %v2779, %v3356
    %v3452 = vadd.f32 %v2780, %v3358
    %v3453 = vadd.f32 %v2781, %v3360
    %v3454 = vadd.f32 %v2782, %v3364
    %v3455 = vadd.f32 %v2783, %v3366
    %v3456 = vadd.f32 %v2784, %v3368
    %v3457 = vadd.f32 %v2785, %v3370
    %v3458 = vadd.f32 %v2786, %v3374
    %v3459 = vadd.f32 %v2787, %v3376
    %v3460 = vadd.f32 %v2788, %v3378
    %v3461 = vadd.f32 %v2789, %v3380
    %v3462 = vadd.f32 %v2790, %v3384
    %v3463 = vadd.f32 %v2791, %v3386
    %v3464 = vadd.f32 %v2792, %v3388
    %v3465 = vadd.f32 %v2793, %v3390
    %v3466 = vadd.f32 %v2794, %v3394
    %v3467 = vadd.f32 %v2795, %v3396
    %v3468 = vadd.f32 %v2796, %v3398
    %v3469 = vadd.f32 %v2797, %v3400
    %v3470 = vadd.f32 %v2798, %v3404
    %v3471 = vadd.f32 %v2799, %v3406
    %v3472 = vadd.f32 %v2800, %v3408
    %v3473 = vadd.f32 %v2801, %v3410
    %v3474 = vadd.f32 %v2802, %v3414
    %v3475 = vadd.f32 %v2803, %v3416
    %v3476 = vadd.f32 %v2804, %v3418
    %v3477 = vadd.f32 %v2805, %v3420
    %v3478 = vmax.f32 %v3422, %v3450
    %v3479 = vmax.f32 %v3423, %v3451
    %v3480 = vmax.f32 %v3424, %v3452
    %v3481 = vmax.f32 %v3425, %v3453
    %v3482 = vmax.f32 %v3426, %v3454
    %v3483 = vmax.f32 %v3427, %v3455
    %v3484 = vmax.f32 %v3428, %v3456
    %v3485 = vmax.f32 %v3429, %v3457
    %v3486 = vmax.f32 %v3430, %v3458
    %v3487 = vmax.f32 %v3431, %v3459
    %v3488 = vmax.f32 %v3432, %v3460
    %v3489 = vmax.f32 %v3433, %v3461
    %v3490 = vmax.f32 %v3434, %v3462
    %v3491 = vmax.f32 %v3435, %v3463
    %v3492 = vmax.f32 %v3436, %v3464
    %v3493 = vmax.f32 %v3437, %v3465
    %v3494 = vmax.f32 %v3438, %v3466
    %v3495 = vmax.f32 %v3439, %v3467
    %v3496 = vmax.f32 %v3440, %v3468
    %v3497 = vmax.f32 %v3441, %v3469
    %v3498 = vmax.f32 %v3442, %v3470
    %v3499 = vmax.f32 %v3443, %v3471
    %v3500 = vmax.f32 %v3444, %v3472
    %v3501 = vmax.f32 %v3445, %v3473
    %v3502 = vmax.f32 %v3446, %v3474
    %v3503 = vmax.f32 %v3447, %v3475
    %v3504 = vmax.f32 %v3448, %v3476
    %v3505 = vmax.f32 %v3449, %v3477
    %v3506 = vmax.f32 %v3478, %v3479
    %v3507 = vmax.f32 %v3480, %v3481
    %v3508 = vmax.f32 %v3482, %v3483
    %v3509 = vmax.f32 %v3484, %v3485
    %v3510 = vmax.f32 %v3486, %v3487
    %v3511 = vmax.f32 %v3488, %v3489
    %v3512 = vmax.f32 %v3490, %v3491
    %v3513 = vmax.f32 %v3492, %v3493
    %v3514 = vmax.f32 %v3494, %v3495
    %v3515 = vmax.f32 %v3496, %v3497
    %v3516 = vmax.f32 %v3498, %v3499
    %v3517 = vmax.f32 %v3500, %v3501
    %v3518 = vmax.f32 %v3502, %v3503
    %v3519 = vmax.f32 %v3504, %v3505
    %v3520 = vld [vmem:[%s3] sm:$0x1]
    %v3522 = vlaneseq
    %v3523 = vshrl.u32 %v3522, 7
    %v3524 = vsub.s32 0, %v3523
    %v3525 = vrot.slane %v3520, %v3524
    %v3527 = vadd.f32 %v3506, %v3525
    %v3528 = vadd.f32 %v3507, %v3525
    %v3529 = vadd.f32 %v3508, %v3525
    %v3530 = vadd.f32 %v3509, %v3525
    %v3531 = vadd.f32 %v3510, %v3525
    %v3532 = vadd.f32 %v3511, %v3525
    %v3533 = vadd.f32 %v3512, %v3525
    %v3534 = vadd.f32 %v3513, %v3525
    %v3535 = vadd.f32 %v3514, %v3525
    %v3536 = vadd.f32 %v3515, %v3525
    %v3537 = vadd.f32 %v3516, %v3525
    %v3538 = vadd.f32 %v3517, %v3525
    %v3539 = vadd.f32 %v3518, %v3525
    %v3540 = vadd.f32 %v3519, %v3525
    %v3541 = vmax.f32 %v3527, 0.0
    %v3542 = vmax.f32 %v3528, 0.0
    %v3543 = vmax.f32 %v3529, 0.0
    %v3544 = vmax.f32 %v3530, 0.0
    %v3545 = vmax.f32 %v3531, 0.0
    %v3546 = vmax.f32 %v3532, 0.0
    %v3547 = vmax.f32 %v3533, 0.0
    %v3548 = vmax.f32 %v3534, 0.0
    %v3549 = vmax.f32 %v3535, 0.0
    %v3550 = vmax.f32 %v3536, 0.0
    %v3551 = vmax.f32 %v3537, 0.0
    %v3552 = vmax.f32 %v3538, 0.0
    %v3553 = vmax.f32 %v3539, 0.0
    %v3554 = vmax.f32 %v3540, 0.0
    %v3555 = vpack.c.bf16 %v3542, %v3541
    %v3556 = vpack.c.bf16 %v3544, %v3543
    %v3557 = vpack.c.bf16 %v3546, %v3545
    %v3558 = vpack.c.bf16 %v3548, %v3547
    %v3559 = vpack.c.bf16 %v3550, %v3549
    %v3560 = vpack.c.bf16 %v3552, %v3551
    %v3561 = vpack.c.bf16 %v3554, %v3553
    %v3562 = vld [vmem:[#allocation6] sm:$0xf]
    %v3563 = vld [vmem:[#allocation6 + $0x4] sm:$0xf]
    %v3564 = vld [vmem:[#allocation6 + $0x8] sm:$0xf]
    %v3565 = vld [vmem:[#allocation6 + $0xc] sm:$0xf]
    %v3566 = vld [vmem:[#allocation6 + $0x10] sm:$0xf]
    %v3567 = vld [vmem:[#allocation6 + $0x14] sm:$0xf]
    %v3568 = vld [vmem:[#allocation6 + $0x18] sm:$0xf]
    %v3569 = vld [vmem:[#allocation6 + $0x1c] sm:$0xf]
    %v3570 = vld [vmem:[#allocation6 + $0x20] sm:$0xf]
    %v3571 = vld [vmem:[#allocation6 + $0x24] sm:$0xf]
    %v3582 = vunpack.c.l.b16 %v3562
    %v3583 = vunpack.c.l.b16 %v3563
    %v3584 = vunpack.c.l.b16 %v3564
    %v3585 = vunpack.c.l.b16 %v3565
    %v3586 = vunpack.c.l.b16 %v3566
    %v3587 = vunpack.c.l.b16 %v3567
    %v3588 = vunpack.c.l.b16 %v3568
    %v3589 = vunpack.c.l.b16 %v3569
    %v3590 = vunpack.c.l.b16 %v3570
    %v3591 = vunpack.c.l.b16 %v3571
    %v3592 = vpack.c.b16 %v3583, %v3582
    %v3593 = vpack.c.b16 %v3585, %v3584
    %v3594 = vpack.c.b16 %v3587, %v3586
    %v3595 = vpack.c.b16 %v3589, %v3588
    %v3596 = vpack.c.b16 %v3591, %v3590
    %vm3597 = vcmask 916480
    %v3599 = vsel %vm3597, %v3592, 0
    %v3602 = vsel %vm3597, %v3593, 0
    %v3605 = vsel %vm3597, %v3594, 0
    %v3608 = vsel %vm3597, %v3595, 0
    %v3611 = vsel %vm3597, %v3596, 0
    %3613 = vmatprep.subr.bf16.mxu0 0
    %3614 = vmatpush1.bf16.msra.mxu0 %v3555
    %3615 = vmatprep.subr.bf16.mxu0 0
    %3616 = vmatpush1.bf16.msra.mxu0 %v3556
    %3617 = vmatprep.subr.bf16.mxu0 0
    %3618 = vmatpush1.bf16.msra.mxu0 %v3557
    %3619 = vmatprep.subr.bf16.mxu0 0
    %3620 = vmatpush1.bf16.msra.mxu0 %v3558
    %3621 = vmatprep.subr.bf16.mxu0 0
    %3622 = vmatpush1.bf16.msra.mxu0 %v3559
    %3623 = vmatprep.subr.bf16.mxu0 0
    %3624 = vmatpush1.bf16.msra.mxu0 %v3560
    %3625 = vmatprep.subr.bf16.mxu0 0
    %3626 = vmatpush1.bf16.msra.mxu0 %v3561
    %3627 = vmatprep.subr.bf16.mxu0 0
    %3628 = vmatpush1.bf16.msra.mxu0 0
    %3629 = vmatprep.subr.bf16.mxu0 0
    %3630 = vmatpush1.bf16.msra.mxu0 0
    %3631 = vmatprep.subr.bf16.mxu0 0
    %3632 = vmatpush1.bf16.msra.mxu0 0
    %3633 = vmatprep.subr.bf16.mxu0 0
    %3634 = vmatpush1.bf16.msra.mxu0 0
    %3635 = vmatprep.subr.bf16.mxu0 0
    %3636 = vmatpush1.bf16.msra.mxu0 0
    %3637 = vmatprep.subr.bf16.mxu0 0
    %3638 = vmatpush1.bf16.msra.mxu0 0
    %3639 = vmatprep.subr.bf16.mxu0 0
    %3640 = vmatpush1.bf16.msra.mxu0 0
    %3641 = vmatprep.subr.bf16.mxu0 0
    %3642 = vmatpush1.bf16.msra.mxu0 0
    %3643 = vmatprep.subr.bf16.mxu0 0
    %3644 = vmatpush1.bf16.msra.mxu0 0
    %3645 = vmatprep.mubr.bf16.mxu0 0
    %3646 = vmatmul.mubr.bf16.gmra.mrb[0].mxu0 %v3599
    %v3647 = vpop.f32.mrb[0].mxu0
    %v3648 = vadd.f32 0.0, %v3647
    %v3649 = vpop.f32.mrb[0].mxu0
    %v3650 = vpop.f32.mrb[0].mxu0
    %v3651 = vadd.f32 0.0, %v3650
    %v3652 = vpop.f32.mrb[0].mxu0
    %3653 = vmatprep.mubr.bf16.mxu0 0
    %3654 = vmatmul.mubr.bf16.gmra.mrb[0].mxu0 %v3602
    %v3655 = vpop.f32.mrb[0].mxu0
    %v3656 = vadd.f32 0.0, %v3655
    %v3657 = vpop.f32.mrb[0].mxu0
    %v3658 = vpop.f32.mrb[0].mxu0
    %v3659 = vadd.f32 0.0, %v3658
    %v3660 = vpop.f32.mrb[0].mxu0
    %3661 = vmatprep.mubr.bf16.mxu0 0
    %3662 = vmatmul.mubr.bf16.gmra.mrb[0].mxu0 %v3605
    %v3663 = vpop.f32.mrb[0].mxu0
    %v3664 = vadd.f32 0.0, %v3663
    %v3665 = vpop.f32.mrb[0].mxu0
    %v3666 = vpop.f32.mrb[0].mxu0
    %v3667 = vadd.f32 0.0, %v3666
    %v3668 = vpop.f32.mrb[0].mxu0
    %3669 = vmatprep.mubr.bf16.mxu0 0
    %3670 = vmatmul.mubr.bf16.gmra.mrb[0].mxu0 %v3608
    %v3671 = vpop.f32.mrb[0].mxu0
    %v3672 = vadd.f32 0.0, %v3671
    %v3673 = vpop.f32.mrb[0].mxu0
    %v3674 = vpop.f32.mrb[0].mxu0
    %v3675 = vadd.f32 0.0, %v3674
    %v3676 = vpop.f32.mrb[0].mxu0
    %3677 = vmatprep.mubr.bf16.mxu0 0
    %3678 = vmatmul.mubr.bf16.gmra.mrb[0].mxu0 %v3611
    %v3679 = vpop.f32.mrb[0].mxu0
    %v3680 = vadd.f32 0.0, %v3679
    %v3681 = vpop.f32.mrb[0].mxu0
    %v3682 = vpop.f32.mrb[0].mxu0
    %v3683 = vadd.f32 0.0, %v3682
    %v3684 = vpop.f32.mrb[0].mxu0
    %3685 = vdwg.mxu0
    %v3686 = vpack.c.bf16 %v3651, %v3648
    %v3687 = vpack.c.bf16 %v3659, %v3656
    %v3688 = vpack.c.bf16 %v3667, %v3664
    %v3689 = vpack.c.bf16 %v3675, %v3672
    %v3690 = vpack.c.bf16 %v3683, %v3680
    %v3691 = vld [vmem:[%s5] sm:$0xff]
    %v3692 = vld [vmem:[%s5 + $0x8] sm:$0xff]
    %v3693 = vld [vmem:[%s5 + $0x10] sm:$0xff]
    %v3694 = vld [vmem:[%s5 + $0x18] sm:$0xff]
    %v3695 = vld [vmem:[%s5 + $0x20] sm:$0xff]
    %v3696 = vld [vmem:[%s5 + $0x28] sm:$0xff]
    %v3697 = vld [vmem:[%s5 + $0x30] sm:$0xff]
    %v3698 = vld [vmem:[%s5 + $0x38] sm:$0xff]
    %v3699 = vld [vmem:[%s5 + $0x40] sm:$0xff]
    %v3700 = vld [vmem:[%s5 + $0x48] sm:$0xff]
    %v3701 = vld [vmem:[%s5 + $0x50] sm:$0xff]
    %v3702 = vld [vmem:[%s5 + $0x58] sm:$0xff]
    %v3703 = vld [vmem:[%s5 + $0x60] sm:$0xff]
    %v3704 = vld [vmem:[%s5 + $0x68] sm:$0xff]
    %v3705 = vld [vmem:[%s5 + $0x70] sm:$0xff]
    %v3706 = vld [vmem:[%s5 + $0x78] sm:$0xff]
    %s3707 = scalar_lea.vmem [#allocation6], 40
    %v3708 = vld [vmem:[%s3707] sm:$0xf]
    %v3709 = vld [vmem:[%s3707 + $0x4] sm:$0xf]
    %v3710 = vld [vmem:[%s3707 + $0x8] sm:$0xf]
    %v3711 = vld [vmem:[%s3707 + $0xc] sm:$0xf]
    %v3712 = vld [vmem:[%s3707 + $0x10] sm:$0xf]
    %v3713 = vld [vmem:[%s3707 + $0x14] sm:$0xf]
    %v3714 = vld [vmem:[%s3707 + $0x18] sm:$0xf]
    %v3715 = vld [vmem:[%s3707 + $0x1c] sm:$0xf]
    %v3716 = vld [vmem:[%s3707 + $0x20] sm:$0xf]
    %v3717 = vld [vmem:[%s3707 + $0x24] sm:$0xf]
    %v3728 = vunpack.c.l.b16 %v3708
    %v3729 = vunpack.c.l.b16 %v3709
    %v3730 = vunpack.c.l.b16 %v3710
    %v3731 = vunpack.c.l.b16 %v3711
    %v3732 = vunpack.c.l.b16 %v3712
    %v3733 = vunpack.c.l.b16 %v3713
    %v3734 = vunpack.c.l.b16 %v3714
    %v3735 = vunpack.c.l.b16 %v3715
    %v3736 = vunpack.c.l.b16 %v3716
    %v3737 = vunpack.c.l.b16 %v3717
    %v3738 = vpack.c.b16 %v3729, %v3728
    %v3739 = vpack.c.b16 %v3731, %v3730
    %v3740 = vpack.c.b16 %v3733, %v3732
    %v3741 = vpack.c.b16 %v3735, %v3734
    %v3742 = vpack.c.b16 %v3737, %v3736
    %v3744 = vsel %vm3597, %v3738, 0
    %v3747 = vsel %vm3597, %v3739, 0
    %v3750 = vsel %vm3597, %v3740, 0
    %v3753 = vsel %vm3597, %v3741, 0
    %v3756 = vsel %vm3597, %v3742, 0
    %3758 = vmatprep.subr.bf16.mxu0 0
    %3759 = vmatpush1.bf16.msra.mxu0 %v3555
    %3760 = vmatprep.subr.bf16.mxu0 0
    %3761 = vmatpush1.bf16.msra.mxu0 %v3556
    %3762 = vmatprep.subr.bf16.mxu0 0
    %3763 = vmatpush1.bf16.msra.mxu0 %v3557
    %3764 = vmatprep.subr.bf16.mxu0 0
    %3765 = vmatpush1.bf16.msra.mxu0 %v3558
    %3766 = vmatprep.subr.bf16.mxu0 0
    %3767 = vmatpush1.bf16.msra.mxu0 %v3559
    %3768 = vmatprep.subr.bf16.mxu0 0
    %3769 = vmatpush1.bf16.msra.mxu0 %v3560
    %3770 = vmatprep.subr.bf16.mxu0 0
    %3771 = vmatpush1.bf16.msra.mxu0 %v3561
    %3772 = vmatprep.subr.bf16.mxu0 0
    %3773 = vmatpush1.bf16.msra.mxu0 0
    %3774 = vmatprep.subr.bf16.mxu0 0
    %3775 = vmatpush1.bf16.msra.mxu0 0
    %3776 = vmatprep.subr.bf16.mxu0 0
    %3777 = vmatpush1.bf16.msra.mxu0 0
    %3778 = vmatprep.subr.bf16.mxu0 0
    %3779 = vmatpush1.bf16.msra.mxu0 0
    %3780 = vmatprep.subr.bf16.mxu0 0
    %3781 = vmatpush1.bf16.msra.mxu0 0
    %3782 = vmatprep.subr.bf16.mxu0 0
    %3783 = vmatpush1.bf16.msra.mxu0 0
    %3784 = vmatprep.subr.bf16.mxu0 0
    %3785 = vmatpush1.bf16.msra.mxu0 0
    %3786 = vmatprep.subr.bf16.mxu0 0
    %3787 = vmatpush1.bf16.msra.mxu0 0
    %3788 = vmatprep.subr.bf16.mxu0 0
    %3789 = vmatpush1.bf16.msra.mxu0 0
    %3790 = vmatprep.mubr.bf16.mxu0 0
    %3791 = vmatmul.mubr.bf16.gmra.mrb[0].mxu0 %v3744
    %v3792 = vpop.f32.mrb[0].mxu0
    %v3793 = vadd.f32 0.0, %v3792
    %v3794 = vpop.f32.mrb[0].mxu0
    %v3795 = vpop.f32.mrb[0].mxu0
    %v3796 = vadd.f32 0.0, %v3795
    %v3797 = vpop.f32.mrb[0].mxu0
    %3798 = vmatprep.mubr.bf16.mxu0 0
    %3799 = vmatmul.mubr.bf16.gmra.mrb[0].mxu0 %v3747
    %v3800 = vpop.f32.mrb[0].mxu0
    %v3801 = vadd.f32 0.0, %v3800
    %v3802 = vpop.f32.mrb[0].mxu0
    %v3803 = vpop.f32.mrb[0].mxu0
    %v3804 = vadd.f32 0.0, %v3803
    %v3805 = vpop.f32.mrb[0].mxu0
    %3806 = vmatprep.mubr.bf16.mxu0 0
    %3807 = vmatmul.mubr.bf16.gmra.mrb[0].mxu0 %v3750
    %v3808 = vpop.f32.mrb[0].mxu0
    %v3809 = vadd.f32 0.0, %v3808
    %v3810 = vpop.f32.mrb[0].mxu0
    %v3811 = vpop.f32.mrb[0].mxu0
    %v3812 = vadd.f32 0.0, %v3811
    %v3813 = vpop.f32.mrb[0].mxu0
    %3814 = vmatprep.mubr.bf16.mxu0 0
    %3815 = vmatmul.mubr.bf16.gmra.mrb[0].mxu0 %v3753
    %v3816 = vpop.f32.mrb[0].mxu0
    %v3817 = vadd.f32 0.0, %v3816
    %v3818 = vpop.f32.mrb[0].mxu0
    %v3819 = vpop.f32.mrb[0].mxu0
    %v3820 = vadd.f32 0.0, %v3819
    %v3821 = vpop.f32.mrb[0].mxu0
    %3822 = vmatprep.mubr.bf16.mxu0 0
    %3823 = vmatmul.mubr.bf16.gmra.mrb[0].mxu0 %v3756
    %v3824 = vpop.f32.mrb[0].mxu0
    %v3825 = vadd.f32 0.0, %v3824
    %v3826 = vpop.f32.mrb[0].mxu0
    %v3827 = vpop.f32.mrb[0].mxu0
    %v3828 = vadd.f32 0.0, %v3827
    %v3829 = vpop.f32.mrb[0].mxu0
    %3830 = vdwg.mxu0
    %v3831 = vpack.c.bf16 %v3796, %v3793
    %v3832 = vpack.c.bf16 %v3804, %v3801
    %v3833 = vpack.c.bf16 %v3812, %v3809
    %v3834 = vpack.c.bf16 %v3820, %v3817
    %v3835 = vpack.c.bf16 %v3828, %v3825
    %s3836 = scalar_lea.vmem %s5, 128
    %v3837 = vld [vmem:[%s3836] sm:$0xff]
    %v3838 = vld [vmem:[%s3836 + $0x8] sm:$0xff]
    %v3839 = vld [vmem:[%s3836 + $0x10] sm:$0xff]
    %v3840 = vld [vmem:[%s3836 + $0x18] sm:$0xff]
    %v3841 = vld [vmem:[%s3836 + $0x20] sm:$0xff]
    %v3842 = vld [vmem:[%s3836 + $0x28] sm:$0xff]
    %v3843 = vld [vmem:[%s3836 + $0x30] sm:$0xff]
    %v3844 = vld [vmem:[%s3836 + $0x38] sm:$0xff]
    %v3845 = vld [vmem:[%s3836 + $0x40] sm:$0xff]
    %v3846 = vld [vmem:[%s3836 + $0x48] sm:$0xff]
    %v3847 = vld [vmem:[%s3836 + $0x50] sm:$0xff]
    %v3848 = vld [vmem:[%s3836 + $0x58] sm:$0xff]
    %v3849 = vld [vmem:[%s3836 + $0x60] sm:$0xff]
    %v3850 = vld [vmem:[%s3836 + $0x68] sm:$0xff]
    %v3851 = vld [vmem:[%s3836 + $0x70] sm:$0xff]
    %v3852 = vld [vmem:[%s3836 + $0x78] sm:$0xff]
    %v3869 = vunpack.c.l.b16 %v3837
    %v3870 = vunpack.c.h.b16 %v3837
    %v3871 = vunpack.c.l.b16 %v3838
    %v3872 = vunpack.c.h.b16 %v3838
    %v3873 = vunpack.c.l.b16 %v3839
    %v3874 = vunpack.c.h.b16 %v3839
    %v3875 = vunpack.c.l.b16 %v3840
    %v3876 = vunpack.c.h.b16 %v3840
    %v3877 = vunpack.c.l.b16 %v3841
    %v3878 = vunpack.c.h.b16 %v3841
    %v3879 = vunpack.c.l.b16 %v3842
    %v3880 = vunpack.c.h.b16 %v3842
    %v3881 = vunpack.c.l.b16 %v3843
    %v3882 = vunpack.c.h.b16 %v3843
    %v3883 = vunpack.c.l.b16 %v3844
    %v3884 = vunpack.c.h.b16 %v3844
    %v3885 = vunpack.c.l.b16 %v3845
    %v3886 = vunpack.c.h.b16 %v3845
    %v3887 = vunpack.c.l.b16 %v3846
    %v3888 = vunpack.c.h.b16 %v3846
    %v3889 = vunpack.c.l.b16 %v3847
    %v3890 = vunpack.c.h.b16 %v3847
    %v3891 = vunpack.c.l.b16 %v3848
    %v3892 = vunpack.c.h.b16 %v3848
    %v3893 = vunpack.c.l.b16 %v3849
    %v3894 = vunpack.c.h.b16 %v3849
    %v3895 = vunpack.c.l.b16 %v3850
    %v3896 = vunpack.c.h.b16 %v3850
    %v3897 = vunpack.c.l.b16 %v3851
    %v3898 = vunpack.c.h.b16 %v3851
    %v3899 = vunpack.c.l.b16 %v3852
    %v3900 = vunpack.c.h.b16 %v3852
    %v3901 = vpack.c.b16 %v3871, %v3869
    %v3902 = vpack.c.b16 %v3872, %v3870
    %v3903 = vpack.c.b16 %v3875, %v3873
    %v3904 = vpack.c.b16 %v3876, %v3874
    %v3905 = vpack.c.b16 %v3879, %v3877
    %v3906 = vpack.c.b16 %v3880, %v3878
    %v3907 = vpack.c.b16 %v3883, %v3881
    %v3908 = vpack.c.b16 %v3884, %v3882
    %v3909 = vpack.c.b16 %v3887, %v3885
    %v3910 = vpack.c.b16 %v3888, %v3886
    %v3911 = vpack.c.b16 %v3891, %v3889
    %v3912 = vpack.c.b16 %v3892, %v3890
    %v3913 = vpack.c.b16 %v3895, %v3893
    %v3914 = vpack.c.b16 %v3896, %v3894
    %v3915 = vpack.c.b16 %v3899, %v3897
    %v3916 = vpack.c.b16 %v3900, %v3898
    %3933 = vmatprep.subr.bf16.mxu0 %v3902
    %3934 = vmatpush1.bf16.msra.mxu0 %v3901
    %3935 = vmatprep.subr.bf16.mxu0 %v3904
    %3936 = vmatpush1.bf16.msra.mxu0 %v3903
    %3937 = vmatprep.subr.bf16.mxu0 %v3906
    %3938 = vmatpush1.bf16.msra.mxu0 %v3905
    %3939 = vmatprep.subr.bf16.mxu0 %v3908
    %3940 = vmatpush1.bf16.msra.mxu0 %v3907
    %3941 = vmatprep.subr.bf16.mxu0 %v3910
    %3942 = vmatpush1.bf16.msra.mxu0 %v3909
    %3943 = vmatprep.subr.bf16.mxu0 %v3912
    %3944 = vmatpush1.bf16.msra.mxu0 %v3911
    %3945 = vmatprep.subr.bf16.mxu0 %v3914
    %3946 = vmatpush1.bf16.msra.mxu0 %v3913
    %3947 = vmatprep.subr.bf16.mxu0 %v3916
    %3948 = vmatpush1.bf16.msra.mxu0 %v3915
    %3949 = vmatprep.subr.bf16.mxu0 0
    %3950 = vmatpush1.bf16.msra.mxu0 0
    %3951 = vmatprep.subr.bf16.mxu0 0
    %3952 = vmatpush1.bf16.msra.mxu0 0
    %3953 = vmatprep.subr.bf16.mxu0 0
    %3954 = vmatpush1.bf16.msra.mxu0 0
    %3955 = vmatprep.subr.bf16.mxu0 0
    %3956 = vmatpush1.bf16.msra.mxu0 0
    %3957 = vmatprep.subr.bf16.mxu0 0
    %3958 = vmatpush1.bf16.msra.mxu0 0
    %3959 = vmatprep.subr.bf16.mxu0 0
    %3960 = vmatpush1.bf16.msra.mxu0 0
    %3961 = vmatprep.subr.bf16.mxu0 0
    %3962 = vmatpush1.bf16.msra.mxu0 0
    %3963 = vmatprep.subr.bf16.mxu0 0
    %3964 = vmatpush1.bf16.msra.mxu0 0
    %3965 = vmatprep.mubr.bf16.mxu0 0
    %3966 = vmatmul.mubr.bf16.gmra.mrb[0].mxu0 %v3831
    %v3967 = vpop.f32.mrb[0].mxu0
    %v3968 = vadd.f32 0.0, %v3967
    %v3969 = vpop.f32.mrb[0].mxu0
    %v3970 = vadd.f32 0.0, %v3969
    %v3971 = vpop.f32.mrb[0].mxu0
    %v3972 = vadd.f32 0.0, %v3971
    %v3973 = vpop.f32.mrb[0].mxu0
    %v3974 = vadd.f32 0.0, %v3973
    %3975 = vmatprep.mubr.bf16.mxu0 0
    %3976 = vmatmul.mubr.bf16.gmra.mrb[0].mxu0 %v3832
    %v3977 = vpop.f32.mrb[0].mxu0
    %v3978 = vadd.f32 0.0, %v3977
    %v3979 = vpop.f32.mrb[0].mxu0
    %v3980 = vadd.f32 0.0, %v3979
    %v3981 = vpop.f32.mrb[0].mxu0
    %v3982 = vadd.f32 0.0, %v3981
    %v3983 = vpop.f32.mrb[0].mxu0
    %v3984 = vadd.f32 0.0, %v3983
    %3985 = vmatprep.mubr.bf16.mxu0 0
    %3986 = vmatmul.mubr.bf16.gmra.mrb[0].mxu0 %v3833
    %v3987 = vpop.f32.mrb[0].mxu0
    %v3988 = vadd.f32 0.0, %v3987
    %v3989 = vpop.f32.mrb[0].mxu0
    %v3990 = vadd.f32 0.0, %v3989
    %v3991 = vpop.f32.mrb[0].mxu0
    %v3992 = vadd.f32 0.0, %v3991
    %v3993 = vpop.f32.mrb[0].mxu0
    %v3994 = vadd.f32 0.0, %v3993
    %3995 = vmatprep.mubr.bf16.mxu0 0
    %3996 = vmatmul.mubr.bf16.gmra.mrb[0].mxu0 %v3834
    %v3997 = vpop.f32.mrb[0].mxu0
    %v3998 = vadd.f32 0.0, %v3997
    %v3999 = vpop.f32.mrb[0].mxu0
    %v4000 = vadd.f32 0.0, %v3999
    %v4001 = vpop.f32.mrb[0].mxu0
    %v4002 = vadd.f32 0.0, %v4001
    %v4003 = vpop.f32.mrb[0].mxu0
    %v4004 = vadd.f32 0.0, %v4003
    %4005 = vmatprep.mubr.bf16.mxu0 0
    %4006 = vmatmul.mubr.bf16.gmra.mrb[0].mxu0 %v3835
    %v4007 = vpop.f32.mrb[0].mxu0
    %v4008 = vadd.f32 0.0, %v4007
    %v4009 = vpop.f32.mrb[0].mxu0
    %v4010 = vadd.f32 0.0, %v4009
    %v4011 = vpop.f32.mrb[0].mxu0
    %v4012 = vadd.f32 0.0, %v4011
    %v4013 = vpop.f32.mrb[0].mxu0
    %v4014 = vadd.f32 0.0, %v4013
    %4015 = vdwg.mxu0
    %v4032 = vunpack.c.l.b16 %v3691
    %v4033 = vunpack.c.h.b16 %v3691
    %v4034 = vunpack.c.l.b16 %v3692
    %v4035 = vunpack.c.h.b16 %v3692
    %v4036 = vunpack.c.l.b16 %v3693
    %v4037 = vunpack.c.h.b16 %v3693
    %v4038 = vunpack.c.l.b16 %v3694
    %v4039 = vunpack.c.h.b16 %v3694
    %v4040 = vunpack.c.l.b16 %v3695
    %v4041 = vunpack.c.h.b16 %v3695
    %v4042 = vunpack.c.l.b16 %v3696
    %v4043 = vunpack.c.h.b16 %v3696
    %v4044 = vunpack.c.l.b16 %v3697
    %v4045 = vunpack.c.h.b16 %v3697
    %v4046 = vunpack.c.l.b16 %v3698
    %v4047 = vunpack.c.h.b16 %v3698
    %v4048 = vunpack.c.l.b16 %v3699
    %v4049 = vunpack.c.h.b16 %v3699
    %v4050 = vunpack.c.l.b16 %v3700
    %v4051 = vunpack.c.h.b16 %v3700
    %v4052 = vunpack.c.l.b16 %v3701
    %v4053 = vunpack.c.h.b16 %v3701
    %v4054 = vunpack.c.l.b16 %v3702
    %v4055 = vunpack.c.h.b16 %v3702
    %v4056 = vunpack.c.l.b16 %v3703
    %v4057 = vunpack.c.h.b16 %v3703
    %v4058 = vunpack.c.l.b16 %v3704
    %v4059 = vunpack.c.h.b16 %v3704
    %v4060 = vunpack.c.l.b16 %v3705
    %v4061 = vunpack.c.h.b16 %v3705
    %v4062 = vunpack.c.l.b16 %v3706
    %v4063 = vunpack.c.h.b16 %v3706
    %v4064 = vpack.c.b16 %v4034, %v4032
    %v4065 = vpack.c.b16 %v4035, %v4033
    %v4066 = vpack.c.b16 %v4038, %v4036
    %v4067 = vpack.c.b16 %v4039, %v4037
    %v4068 = vpack.c.b16 %v4042, %v4040
    %v4069 = vpack.c.b16 %v4043, %v4041
    %v4070 = vpack.c.b16 %v4046, %v4044
    %v4071 = vpack.c.b16 %v4047, %v4045
    %v4072 = vpack.c.b16 %v4050, %v4048
    %v4073 = vpack.c.b16 %v4051, %v4049
    %v4074 = vpack.c.b16 %v4054, %v4052
    %v4075 = vpack.c.b16 %v4055, %v4053
    %v4076 = vpack.c.b16 %v4058, %v4056
    %v4077 = vpack.c.b16 %v4059, %v4057
    %v4078 = vpack.c.b16 %v4062, %v4060
    %v4079 = vpack.c.b16 %v4063, %v4061
    %4096 = vmatprep.subr.bf16.mxu0 %v4065
    %4097 = vmatpush1.bf16.msra.mxu0 %v4064
    %4098 = vmatprep.subr.bf16.mxu0 %v4067
    %4099 = vmatpush1.bf16.msra.mxu0 %v4066
    %4100 = vmatprep.subr.bf16.mxu0 %v4069
    %4101 = vmatpush1.bf16.msra.mxu0 %v4068
    %4102 = vmatprep.subr.bf16.mxu0 %v4071
    %4103 = vmatpush1.bf16.msra.mxu0 %v4070
    %4104 = vmatprep.subr.bf16.mxu0 %v4073
    %4105 = vmatpush1.bf16.msra.mxu0 %v4072
    %4106 = vmatprep.subr.bf16.mxu0 %v4075
    %4107 = vmatpush1.bf16.msra.mxu0 %v4074
    %4108 = vmatprep.subr.bf16.mxu0 %v4077
    %4109 = vmatpush1.bf16.msra.mxu0 %v4076
    %4110 = vmatprep.subr.bf16.mxu0 %v4079
    %4111 = vmatpush1.bf16.msra.mxu0 %v4078
    %4112 = vmatprep.subr.bf16.mxu0 0
    %4113 = vmatpush1.bf16.msra.mxu0 0
    %4114 = vmatprep.subr.bf16.mxu0 0
    %4115 = vmatpush1.bf16.msra.mxu0 0
    %4116 = vmatprep.subr.bf16.mxu0 0
    %4117 = vmatpush1.bf16.msra.mxu0 0
    %4118 = vmatprep.subr.bf16.mxu0 0
    %4119 = vmatpush1.bf16.msra.mxu0 0
    %4120 = vmatprep.subr.bf16.mxu0 0
    %4121 = vmatpush1.bf16.msra.mxu0 0
    %4122 = vmatprep.subr.bf16.mxu0 0
    %4123 = vmatpush1.bf16.msra.mxu0 0
    %4124 = vmatprep.subr.bf16.mxu0 0
    %4125 = vmatpush1.bf16.msra.mxu0 0
    %4126 = vmatprep.subr.bf16.mxu0 0
    %4127 = vmatpush1.bf16.msra.mxu0 0
    %4128 = vmatprep.mubr.bf16.mxu0 0
    %4129 = vmatmul.mubr.bf16.gmra.mrb[0].mxu0 %v3686
    %v4130 = vpop.f32.mrb[0].mxu0
    %v4131 = vadd.f32 %v3968, %v4130
    %v4132 = vpop.f32.mrb[0].mxu0
    %v4133 = vadd.f32 %v3970, %v4132
    %v4134 = vpop.f32.mrb[0].mxu0
    %v4135 = vadd.f32 %v3972, %v4134
    %v4136 = vpop.f32.mrb[0].mxu0
    %v4137 = vadd.f32 %v3974, %v4136
    %4138 = vmatprep.mubr.bf16.mxu0 0
    %4139 = vmatmul.mubr.bf16.gmra.mrb[0].mxu0 %v3687
    %v4140 = vpop.f32.mrb[0].mxu0
    %v4141 = vadd.f32 %v3978, %v4140
    %v4142 = vpop.f32.mrb[0].mxu0
    %v4143 = vadd.f32 %v3980, %v4142
    %v4144 = vpop.f32.mrb[0].mxu0
    %v4145 = vadd.f32 %v3982, %v4144
    %v4146 = vpop.f32.mrb[0].mxu0
    %v4147 = vadd.f32 %v3984, %v4146
    %4148 = vmatprep.mubr.bf16.mxu0 0
    %4149 = vmatmul.mubr.bf16.gmra.mrb[0].mxu0 %v3688
    %v4150 = vpop.f32.mrb[0].mxu0
    %v4151 = vadd.f32 %v3988, %v4150
    %v4152 = vpop.f32.mrb[0].mxu0
    %v4153 = vadd.f32 %v3990, %v4152
    %v4154 = vpop.f32.mrb[0].mxu0
    %v4155 = vadd.f32 %v3992, %v4154
    %v4156 = vpop.f32.mrb[0].mxu0
    %v4157 = vadd.f32 %v3994, %v4156
    %4158 = vmatprep.mubr.bf16.mxu0 0
    %4159 = vmatmul.mubr.bf16.gmra.mrb[0].mxu0 %v3689
    %v4160 = vpop.f32.mrb[0].mxu0
    %v4161 = vadd.f32 %v3998, %v4160
    %v4162 = vpop.f32.mrb[0].mxu0
    %v4163 = vadd.f32 %v4000, %v4162
    %v4164 = vpop.f32.mrb[0].mxu0
    %v4165 = vadd.f32 %v4002, %v4164
    %v4166 = vpop.f32.mrb[0].mxu0
    %v4167 = vadd.f32 %v4004, %v4166
    %4168 = vmatprep.mubr.bf16.mxu0 0
    %4169 = vmatmul.mubr.bf16.gmra.mrb[0].mxu0 %v3690
    %v4170 = vpop.f32.mrb[0].mxu0
    %v4171 = vadd.f32 %v4008, %v4170
    %v4172 = vpop.f32.mrb[0].mxu0
    %v4173 = vadd.f32 %v4010, %v4172
    %v4174 = vpop.f32.mrb[0].mxu0
    %v4175 = vadd.f32 %v4012, %v4174
    %v4176 = vpop.f32.mrb[0].mxu0
    %v4177 = vadd.f32 %v4014, %v4176
    %4178 = vdwg.mxu0
    %s4179 = scalar_lea.vmem [#allocation6], 80
    %v4180 = vld [vmem:[%s4179] sm:$0xf]
    %v4181 = vld [vmem:[%s4179 + $0x4] sm:$0xf]
    %v4182 = vld [vmem:[%s4179 + $0x8] sm:$0xf]
    %v4183 = vld [vmem:[%s4179 + $0xc] sm:$0xf]
    %v4184 = vld [vmem:[%s4179 + $0x10] sm:$0xf]
    %v4185 = vld [vmem:[%s4179 + $0x14] sm:$0xf]
    %v4186 = vld [vmem:[%s4179 + $0x18] sm:$0xf]
    %v4187 = vld [vmem:[%s4179 + $0x1c] sm:$0xf]
    %v4188 = vld [vmem:[%s4179 + $0x20] sm:$0xf]
    %v4189 = vld [vmem:[%s4179 + $0x24] sm:$0xf]
    %v4200 = vunpack.c.l.b16 %v4180
    %v4201 = vunpack.c.l.b16 %v4181
    %v4202 = vunpack.c.l.b16 %v4182
    %v4203 = vunpack.c.l.b16 %v4183
    %v4204 = vunpack.c.l.b16 %v4184
    %v4205 = vunpack.c.l.b16 %v4185
    %v4206 = vunpack.c.l.b16 %v4186
    %v4207 = vunpack.c.l.b16 %v4187
    %v4208 = vunpack.c.l.b16 %v4188
    %v4209 = vunpack.c.l.b16 %v4189
    %v4210 = vpack.c.b16 %v4201, %v4200
    %v4211 = vpack.c.b16 %v4203, %v4202
    %v4212 = vpack.c.b16 %v4205, %v4204
    %v4213 = vpack.c.b16 %v4207, %v4206
    %v4214 = vpack.c.b16 %v4209, %v4208
    %v4216 = vsel %vm3597, %v4210, 0
    %v4219 = vsel %vm3597, %v4211, 0
    %v4222 = vsel %vm3597, %v4212, 0
    %v4225 = vsel %vm3597, %v4213, 0
    %v4228 = vsel %vm3597, %v4214, 0
    %4230 = vmatprep.subr.bf16.mxu0 0
    %4231 = vmatpush1.bf16.msra.mxu0 %v3555
    %4232 = vmatprep.subr.bf16.mxu0 0
    %4233 = vmatpush1.bf16.msra.mxu0 %v3556
    %4234 = vmatprep.subr.bf16.mxu0 0
    %4235 = vmatpush1.bf16.msra.mxu0 %v3557
    %4236 = vmatprep.subr.bf16.mxu0 0
    %4237 = vmatpush1.bf16.msra.mxu0 %v3558
    %4238 = vmatprep.subr.bf16.mxu0 0
    %4239 = vmatpush1.bf16.msra.mxu0 %v3559
    %4240 = vmatprep.subr.bf16.mxu0 0
    %4241 = vmatpush1.bf16.msra.mxu0 %v3560
    %4242 = vmatprep.subr.bf16.mxu0 0
    %4243 = vmatpush1.bf16.msra.mxu0 %v3561
    %4244 = vmatprep.subr.bf16.mxu0 0
    %4245 = vmatpush1.bf16.msra.mxu0 0
    %4246 = vmatprep.subr.bf16.mxu0 0
    %4247 = vmatpush1.bf16.msra.mxu0 0
    %4248 = vmatprep.subr.bf16.mxu0 0
    %4249 = vmatpush1.bf16.msra.mxu0 0
    %4250 = vmatprep.subr.bf16.mxu0 0
    %4251 = vmatpush1.bf16.msra.mxu0 0
    %4252 = vmatprep.subr.bf16.mxu0 0
    %4253 = vmatpush1.bf16.msra.mxu0 0
    %4254 = vmatprep.subr.bf16.mxu0 0
    %4255 = vmatpush1.bf16.msra.mxu0 0
    %4256 = vmatprep.subr.bf16.mxu0 0
    %4257 = vmatpush1.bf16.msra.mxu0 0
    %4258 = vmatprep.subr.bf16.mxu0 0
    %4259 = vmatpush1.bf16.msra.mxu0 0
    %4260 = vmatprep.subr.bf16.mxu0 0
    %4261 = vmatpush1.bf16.msra.mxu0 0
    %4262 = vmatprep.mubr.bf16.mxu0 0
    %4263 = vmatmul.mubr.bf16.gmra.mrb[0].mxu0 %v4216
    %v4264 = vpop.f32.mrb[0].mxu0
    %v4265 = vadd.f32 0.0, %v4264
    %v4266 = vpop.f32.mrb[0].mxu0
    %v4267 = vpop.f32.mrb[0].mxu0
    %v4268 = vadd.f32 0.0, %v4267
    %v4269 = vpop.f32.mrb[0].mxu0
    %4270 = vmatprep.mubr.bf16.mxu0 0
    %4271 = vmatmul.mubr.bf16.gmra.mrb[0].mxu0 %v4219
    %v4272 = vpop.f32.mrb[0].mxu0
    %v4273 = vadd.f32 0.0, %v4272
    %v4274 = vpop.f32.mrb[0].mxu0
    %v4275 = vpop.f32.mrb[0].mxu0
    %v4276 = vadd.f32 0.0, %v4275
    %v4277 = vpop.f32.mrb[0].mxu0
    %4278 = vmatprep.mubr.bf16.mxu0 0
    %4279 = vmatmul.mubr.bf16.gmra.mrb[0].mxu0 %v4222
    %v4280 = vpop.f32.mrb[0].mxu0
    %v4281 = vadd.f32 0.0, %v4280
    %v4282 = vpop.f32.mrb[0].mxu0
    %v4283 = vpop.f32.mrb[0].mxu0
    %v4284 = vadd.f32 0.0, %v4283
    %v4285 = vpop.f32.mrb[0].mxu0
    %4286 = vmatprep.mubr.bf16.mxu0 0
    %4287 = vmatmul.mubr.bf16.gmra.mrb[0].mxu0 %v4225
    %v4288 = vpop.f32.mrb[0].mxu0
    %v4289 = vadd.f32 0.0, %v4288
    %v4290 = vpop.f32.mrb[0].mxu0
    %v4291 = vpop.f32.mrb[0].mxu0
    %v4292 = vadd.f32 0.0, %v4291
    %v4293 = vpop.f32.mrb[0].mxu0
    %4294 = vmatprep.mubr.bf16.mxu0 0
    %4295 = vmatmul.mubr.bf16.gmra.mrb[0].mxu0 %v4228
    %v4296 = vpop.f32.mrb[0].mxu0
    %v4297 = vadd.f32 0.0, %v4296
    %v4298 = vpop.f32.mrb[0].mxu0
    %v4299 = vpop.f32.mrb[0].mxu0
    %v4300 = vadd.f32 0.0, %v4299
    %v4301 = vpop.f32.mrb[0].mxu0
    %4302 = vdwg.mxu0
    %v4303 = vpack.c.bf16 %v4268, %v4265
    %v4304 = vpack.c.bf16 %v4276, %v4273
    %v4305 = vpack.c.bf16 %v4284, %v4281
    %v4306 = vpack.c.bf16 %v4292, %v4289
    %v4307 = vpack.c.bf16 %v4300, %v4297
    %s4308 = scalar_lea.vmem %s5, 256
    %v4309 = vld [vmem:[%s4308] sm:$0xff]
    %v4310 = vld [vmem:[%s4308 + $0x8] sm:$0xff]
    %v4311 = vld [vmem:[%s4308 + $0x10] sm:$0xff]
    %v4312 = vld [vmem:[%s4308 + $0x18] sm:$0xff]
    %v4313 = vld [vmem:[%s4308 + $0x20] sm:$0xff]
    %v4314 = vld [vmem:[%s4308 + $0x28] sm:$0xff]
    %v4315 = vld [vmem:[%s4308 + $0x30] sm:$0xff]
    %v4316 = vld [vmem:[%s4308 + $0x38] sm:$0xff]
    %v4317 = vld [vmem:[%s4308 + $0x40] sm:$0xff]
    %v4318 = vld [vmem:[%s4308 + $0x48] sm:$0xff]
    %v4319 = vld [vmem:[%s4308 + $0x50] sm:$0xff]
    %v4320 = vld [vmem:[%s4308 + $0x58] sm:$0xff]
    %v4321 = vld [vmem:[%s4308 + $0x60] sm:$0xff]
    %v4322 = vld [vmem:[%s4308 + $0x68] sm:$0xff]
    %v4323 = vld [vmem:[%s4308 + $0x70] sm:$0xff]
    %v4324 = vld [vmem:[%s4308 + $0x78] sm:$0xff]
    %v4341 = vunpack.c.l.b16 %v4309
    %v4342 = vunpack.c.h.b16 %v4309
    %v4343 = vunpack.c.l.b16 %v4310
    %v4344 = vunpack.c.h.b16 %v4310
    %v4345 = vunpack.c.l.b16 %v4311
    %v4346 = vunpack.c.h.b16 %v4311
    %v4347 = vunpack.c.l.b16 %v4312
    %v4348 = vunpack.c.h.b16 %v4312
    %v4349 = vunpack.c.l.b16 %v4313
    %v4350 = vunpack.c.h.b16 %v4313
    %v4351 = vunpack.c.l.b16 %v4314
    %v4352 = vunpack.c.h.b16 %v4314
    %v4353 = vunpack.c.l.b16 %v4315
    %v4354 = vunpack.c.h.b16 %v4315
    %v4355 = vunpack.c.l.b16 %v4316
    %v4356 = vunpack.c.h.b16 %v4316
    %v4357 = vunpack.c.l.b16 %v4317
    %v4358 = vunpack.c.h.b16 %v4317
    %v4359 = vunpack.c.l.b16 %v4318
    %v4360 = vunpack.c.h.b16 %v4318
    %v4361 = vunpack.c.l.b16 %v4319
    %v4362 = vunpack.c.h.b16 %v4319
    %v4363 = vunpack.c.l.b16 %v4320
    %v4364 = vunpack.c.h.b16 %v4320
    %v4365 = vunpack.c.l.b16 %v4321
    %v4366 = vunpack.c.h.b16 %v4321
    %v4367 = vunpack.c.l.b16 %v4322
    %v4368 = vunpack.c.h.b16 %v4322
    %v4369 = vunpack.c.l.b16 %v4323
    %v4370 = vunpack.c.h.b16 %v4323
    %v4371 = vunpack.c.l.b16 %v4324
    %v4372 = vunpack.c.h.b16 %v4324
    %v4373 = vpack.c.b16 %v4343, %v4341
    %v4374 = vpack.c.b16 %v4344, %v4342
    %v4375 = vpack.c.b16 %v4347, %v4345
    %v4376 = vpack.c.b16 %v4348, %v4346
    %v4377 = vpack.c.b16 %v4351, %v4349
    %v4378 = vpack.c.b16 %v4352, %v4350
    %v4379 = vpack.c.b16 %v4355, %v4353
    %v4380 = vpack.c.b16 %v4356, %v4354
    %v4381 = vpack.c.b16 %v4359, %v4357
    %v4382 = vpack.c.b16 %v4360, %v4358
    %v4383 = vpack.c.b16 %v4363, %v4361
    %v4384 = vpack.c.b16 %v4364, %v4362
    %v4385 = vpack.c.b16 %v4367, %v4365
    %v4386 = vpack.c.b16 %v4368, %v4366
    %v4387 = vpack.c.b16 %v4371, %v4369
    %v4388 = vpack.c.b16 %v4372, %v4370
    %4405 = vmatprep.subr.bf16.mxu0 %v4374
    %4406 = vmatpush1.bf16.msra.mxu0 %v4373
    %4407 = vmatprep.subr.bf16.mxu0 %v4376
    %4408 = vmatpush1.bf16.msra.mxu0 %v4375
    %4409 = vmatprep.subr.bf16.mxu0 %v4378
    %4410 = vmatpush1.bf16.msra.mxu0 %v4377
    %4411 = vmatprep.subr.bf16.mxu0 %v4380
    %4412 = vmatpush1.bf16.msra.mxu0 %v4379
    %4413 = vmatprep.subr.bf16.mxu0 %v4382
    %4414 = vmatpush1.bf16.msra.mxu0 %v4381
    %4415 = vmatprep.subr.bf16.mxu0 %v4384
    %4416 = vmatpush1.bf16.msra.mxu0 %v4383
    %4417 = vmatprep.subr.bf16.mxu0 %v4386
    %4418 = vmatpush1.bf16.msra.mxu0 %v4385
    %4419 = vmatprep.subr.bf16.mxu0 %v4388
    %4420 = vmatpush1.bf16.msra.mxu0 %v4387
    %4421 = vmatprep.subr.bf16.mxu0 0
    %4422 = vmatpush1.bf16.msra.mxu0 0
    %4423 = vmatprep.subr.bf16.mxu0 0
    %4424 = vmatpush1.bf16.msra.mxu0 0
    %4425 = vmatprep.subr.bf16.mxu0 0
    %4426 = vmatpush1.bf16.msra.mxu0 0
    %4427 = vmatprep.subr.bf16.mxu0 0
    %4428 = vmatpush1.bf16.msra.mxu0 0
    %4429 = vmatprep.subr.bf16.mxu0 0
    %4430 = vmatpush1.bf16.msra.mxu0 0
    %4431 = vmatprep.subr.bf16.mxu0 0
    %4432 = vmatpush1.bf16.msra.mxu0 0
    %4433 = vmatprep.subr.bf16.mxu0 0
    %4434 = vmatpush1.bf16.msra.mxu0 0
    %4435 = vmatprep.subr.bf16.mxu0 0
    %4436 = vmatpush1.bf16.msra.mxu0 0
    %4437 = vmatprep.mubr.bf16.mxu0 0
    %4438 = vmatmul.mubr.bf16.gmra.mrb[0].mxu0 %v4303
    %v4439 = vpop.f32.mrb[0].mxu0
    %v4440 = vadd.f32 0.0, %v4439
    %v4441 = vpop.f32.mrb[0].mxu0
    %v4442 = vadd.f32 0.0, %v4441
    %v4443 = vpop.f32.mrb[0].mxu0
    %v4444 = vadd.f32 0.0, %v4443
    %v4445 = vpop.f32.mrb[0].mxu0
    %v4446 = vadd.f32 0.0, %v4445
    %4447 = vmatprep.mubr.bf16.mxu0 0
    %4448 = vmatmul.mubr.bf16.gmra.mrb[0].mxu0 %v4304
    %v4449 = vpop.f32.mrb[0].mxu0
    %v4450 = vadd.f32 0.0, %v4449
    %v4451 = vpop.f32.mrb[0].mxu0
    %v4452 = vadd.f32 0.0, %v4451
    %v4453 = vpop.f32.mrb[0].mxu0
    %v4454 = vadd.f32 0.0, %v4453
    %v4455 = vpop.f32.mrb[0].mxu0
    %v4456 = vadd.f32 0.0, %v4455
    %4457 = vmatprep.mubr.bf16.mxu0 0
    %4458 = vmatmul.mubr.bf16.gmra.mrb[0].mxu0 %v4305
    %v4459 = vpop.f32.mrb[0].mxu0
    %v4460 = vadd.f32 0.0, %v4459
    %v4461 = vpop.f32.mrb[0].mxu0
    %v4462 = vadd.f32 0.0, %v4461
    %v4463 = vpop.f32.mrb[0].mxu0
    %v4464 = vadd.f32 0.0, %v4463
    %v4465 = vpop.f32.mrb[0].mxu0
    %v4466 = vadd.f32 0.0, %v4465
    %4467 = vmatprep.mubr.bf16.mxu0 0
    %4468 = vmatmul.mubr.bf16.gmra.mrb[0].mxu0 %v4306
    %v4469 = vpop.f32.mrb[0].mxu0
    %v4470 = vadd.f32 0.0, %v4469
    %v4471 = vpop.f32.mrb[0].mxu0
    %v4472 = vadd.f32 0.0, %v4471
    %v4473 = vpop.f32.mrb[0].mxu0
    %v4474 = vadd.f32 0.0, %v4473
    %v4475 = vpop.f32.mrb[0].mxu0
    %v4476 = vadd.f32 0.0, %v4475
    %4477 = vmatprep.mubr.bf16.mxu0 0
    %4478 = vmatmul.mubr.bf16.gmra.mrb[0].mxu0 %v4307
    %v4479 = vpop.f32.mrb[0].mxu0
    %v4480 = vadd.f32 0.0, %v4479
    %v4481 = vpop.f32.mrb[0].mxu0
    %v4482 = vadd.f32 0.0, %v4481
    %v4483 = vpop.f32.mrb[0].mxu0
    %v4484 = vadd.f32 0.0, %v4483
    %v4485 = vpop.f32.mrb[0].mxu0
    %v4486 = vadd.f32 0.0, %v4485
    %4487 = vdwg.mxu0
    %v4488 = vadd.f32 %v4131, %v4440
    %v4489 = vadd.f32 %v4133, %v4442
    %v4490 = vadd.f32 %v4135, %v4444
    %v4491 = vadd.f32 %v4137, %v4446
    %v4492 = vadd.f32 %v4141, %v4450
    %v4493 = vadd.f32 %v4143, %v4452
    %v4494 = vadd.f32 %v4145, %v4454
    %v4495 = vadd.f32 %v4147, %v4456
    %v4496 = vadd.f32 %v4151, %v4460
    %v4497 = vadd.f32 %v4153, %v4462
    %v4498 = vadd.f32 %v4155, %v4464
    %v4499 = vadd.f32 %v4157, %v4466
    %v4500 = vadd.f32 %v4161, %v4470
    %v4501 = vadd.f32 %v4163, %v4472
    %v4502 = vadd.f32 %v4165, %v4474
    %v4503 = vadd.f32 %v4167, %v4476
    %v4504 = vadd.f32 %v4171, %v4480
    %v4505 = vadd.f32 %v4173, %v4482
    %v4506 = vadd.f32 %v4175, %v4484
    %v4507 = vadd.f32 %v4177, %v4486
    %s4508 = scalar_lea.vmem [#allocation6], 120
    %v4509 = vld [vmem:[%s4508] sm:$0xf]
    %v4510 = vld [vmem:[%s4508 + $0x4] sm:$0xf]
    %v4511 = vld [vmem:[%s4508 + $0x8] sm:$0xf]
    %v4512 = vld [vmem:[%s4508 + $0xc] sm:$0xf]
    %v4513 = vld [vmem:[%s4508 + $0x10] sm:$0xf]
    %v4514 = vld [vmem:[%s4508 + $0x14] sm:$0xf]
    %v4515 = vld [vmem:[%s4508 + $0x18] sm:$0xf]
    %v4516 = vld [vmem:[%s4508 + $0x1c] sm:$0xf]
    %v4517 = vld [vmem:[%s4508 + $0x20] sm:$0xf]
    %v4518 = vld [vmem:[%s4508 + $0x24] sm:$0xf]
    %v4529 = vunpack.c.l.b16 %v4509
    %v4530 = vunpack.c.l.b16 %v4510
    %v4531 = vunpack.c.l.b16 %v4511
    %v4532 = vunpack.c.l.b16 %v4512
    %v4533 = vunpack.c.l.b16 %v4513
    %v4534 = vunpack.c.l.b16 %v4514
    %v4535 = vunpack.c.l.b16 %v4515
    %v4536 = vunpack.c.l.b16 %v4516
    %v4537 = vunpack.c.l.b16 %v4517
    %v4538 = vunpack.c.l.b16 %v4518
    %v4539 = vpack.c.b16 %v4530, %v4529
    %v4540 = vpack.c.b16 %v4532, %v4531
    %v4541 = vpack.c.b16 %v4534, %v4533
    %v4542 = vpack.c.b16 %v4536, %v4535
    %v4543 = vpack.c.b16 %v4538, %v4537
    %v4545 = vsel %vm3597, %v4539, 0
    %v4548 = vsel %vm3597, %v4540, 0
    %v4551 = vsel %vm3597, %v4541, 0
    %v4554 = vsel %vm3597, %v4542, 0
    %v4557 = vsel %vm3597, %v4543, 0
    %4559 = vmatprep.subr.bf16.mxu0 0
    %4560 = vmatpush1.bf16.msra.mxu0 %v3555
    %4561 = vmatprep.subr.bf16.mxu0 0
    %4562 = vmatpush1.bf16.msra.mxu0 %v3556
    %4563 = vmatprep.subr.bf16.mxu0 0
    %4564 = vmatpush1.bf16.msra.mxu0 %v3557
    %4565 = vmatprep.subr.bf16.mxu0 0
    %4566 = vmatpush1.bf16.msra.mxu0 %v3558
    %4567 = vmatprep.subr.bf16.mxu0 0
    %4568 = vmatpush1.bf16.msra.mxu0 %v3559
    %4569 = vmatprep.subr.bf16.mxu0 0
    %4570 = vmatpush1.bf16.msra.mxu0 %v3560
    %4571 = vmatprep.subr.bf16.mxu0 0
    %4572 = vmatpush1.bf16.msra.mxu0 %v3561
    %4573 = vmatprep.subr.bf16.mxu0 0
    %4574 = vmatpush1.bf16.msra.mxu0 0
    %4575 = vmatprep.subr.bf16.mxu0 0
    %4576 = vmatpush1.bf16.msra.mxu0 0
    %4577 = vmatprep.subr.bf16.mxu0 0
    %4578 = vmatpush1.bf16.msra.mxu0 0
    %4579 = vmatprep.subr.bf16.mxu0 0
    %4580 = vmatpush1.bf16.msra.mxu0 0
    %4581 = vmatprep.subr.bf16.mxu0 0
    %4582 = vmatpush1.bf16.msra.mxu0 0
    %4583 = vmatprep.subr.bf16.mxu0 0
    %4584 = vmatpush1.bf16.msra.mxu0 0
    %4585 = vmatprep.subr.bf16.mxu0 0
    %4586 = vmatpush1.bf16.msra.mxu0 0
    %4587 = vmatprep.subr.bf16.mxu0 0
    %4588 = vmatpush1.bf16.msra.mxu0 0
    %4589 = vmatprep.subr.bf16.mxu0 0
    %4590 = vmatpush1.bf16.msra.mxu0 0
    %4591 = vmatprep.mubr.bf16.mxu0 0
    %4592 = vmatmul.mubr.bf16.gmra.mrb[0].mxu0 %v4545
    %v4593 = vpop.f32.mrb[0].mxu0
    %v4594 = vadd.f32 0.0, %v4593
    %v4595 = vpop.f32.mrb[0].mxu0
    %v4596 = vpop.f32.mrb[0].mxu0
    %v4597 = vadd.f32 0.0, %v4596
    %v4598 = vpop.f32.mrb[0].mxu0
    %4599 = vmatprep.mubr.bf16.mxu0 0
    %4600 = vmatmul.mubr.bf16.gmra.mrb[0].mxu0 %v4548
    %v4601 = vpop.f32.mrb[0].mxu0
    %v4602 = vadd.f32 0.0, %v4601
    %v4603 = vpop.f32.mrb[0].mxu0
    %v4604 = vpop.f32.mrb[0].mxu0
    %v4605 = vadd.f32 0.0, %v4604
    %v4606 = vpop.f32.mrb[0].mxu0
    %4607 = vmatprep.mubr.bf16.mxu0 0
    %4608 = vmatmul.mubr.bf16.gmra.mrb[0].mxu0 %v4551
    %v4609 = vpop.f32.mrb[0].mxu0
    %v4610 = vadd.f32 0.0, %v4609
    %v4611 = vpop.f32.mrb[0].mxu0
    %v4612 = vpop.f32.mrb[0].mxu0
    %v4613 = vadd.f32 0.0, %v4612
    %v4614 = vpop.f32.mrb[0].mxu0
    %4615 = vmatprep.mubr.bf16.mxu0 0
    %4616 = vmatmul.mubr.bf16.gmra.mrb[0].mxu0 %v4554
    %v4617 = vpop.f32.mrb[0].mxu0
    %v4618 = vadd.f32 0.0, %v4617
    %v4619 = vpop.f32.mrb[0].mxu0
    %v4620 = vpop.f32.mrb[0].mxu0
    %v4621 = vadd.f32 0.0, %v4620
    %v4622 = vpop.f32.mrb[0].mxu0
    %4623 = vmatprep.mubr.bf16.mxu0 0
    %4624 = vmatmul.mubr.bf16.gmra.mrb[0].mxu0 %v4557
    %v4625 = vpop.f32.mrb[0].mxu0
    %v4626 = vadd.f32 0.0, %v4625
    %v4627 = vpop.f32.mrb[0].mxu0
    %v4628 = vpop.f32.mrb[0].mxu0
    %v4629 = vadd.f32 0.0, %v4628
    %v4630 = vpop.f32.mrb[0].mxu0
    %4631 = vdwg.mxu0
    %v4632 = vpack.c.bf16 %v4597, %v4594
    %v4633 = vpack.c.bf16 %v4605, %v4602
    %v4634 = vpack.c.bf16 %v4613, %v4610
    %v4635 = vpack.c.bf16 %v4621, %v4618
    %v4636 = vpack.c.bf16 %v4629, %v4626
    %s4637 = scalar_lea.vmem %s5, 384
    %v4638 = vld [vmem:[%s4637] sm:$0xff]
    %v4639 = vld [vmem:[%s4637 + $0x8] sm:$0xff]
    %v4640 = vld [vmem:[%s4637 + $0x10] sm:$0xff]
    %v4641 = vld [vmem:[%s4637 + $0x18] sm:$0xff]
    %v4642 = vld [vmem:[%s4637 + $0x20] sm:$0xff]
    %v4643 = vld [vmem:[%s4637 + $0x28] sm:$0xff]
    %v4644 = vld [vmem:[%s4637 + $0x30] sm:$0xff]
    %v4645 = vld [vmem:[%s4637 + $0x38] sm:$0xff]
    %v4646 = vld [vmem:[%s4637 + $0x40] sm:$0xff]
    %v4647 = vld [vmem:[%s4637 + $0x48] sm:$0xff]
    %v4648 = vld [vmem:[%s4637 + $0x50] sm:$0xff]
    %v4649 = vld [vmem:[%s4637 + $0x58] sm:$0xff]
    %v4650 = vld [vmem:[%s4637 + $0x60] sm:$0xff]
    %v4651 = vld [vmem:[%s4637 + $0x68] sm:$0xff]
    %v4652 = vld [vmem:[%s4637 + $0x70] sm:$0xff]
    %v4653 = vld [vmem:[%s4637 + $0x78] sm:$0xff]
    %v4670 = vunpack.c.l.b16 %v4638
    %v4671 = vunpack.c.h.b16 %v4638
    %v4672 = vunpack.c.l.b16 %v4639
    %v4673 = vunpack.c.h.b16 %v4639
    %v4674 = vunpack.c.l.b16 %v4640
    %v4675 = vunpack.c.h.b16 %v4640
    %v4676 = vunpack.c.l.b16 %v4641
    %v4677 = vunpack.c.h.b16 %v4641
    %v4678 = vunpack.c.l.b16 %v4642
    %v4679 = vunpack.c.h.b16 %v4642
    %v4680 = vunpack.c.l.b16 %v4643
    %v4681 = vunpack.c.h.b16 %v4643
    %v4682 = vunpack.c.l.b16 %v4644
    %v4683 = vunpack.c.h.b16 %v4644
    %v4684 = vunpack.c.l.b16 %v4645
    %v4685 = vunpack.c.h.b16 %v4645
    %v4686 = vunpack.c.l.b16 %v4646
    %v4687 = vunpack.c.h.b16 %v4646
    %v4688 = vunpack.c.l.b16 %v4647
    %v4689 = vunpack.c.h.b16 %v4647
    %v4690 = vunpack.c.l.b16 %v4648
    %v4691 = vunpack.c.h.b16 %v4648
    %v4692 = vunpack.c.l.b16 %v4649
    %v4693 = vunpack.c.h.b16 %v4649
    %v4694 = vunpack.c.l.b16 %v4650
    %v4695 = vunpack.c.h.b16 %v4650
    %v4696 = vunpack.c.l.b16 %v4651
    %v4697 = vunpack.c.h.b16 %v4651
    %v4698 = vunpack.c.l.b16 %v4652
    %v4699 = vunpack.c.h.b16 %v4652
    %v4700 = vunpack.c.l.b16 %v4653
    %v4701 = vunpack.c.h.b16 %v4653
    %v4702 = vpack.c.b16 %v4672, %v4670
    %v4703 = vpack.c.b16 %v4673, %v4671
    %v4704 = vpack.c.b16 %v4676, %v4674
    %v4705 = vpack.c.b16 %v4677, %v4675
    %v4706 = vpack.c.b16 %v4680, %v4678
    %v4707 = vpack.c.b16 %v4681, %v4679
    %v4708 = vpack.c.b16 %v4684, %v4682
    %v4709 = vpack.c.b16 %v4685, %v4683
    %v4710 = vpack.c.b16 %v4688, %v4686
    %v4711 = vpack.c.b16 %v4689, %v4687
    %v4712 = vpack.c.b16 %v4692, %v4690
    %v4713 = vpack.c.b16 %v4693, %v4691
    %v4714 = vpack.c.b16 %v4696, %v4694
    %v4715 = vpack.c.b16 %v4697, %v4695
    %v4716 = vpack.c.b16 %v4700, %v4698
    %v4717 = vpack.c.b16 %v4701, %v4699
    %4734 = vmatprep.subr.bf16.mxu0 %v4703
    %4735 = vmatpush1.bf16.msra.mxu0 %v4702
    %4736 = vmatprep.subr.bf16.mxu0 %v4705
    %4737 = vmatpush1.bf16.msra.mxu0 %v4704
    %4738 = vmatprep.subr.bf16.mxu0 %v4707
    %4739 = vmatpush1.bf16.msra.mxu0 %v4706
    %4740 = vmatprep.subr.bf16.mxu0 %v4709
    %4741 = vmatpush1.bf16.msra.mxu0 %v4708
    %4742 = vmatprep.subr.bf16.mxu0 %v4711
    %4743 = vmatpush1.bf16.msra.mxu0 %v4710
    %4744 = vmatprep.subr.bf16.mxu0 %v4713
    %4745 = vmatpush1.bf16.msra.mxu0 %v4712
    %4746 = vmatprep.subr.bf16.mxu0 %v4715
    %4747 = vmatpush1.bf16.msra.mxu0 %v4714
    %4748 = vmatprep.subr.bf16.mxu0 %v4717
    %4749 = vmatpush1.bf16.msra.mxu0 %v4716
    %4750 = vmatprep.subr.bf16.mxu0 0
    %4751 = vmatpush1.bf16.msra.mxu0 0
    %4752 = vmatprep.subr.bf16.mxu0 0
    %4753 = vmatpush1.bf16.msra.mxu0 0
    %4754 = vmatprep.subr.bf16.mxu0 0
    %4755 = vmatpush1.bf16.msra.mxu0 0
    %4756 = vmatprep.subr.bf16.mxu0 0
    %4757 = vmatpush1.bf16.msra.mxu0 0
    %4758 = vmatprep.subr.bf16.mxu0 0
    %4759 = vmatpush1.bf16.msra.mxu0 0
    %4760 = vmatprep.subr.bf16.mxu0 0
    %4761 = vmatpush1.bf16.msra.mxu0 0
    %4762 = vmatprep.subr.bf16.mxu0 0
    %4763 = vmatpush1.bf16.msra.mxu0 0
    %4764 = vmatprep.subr.bf16.mxu0 0
    %4765 = vmatpush1.bf16.msra.mxu0 0
    %4766 = vmatprep.mubr.bf16.mxu0 0
    %4767 = vmatmul.mubr.bf16.gmra.mrb[0].mxu0 %v4632
    %v4768 = vpop.f32.mrb[0].mxu0
    %v4769 = vadd.f32 0.0, %v4768
    %v4770 = vpop.f32.mrb[0].mxu0
    %v4771 = vadd.f32 0.0, %v4770
    %v4772 = vpop.f32.mrb[0].mxu0
    %v4773 = vadd.f32 0.0, %v4772
    %v4774 = vpop.f32.mrb[0].mxu0
    %v4775 = vadd.f32 0.0, %v4774
    %4776 = vmatprep.mubr.bf16.mxu0 0
    %4777 = vmatmul.mubr.bf16.gmra.mrb[0].mxu0 %v4633
    %v4778 = vpop.f32.mrb[0].mxu0
    %v4779 = vadd.f32 0.0, %v4778
    %v4780 = vpop.f32.mrb[0].mxu0
    %v4781 = vadd.f32 0.0, %v4780
    %v4782 = vpop.f32.mrb[0].mxu0
    %v4783 = vadd.f32 0.0, %v4782
    %v4784 = vpop.f32.mrb[0].mxu0
    %v4785 = vadd.f32 0.0, %v4784
    %4786 = vmatprep.mubr.bf16.mxu0 0
    %4787 = vmatmul.mubr.bf16.gmra.mrb[0].mxu0 %v4634
    %v4788 = vpop.f32.mrb[0].mxu0
    %v4789 = vadd.f32 0.0, %v4788
    %v4790 = vpop.f32.mrb[0].mxu0
    %v4791 = vadd.f32 0.0, %v4790
    %v4792 = vpop.f32.mrb[0].mxu0
    %v4793 = vadd.f32 0.0, %v4792
    %v4794 = vpop.f32.mrb[0].mxu0
    %v4795 = vadd.f32 0.0, %v4794
    %4796 = vmatprep.mubr.bf16.mxu0 0
    %4797 = vmatmul.mubr.bf16.gmra.mrb[0].mxu0 %v4635
    %v4798 = vpop.f32.mrb[0].mxu0
    %v4799 = vadd.f32 0.0, %v4798
    %v4800 = vpop.f32.mrb[0].mxu0
    %v4801 = vadd.f32 0.0, %v4800
    %v4802 = vpop.f32.mrb[0].mxu0
    %v4803 = vadd.f32 0.0, %v4802
    %v4804 = vpop.f32.mrb[0].mxu0
    %v4805 = vadd.f32 0.0, %v4804
    %4806 = vmatprep.mubr.bf16.mxu0 0
    %4807 = vmatmul.mubr.bf16.gmra.mrb[0].mxu0 %v4636
    %v4808 = vpop.f32.mrb[0].mxu0
    %v4809 = vadd.f32 0.0, %v4808
    %v4810 = vpop.f32.mrb[0].mxu0
    %v4811 = vadd.f32 0.0, %v4810
    %v4812 = vpop.f32.mrb[0].mxu0
    %v4813 = vadd.f32 0.0, %v4812
    %v4814 = vpop.f32.mrb[0].mxu0
    %v4815 = vadd.f32 0.0, %v4814
    %4816 = vdwg.mxu0
    %v4817 = vadd.f32 %v4488, %v4769
    %v4818 = vadd.f32 %v4489, %v4771
    %v4819 = vadd.f32 %v4490, %v4773
    %v4820 = vadd.f32 %v4491, %v4775
    %v4821 = vadd.f32 %v4492, %v4779
    %v4822 = vadd.f32 %v4493, %v4781
    %v4823 = vadd.f32 %v4494, %v4783
    %v4824 = vadd.f32 %v4495, %v4785
    %v4825 = vadd.f32 %v4496, %v4789
    %v4826 = vadd.f32 %v4497, %v4791
    %v4827 = vadd.f32 %v4498, %v4793
    %v4828 = vadd.f32 %v4499, %v4795
    %v4829 = vadd.f32 %v4500, %v4799
    %v4830 = vadd.f32 %v4501, %v4801
    %v4831 = vadd.f32 %v4502, %v4803
    %v4832 = vadd.f32 %v4503, %v4805
    %v4833 = vadd.f32 %v4504, %v4809
    %v4834 = vadd.f32 %v4505, %v4811
    %v4835 = vadd.f32 %v4506, %v4813
    %v4836 = vadd.f32 %v4507, %v4815
    %s4837 = scalar_lea.vmem [#allocation6], 160
    %v4838 = vld [vmem:[%s4837] sm:$0xf]
    %v4839 = vld [vmem:[%s4837 + $0x4] sm:$0xf]
    %v4840 = vld [vmem:[%s4837 + $0x8] sm:$0xf]
    %v4841 = vld [vmem:[%s4837 + $0xc] sm:$0xf]
    %v4842 = vld [vmem:[%s4837 + $0x10] sm:$0xf]
    %v4843 = vld [vmem:[%s4837 + $0x14] sm:$0xf]
    %v4844 = vld [vmem:[%s4837 + $0x18] sm:$0xf]
    %v4845 = vld [vmem:[%s4837 + $0x1c] sm:$0xf]
    %v4846 = vld [vmem:[%s4837 + $0x20] sm:$0xf]
    %v4847 = vld [vmem:[%s4837 + $0x24] sm:$0xf]
    %v4858 = vunpack.c.l.b16 %v4838
    %v4859 = vunpack.c.l.b16 %v4839
    %v4860 = vunpack.c.l.b16 %v4840
    %v4861 = vunpack.c.l.b16 %v4841
    %v4862 = vunpack.c.l.b16 %v4842
    %v4863 = vunpack.c.l.b16 %v4843
    %v4864 = vunpack.c.l.b16 %v4844
    %v4865 = vunpack.c.l.b16 %v4845
    %v4866 = vunpack.c.l.b16 %v4846
    %v4867 = vunpack.c.l.b16 %v4847
    %v4868 = vpack.c.b16 %v4859, %v4858
    %v4869 = vpack.c.b16 %v4861, %v4860
    %v4870 = vpack.c.b16 %v4863, %v4862
    %v4871 = vpack.c.b16 %v4865, %v4864
    %v4872 = vpack.c.b16 %v4867, %v4866
    %v4874 = vsel %vm3597, %v4868, 0
    %v4877 = vsel %vm3597, %v4869, 0
    %v4880 = vsel %vm3597, %v4870, 0
    %v4883 = vsel %vm3597, %v4871, 0
    %v4886 = vsel %vm3597, %v4872, 0
    %4888 = vmatprep.subr.bf16.mxu0 0
    %4889 = vmatpush1.bf16.msra.mxu0 %v3555
    %4890 = vmatprep.subr.bf16.mxu0 0
    %4891 = vmatpush1.bf16.msra.mxu0 %v3556
    %4892 = vmatprep.subr.bf16.mxu0 0
    %4893 = vmatpush1.bf16.msra.mxu0 %v3557
    %4894 = vmatprep.subr.bf16.mxu0 0
    %4895 = vmatpush1.bf16.msra.mxu0 %v3558
    %4896 = vmatprep.subr.bf16.mxu0 0
    %4897 = vmatpush1.bf16.msra.mxu0 %v3559
    %4898 = vmatprep.subr.bf16.mxu0 0
    %4899 = vmatpush1.bf16.msra.mxu0 %v3560
    %4900 = vmatprep.subr.bf16.mxu0 0
    %4901 = vmatpush1.bf16.msra.mxu0 %v3561
    %4902 = vmatprep.subr.bf16.mxu0 0
    %4903 = vmatpush1.bf16.msra.mxu0 0
    %4904 = vmatprep.subr.bf16.mxu0 0
    %4905 = vmatpush1.bf16.msra.mxu0 0
    %4906 = vmatprep.subr.bf16.mxu0 0
    %4907 = vmatpush1.bf16.msra.mxu0 0
    %4908 = vmatprep.subr.bf16.mxu0 0
    %4909 = vmatpush1.bf16.msra.mxu0 0
    %4910 = vmatprep.subr.bf16.mxu0 0
    %4911 = vmatpush1.bf16.msra.mxu0 0
    %4912 = vmatprep.subr.bf16.mxu0 0
    %4913 = vmatpush1.bf16.msra.mxu0 0
    %4914 = vmatprep.subr.bf16.mxu0 0
    %4915 = vmatpush1.bf16.msra.mxu0 0
    %4916 = vmatprep.subr.bf16.mxu0 0
    %4917 = vmatpush1.bf16.msra.mxu0 0
    %4918 = vmatprep.subr.bf16.mxu0 0
    %4919 = vmatpush1.bf16.msra.mxu0 0
    %4920 = vmatprep.mubr.bf16.mxu0 0
    %4921 = vmatmul.mubr.bf16.gmra.mrb[0].mxu0 %v4874
    %v4922 = vpop.f32.mrb[0].mxu0
    %v4923 = vadd.f32 0.0, %v4922
    %v4924 = vpop.f32.mrb[0].mxu0
    %v4925 = vpop.f32.mrb[0].mxu0
    %v4926 = vadd.f32 0.0, %v4925
    %v4927 = vpop.f32.mrb[0].mxu0
    %4928 = vmatprep.mubr.bf16.mxu0 0
    %4929 = vmatmul.mubr.bf16.gmra.mrb[0].mxu0 %v4877
    %v4930 = vpop.f32.mrb[0].mxu0
    %v4931 = vadd.f32 0.0, %v4930
    %v4932 = vpop.f32.mrb[0].mxu0
    %v4933 = vpop.f32.mrb[0].mxu0
    %v4934 = vadd.f32 0.0, %v4933
    %v4935 = vpop.f32.mrb[0].mxu0
    %4936 = vmatprep.mubr.bf16.mxu0 0
    %4937 = vmatmul.mubr.bf16.gmra.mrb[0].mxu0 %v4880
    %v4938 = vpop.f32.mrb[0].mxu0
    %v4939 = vadd.f32 0.0, %v4938
    %v4940 = vpop.f32.mrb[0].mxu0
    %v4941 = vpop.f32.mrb[0].mxu0
    %v4942 = vadd.f32 0.0, %v4941
    %v4943 = vpop.f32.mrb[0].mxu0
    %4944 = vmatprep.mubr.bf16.mxu0 0
    %4945 = vmatmul.mubr.bf16.gmra.mrb[0].mxu0 %v4883
    %v4946 = vpop.f32.mrb[0].mxu0
    %v4947 = vadd.f32 0.0, %v4946
    %v4948 = vpop.f32.mrb[0].mxu0
    %v4949 = vpop.f32.mrb[0].mxu0
    %v4950 = vadd.f32 0.0, %v4949
    %v4951 = vpop.f32.mrb[0].mxu0
    %4952 = vmatprep.mubr.bf16.mxu0 0
    %4953 = vmatmul.mubr.bf16.gmra.mrb[0].mxu0 %v4886
    %v4954 = vpop.f32.mrb[0].mxu0
    %v4955 = vadd.f32 0.0, %v4954
    %v4956 = vpop.f32.mrb[0].mxu0
    %v4957 = vpop.f32.mrb[0].mxu0
    %v4958 = vadd.f32 0.0, %v4957
    %v4959 = vpop.f32.mrb[0].mxu0
    %4960 = vdwg.mxu0
    %v4961 = vpack.c.bf16 %v4926, %v4923
    %v4962 = vpack.c.bf16 %v4934, %v4931
    %v4963 = vpack.c.bf16 %v4942, %v4939
    %v4964 = vpack.c.bf16 %v4950, %v4947
    %v4965 = vpack.c.bf16 %v4958, %v4955
    %s4966 = scalar_lea.vmem %s5, 512
    %v4967 = vld [vmem:[%s4966] sm:$0xff]
    %v4968 = vld [vmem:[%s4966 + $0x8] sm:$0xff]
    %v4969 = vld [vmem:[%s4966 + $0x10] sm:$0xff]
    %v4970 = vld [vmem:[%s4966 + $0x18] sm:$0xff]
    %v4971 = vld [vmem:[%s4966 + $0x20] sm:$0xff]
    %v4972 = vld [vmem:[%s4966 + $0x28] sm:$0xff]
    %v4973 = vld [vmem:[%s4966 + $0x30] sm:$0xff]
    %v4974 = vld [vmem:[%s4966 + $0x38] sm:$0xff]
    %v4975 = vld [vmem:[%s4966 + $0x40] sm:$0xff]
    %v4976 = vld [vmem:[%s4966 + $0x48] sm:$0xff]
    %v4977 = vld [vmem:[%s4966 + $0x50] sm:$0xff]
    %v4978 = vld [vmem:[%s4966 + $0x58] sm:$0xff]
    %v4979 = vld [vmem:[%s4966 + $0x60] sm:$0xff]
    %v4980 = vld [vmem:[%s4966 + $0x68] sm:$0xff]
    %v4981 = vld [vmem:[%s4966 + $0x70] sm:$0xff]
    %v4982 = vld [vmem:[%s4966 + $0x78] sm:$0xff]
    %v4999 = vunpack.c.l.b16 %v4967
    %v5000 = vunpack.c.h.b16 %v4967
    %v5001 = vunpack.c.l.b16 %v4968
    %v5002 = vunpack.c.h.b16 %v4968
    %v5003 = vunpack.c.l.b16 %v4969
    %v5004 = vunpack.c.h.b16 %v4969
    %v5005 = vunpack.c.l.b16 %v4970
    %v5006 = vunpack.c.h.b16 %v4970
    %v5007 = vunpack.c.l.b16 %v4971
    %v5008 = vunpack.c.h.b16 %v4971
    %v5009 = vunpack.c.l.b16 %v4972
    %v5010 = vunpack.c.h.b16 %v4972
    %v5011 = vunpack.c.l.b16 %v4973
    %v5012 = vunpack.c.h.b16 %v4973
    %v5013 = vunpack.c.l.b16 %v4974
    %v5014 = vunpack.c.h.b16 %v4974
    %v5015 = vunpack.c.l.b16 %v4975
    %v5016 = vunpack.c.h.b16 %v4975
    %v5017 = vunpack.c.l.b16 %v4976
    %v5018 = vunpack.c.h.b16 %v4976
    %v5019 = vunpack.c.l.b16 %v4977
    %v5020 = vunpack.c.h.b16 %v4977
    %v5021 = vunpack.c.l.b16 %v4978
    %v5022 = vunpack.c.h.b16 %v4978
    %v5023 = vunpack.c.l.b16 %v4979
    %v5024 = vunpack.c.h.b16 %v4979
    %v5025 = vunpack.c.l.b16 %v4980
    %v5026 = vunpack.c.h.b16 %v4980
    %v5027 = vunpack.c.l.b16 %v4981
    %v5028 = vunpack.c.h.b16 %v4981
    %v5029 = vunpack.c.l.b16 %v4982
    %v5030 = vunpack.c.h.b16 %v4982
    %v5031 = vpack.c.b16 %v5001, %v4999
    %v5032 = vpack.c.b16 %v5002, %v5000
    %v5033 = vpack.c.b16 %v5005, %v5003
    %v5034 = vpack.c.b16 %v5006, %v5004
    %v5035 = vpack.c.b16 %v5009, %v5007
    %v5036 = vpack.c.b16 %v5010, %v5008
    %v5037 = vpack.c.b16 %v5013, %v5011
    %v5038 = vpack.c.b16 %v5014, %v5012
    %v5039 = vpack.c.b16 %v5017, %v5015
    %v5040 = vpack.c.b16 %v5018, %v5016
    %v5041 = vpack.c.b16 %v5021, %v5019
    %v5042 = vpack.c.b16 %v5022, %v5020
    %v5043 = vpack.c.b16 %v5025, %v5023
    %v5044 = vpack.c.b16 %v5026, %v5024
    %v5045 = vpack.c.b16 %v5029, %v5027
    %v5046 = vpack.c.b16 %v5030, %v5028
    %5063 = vmatprep.subr.bf16.mxu0 %v5032
    %5064 = vmatpush1.bf16.msra.mxu0 %v5031
    %5065 = vmatprep.subr.bf16.mxu0 %v5034
    %5066 = vmatpush1.bf16.msra.mxu0 %v5033
    %5067 = vmatprep.subr.bf16.mxu0 %v5036
    %5068 = vmatpush1.bf16.msra.mxu0 %v5035
    %5069 = vmatprep.subr.bf16.mxu0 %v5038
    %5070 = vmatpush1.bf16.msra.mxu0 %v5037
    %5071 = vmatprep.subr.bf16.mxu0 %v5040
    %5072 = vmatpush1.bf16.msra.mxu0 %v5039
    %5073 = vmatprep.subr.bf16.mxu0 %v5042
    %5074 = vmatpush1.bf16.msra.mxu0 %v5041
    %5075 = vmatprep.subr.bf16.mxu0 %v5044
    %5076 = vmatpush1.bf16.msra.mxu0 %v5043
    %5077 = vmatprep.subr.bf16.mxu0 %v5046
    %5078 = vmatpush1.bf16.msra.mxu0 %v5045
    %5079 = vmatprep.subr.bf16.mxu0 0
    %5080 = vmatpush1.bf16.msra.mxu0 0
    %5081 = vmatprep.subr.bf16.mxu0 0
    %5082 = vmatpush1.bf16.msra.mxu0 0
    %5083 = vmatprep.subr.bf16.mxu0 0
    %5084 = vmatpush1.bf16.msra.mxu0 0
    %5085 = vmatprep.subr.bf16.mxu0 0
    %5086 = vmatpush1.bf16.msra.mxu0 0
    %5087 = vmatprep.subr.bf16.mxu0 0
    %5088 = vmatpush1.bf16.msra.mxu0 0
    %5089 = vmatprep.subr.bf16.mxu0 0
    %5090 = vmatpush1.bf16.msra.mxu0 0
    %5091 = vmatprep.subr.bf16.mxu0 0
    %5092 = vmatpush1.bf16.msra.mxu0 0
    %5093 = vmatprep.subr.bf16.mxu0 0
    %5094 = vmatpush1.bf16.msra.mxu0 0
    %5095 = vmatprep.mubr.bf16.mxu0 0
    %5096 = vmatmul.mubr.bf16.gmra.mrb[0].mxu0 %v4961
    %v5097 = vpop.f32.mrb[0].mxu0
    %v5098 = vadd.f32 0.0, %v5097
    %v5099 = vpop.f32.mrb[0].mxu0
    %v5100 = vadd.f32 0.0, %v5099
    %v5101 = vpop.f32.mrb[0].mxu0
    %v5102 = vadd.f32 0.0, %v5101
    %v5103 = vpop.f32.mrb[0].mxu0
    %v5104 = vadd.f32 0.0, %v5103
    %5105 = vmatprep.mubr.bf16.mxu0 0
    %5106 = vmatmul.mubr.bf16.gmra.mrb[0].mxu0 %v4962
    %v5107 = vpop.f32.mrb[0].mxu0
    %v5108 = vadd.f32 0.0, %v5107
    %v5109 = vpop.f32.mrb[0].mxu0
    %v5110 = vadd.f32 0.0, %v5109
    %v5111 = vpop.f32.mrb[0].mxu0
    %v5112 = vadd.f32 0.0, %v5111
    %v5113 = vpop.f32.mrb[0].mxu0
    %v5114 = vadd.f32 0.0, %v5113
    %5115 = vmatprep.mubr.bf16.mxu0 0
    %5116 = vmatmul.mubr.bf16.gmra.mrb[0].mxu0 %v4963
    %v5117 = vpop.f32.mrb[0].mxu0
    %v5118 = vadd.f32 0.0, %v5117
    %v5119 = vpop.f32.mrb[0].mxu0
    %v5120 = vadd.f32 0.0, %v5119
    %v5121 = vpop.f32.mrb[0].mxu0
    %v5122 = vadd.f32 0.0, %v5121
    %v5123 = vpop.f32.mrb[0].mxu0
    %v5124 = vadd.f32 0.0, %v5123
    %5125 = vmatprep.mubr.bf16.mxu0 0
    %5126 = vmatmul.mubr.bf16.gmra.mrb[0].mxu0 %v4964
    %v5127 = vpop.f32.mrb[0].mxu0
    %v5128 = vadd.f32 0.0, %v5127
    %v5129 = vpop.f32.mrb[0].mxu0
    %v5130 = vadd.f32 0.0, %v5129
    %v5131 = vpop.f32.mrb[0].mxu0
    %v5132 = vadd.f32 0.0, %v5131
    %v5133 = vpop.f32.mrb[0].mxu0
    %v5134 = vadd.f32 0.0, %v5133
    %5135 = vmatprep.mubr.bf16.mxu0 0
    %5136 = vmatmul.mubr.bf16.gmra.mrb[0].mxu0 %v4965
    %v5137 = vpop.f32.mrb[0].mxu0
    %v5138 = vadd.f32 0.0, %v5137
    %v5139 = vpop.f32.mrb[0].mxu0
    %v5140 = vadd.f32 0.0, %v5139
    %v5141 = vpop.f32.mrb[0].mxu0
    %v5142 = vadd.f32 0.0, %v5141
    %v5143 = vpop.f32.mrb[0].mxu0
    %v5144 = vadd.f32 0.0, %v5143
    %5145 = vdwg.mxu0
    %v5146 = vadd.f32 %v4817, %v5098
    %v5147 = vadd.f32 %v4818, %v5100
    %v5148 = vadd.f32 %v4819, %v5102
    %v5149 = vadd.f32 %v4820, %v5104
    %v5150 = vadd.f32 %v4821, %v5108
    %v5151 = vadd.f32 %v4822, %v5110
    %v5152 = vadd.f32 %v4823, %v5112
    %v5153 = vadd.f32 %v4824, %v5114
    %v5154 = vadd.f32 %v4825, %v5118
    %v5155 = vadd.f32 %v4826, %v5120
    %v5156 = vadd.f32 %v4827, %v5122
    %v5157 = vadd.f32 %v4828, %v5124
    %v5158 = vadd.f32 %v4829, %v5128
    %v5159 = vadd.f32 %v4830, %v5130
    %v5160 = vadd.f32 %v4831, %v5132
    %v5161 = vadd.f32 %v4832, %v5134
    %v5162 = vadd.f32 %v4833, %v5138
    %v5163 = vadd.f32 %v4834, %v5140
    %v5164 = vadd.f32 %v4835, %v5142
    %v5165 = vadd.f32 %v4836, %v5144
    %v5166 = vmax.f32 %v5146, %v5156
    %v5167 = vmax.f32 %v5147, %v5157
    %v5168 = vmax.f32 %v5148, %v5158
    %v5169 = vmax.f32 %v5149, %v5159
    %v5170 = vmax.f32 %v5150, %v5160
    %v5171 = vmax.f32 %v5151, %v5161
    %v5172 = vmax.f32 %v5152, %v5162
    %v5173 = vmax.f32 %v5153, %v5163
    %v5174 = vmax.f32 %v5154, %v5164
    %v5175 = vmax.f32 %v5155, %v5165
    %v5176 = vmax.f32 %v5166, %v5167
    %v5177 = vmax.f32 %v5168, %v5169
    %v5178 = vmax.f32 %v5170, %v5171
    %v5179 = vmax.f32 %v5172, %v5173
    %v5180 = vmax.f32 %v5174, %v5175
    %v5181 = vld [vmem:[%s6] sm:$0x1]
    %v5183 = vlaneseq
    %v5184 = vshrl.u32 %v5183, 7
    %v5185 = vsub.s32 0, %v5184
    %v5186 = vrot.slane %v5181, %v5185
    %v5188 = vadd.f32 %v5176, %v5186
    %v5189 = vadd.f32 %v5177, %v5186
    %v5190 = vadd.f32 %v5178, %v5186
    %v5191 = vadd.f32 %v5179, %v5186
    %v5192 = vadd.f32 %v5180, %v5186
    %v5193 = vmax.f32 %v5188, 0.0
    %v5194 = vmax.f32 %v5189, 0.0
    %v5195 = vmax.f32 %v5190, 0.0
    %v5196 = vmax.f32 %v5191, 0.0
    %v5197 = vmax.f32 %v5192, 0.0
    %v5198 = vpack.c.bf16 %v5194, %v5193
    %v5199 = vpack.c.bf16 %v5196, %v5195
    %v5200 = vpack.c.bf16 %v5197, %v5197
    %v5201 = vld [vmem:[%s7] sm:$0xf]
    %v5202 = vld [vmem:[%s7 + $0x4] sm:$0xf]
    %v5203 = vld [vmem:[%s7 + $0x8] sm:$0xf]
    %v5204 = vld [vmem:[%s7 + $0xc] sm:$0xf]
    %v5205 = vld [vmem:[%s7 + $0x10] sm:$0xf]
    %v5211 = vunpack.c.l.b16 %v5201
    %v5212 = vunpack.c.l.b16 %v5202
    %v5213 = vunpack.c.l.b16 %v5203
    %v5214 = vunpack.c.l.b16 %v5204
    %v5215 = vunpack.c.l.b16 %v5205
    %v5216 = vpack.c.b16 %v5212, %v5211
    %v5217 = vpack.c.b16 %v5214, %v5213
    %v5218 = vpack.c.b16 %v5215, %v5215
    %vm5219 = vcmask 326656
    %v5221 = vsel %vm5219, %v5216, 0
    %v5224 = vsel %vm5219, %v5217, 0
    %v5227 = vsel %vm5219, %v5218, 0
    %vm5229 = vcmask 1043456
    %v5231 = vsel %vm5229, %v5200, 0
    %5233 = vmatprep.subr.bf16.mxu0 0
    %5234 = vmatpush1.bf16.msra.mxu0 %v5198
    %5235 = vmatprep.subr.bf16.mxu0 0
    %5236 = vmatpush1.bf16.msra.mxu0 %v5199
    %5237 = vmatprep.subr.bf16.mxu0 0
    %5238 = vmatpush1.bf16.msra.mxu0 %v5231
    %5239 = vmatprep.subr.bf16.mxu0 0
    %5240 = vmatpush1.bf16.msra.mxu0 0
    %5241 = vmatprep.subr.bf16.mxu0 0
    %5242 = vmatpush1.bf16.msra.mxu0 0
    %5243 = vmatprep.subr.bf16.mxu0 0
    %5244 = vmatpush1.bf16.msra.mxu0 0
    %5245 = vmatprep.subr.bf16.mxu0 0
    %5246 = vmatpush1.bf16.msra.mxu0 0
    %5247 = vmatprep.subr.bf16.mxu0 0
    %5248 = vmatpush1.bf16.msra.mxu0 0
    %5249 = vmatprep.subr.bf16.mxu0 0
    %5250 = vmatpush1.bf16.msra.mxu0 0
    %5251 = vmatprep.subr.bf16.mxu0 0
    %5252 = vmatpush1.bf16.msra.mxu0 0
    %5253 = vmatprep.subr.bf16.mxu0 0
    %5254 = vmatpush1.bf16.msra.mxu0 0
    %5255 = vmatprep.subr.bf16.mxu0 0
    %5256 = vmatpush1.bf16.msra.mxu0 0
    %5257 = vmatprep.subr.bf16.mxu0 0
    %5258 = vmatpush1.bf16.msra.mxu0 0
    %5259 = vmatprep.subr.bf16.mxu0 0
    %5260 = vmatpush1.bf16.msra.mxu0 0
    %5261 = vmatprep.subr.bf16.mxu0 0
    %5262 = vmatpush1.bf16.msra.mxu0 0
    %5263 = vmatprep.subr.bf16.mxu0 0
    %5264 = vmatpush1.bf16.msra.mxu0 0
    %5265 = vmatprep.mubr.bf16.mxu0 0
    %5266 = vmatmul.mubr.bf16.gmra.mrb[0].mxu0 %v5221
    %v5267 = vpop.f32.mrb[0].mxu0
    %v5268 = vadd.f32 0.0, %v5267
    %v5269 = vpop.f32.mrb[0].mxu0
    %v5270 = vpop.f32.mrb[0].mxu0
    %v5271 = vadd.f32 0.0, %v5270
    %v5272 = vpop.f32.mrb[0].mxu0
    %5273 = vmatprep.mubr.bf16.mxu0 0
    %5274 = vmatmul.mubr.bf16.gmra.mrb[0].mxu0 %v5224
    %v5275 = vpop.f32.mrb[0].mxu0
    %v5276 = vadd.f32 0.0, %v5275
    %v5277 = vpop.f32.mrb[0].mxu0
    %v5278 = vpop.f32.mrb[0].mxu0
    %v5279 = vadd.f32 0.0, %v5278
    %v5280 = vpop.f32.mrb[0].mxu0
    %5281 = vmatprep.mubr.bf16.mxu0 0
    %5282 = vmatmul.mubr.bf16.gmra.mrb[0].mxu0 %v5227
    %v5283 = vpop.f32.mrb[0].mxu0
    %v5284 = vadd.f32 0.0, %v5283
    %v5285 = vpop.f32.mrb[0].mxu0
    %v5286 = vpop.f32.mrb[0].mxu0
    %v5287 = vpop.f32.mrb[0].mxu0
    %5288 = vdwg.mxu0
    %v5289 = vpack.c.bf16 %v5271, %v5268
    %v5290 = vpack.c.bf16 %v5279, %v5276
    %v5291 = vpack.c.bf16 %v5284, %v5284
    %v5292 = vld [vmem:[#allocation7] sm:$0xf]
    %v5293 = vld [vmem:[#allocation7 + $0x4] sm:$0xf]
    %v5294 = vld [vmem:[#allocation7 + $0x8] sm:$0xf]
    %v5295 = vld [vmem:[#allocation7 + $0xc] sm:$0xf]
    %v5296 = vld [vmem:[#allocation7 + $0x10] sm:$0xf]
    %v5297 = vld [vmem:[#allocation7 + $0x14] sm:$0xf]
    %v5298 = vld [vmem:[#allocation7 + $0x18] sm:$0xf]
    %v5299 = vld [vmem:[#allocation7 + $0x1c] sm:$0xf]
    %v5300 = vld [vmem:[#allocation7 + $0x20] sm:$0xf]
    %v5301 = vld [vmem:[#allocation7 + $0x24] sm:$0xf]
    %v5302 = vld [vmem:[#allocation7 + $0x28] sm:$0xf]
    %v5303 = vld [vmem:[#allocation7 + $0x2c] sm:$0xf]
    %v5304 = vld [vmem:[#allocation7 + $0x30] sm:$0xf]
    %v5305 = vld [vmem:[#allocation7 + $0x34] sm:$0xf]
    %v5306 = vld [vmem:[#allocation7 + $0x38] sm:$0xf]
    %v5307 = vld [vmem:[#allocation7 + $0x3c] sm:$0xf]
    %s5308 = scalar_lea.vmem [#allocation7], 64
    %v5309 = vld [vmem:[%s5308] sm:$0xf]
    %v5310 = vld [vmem:[%s5308 + $0x4] sm:$0xf]
    %v5311 = vld [vmem:[%s5308 + $0x8] sm:$0xf]
    %v5312 = vld [vmem:[%s5308 + $0xc] sm:$0xf]
    %v5313 = vld [vmem:[%s5308 + $0x10] sm:$0xf]
    %v5314 = vld [vmem:[%s5308 + $0x14] sm:$0xf]
    %v5315 = vld [vmem:[%s5308 + $0x18] sm:$0xf]
    %v5316 = vld [vmem:[%s5308 + $0x1c] sm:$0xf]
    %v5317 = vld [vmem:[%s5308 + $0x20] sm:$0xf]
    %v5318 = vld [vmem:[%s5308 + $0x24] sm:$0xf]
    %v5319 = vld [vmem:[%s5308 + $0x28] sm:$0xf]
    %v5320 = vld [vmem:[%s5308 + $0x2c] sm:$0xf]
    %v5321 = vld [vmem:[%s5308 + $0x30] sm:$0xf]
    %v5322 = vld [vmem:[%s5308 + $0x34] sm:$0xf]
    %v5323 = vld [vmem:[%s5308 + $0x38] sm:$0xf]
    %v5324 = vld [vmem:[%s5308 + $0x3c] sm:$0xf]
    %v5326 = vrot.slane %v5289, 4
    %v5344 = vunpack.c.l.b16 %v5309
    %v5345 = vunpack.c.l.b16 %v5310
    %v5346 = vunpack.c.l.b16 %v5311
    %v5347 = vunpack.c.l.b16 %v5312
    %v5348 = vunpack.c.l.b16 %v5313
    %v5349 = vunpack.c.l.b16 %v5314
    %v5350 = vunpack.c.l.b16 %v5315
    %v5351 = vunpack.c.l.b16 %v5316
    %v5352 = vunpack.c.l.b16 %v5317
    %v5353 = vunpack.c.l.b16 %v5318
    %v5354 = vunpack.c.l.b16 %v5319
    %v5355 = vunpack.c.l.b16 %v5320
    %v5356 = vunpack.c.l.b16 %v5321
    %v5357 = vunpack.c.l.b16 %v5322
    %v5358 = vunpack.c.l.b16 %v5323
    %v5359 = vunpack.c.l.b16 %v5324
    %v5360 = vpack.c.b16 %v5345, %v5344
    %v5361 = vpack.c.b16 %v5347, %v5346
    %v5362 = vpack.c.b16 %v5349, %v5348
    %v5363 = vpack.c.b16 %v5351, %v5350
    %v5364 = vpack.c.b16 %v5353, %v5352
    %v5365 = vpack.c.b16 %v5355, %v5354
    %v5366 = vpack.c.b16 %v5357, %v5356
    %v5367 = vpack.c.b16 %v5359, %v5358
    %5376 = vmatprep.subr.bf16.mxu0 0
    %5377 = vmatpush1.bf16.msra.mxu0 %v5360
    %5378 = vmatprep.subr.bf16.mxu0 0
    %5379 = vmatpush1.bf16.msra.mxu0 %v5361
    %5380 = vmatprep.subr.bf16.mxu0 0
    %5381 = vmatpush1.bf16.msra.mxu0 %v5362
    %5382 = vmatprep.subr.bf16.mxu0 0
    %5383 = vmatpush1.bf16.msra.mxu0 %v5363
    %5384 = vmatprep.subr.bf16.mxu0 0
    %5385 = vmatpush1.bf16.msra.mxu0 %v5364
    %5386 = vmatprep.subr.bf16.mxu0 0
    %5387 = vmatpush1.bf16.msra.mxu0 %v5365
    %5388 = vmatprep.subr.bf16.mxu0 0
    %5389 = vmatpush1.bf16.msra.mxu0 %v5366
    %5390 = vmatprep.subr.bf16.mxu0 0
    %5391 = vmatpush1.bf16.msra.mxu0 %v5367
    %5392 = vmatprep.subr.bf16.mxu0 0
    %5393 = vmatpush1.bf16.msra.mxu0 0
    %5394 = vmatprep.subr.bf16.mxu0 0
    %5395 = vmatpush1.bf16.msra.mxu0 0
    %5396 = vmatprep.subr.bf16.mxu0 0
    %5397 = vmatpush1.bf16.msra.mxu0 0
    %5398 = vmatprep.subr.bf16.mxu0 0
    %5399 = vmatpush1.bf16.msra.mxu0 0
    %5400 = vmatprep.subr.bf16.mxu0 0
    %5401 = vmatpush1.bf16.msra.mxu0 0
    %5402 = vmatprep.subr.bf16.mxu0 0
    %5403 = vmatpush1.bf16.msra.mxu0 0
    %5404 = vmatprep.subr.bf16.mxu0 0
    %5405 = vmatpush1.bf16.msra.mxu0 0
    %5406 = vmatprep.subr.bf16.mxu0 0
    %5407 = vmatpush1.bf16.msra.mxu0 0
    %5408 = vmatprep.mubr.bf16.mxu0 0
    %5409 = vmatmul.mubr.bf16.gmra.mrb[0].mxu0 %v5326
    %v5410 = vpop.f32.mrb[0].mxu0
    %v5411 = vadd.f32 0.0, %v5410
    %v5412 = vpop.f32.mrb[0].mxu0
    %v5413 = vpop.f32.mrb[0].mxu0
    %v5414 = vpop.f32.mrb[0].mxu0
    %5415 = vdwg.mxu0
    %v5432 = vunpack.c.l.b16 %v5292
    %v5433 = vunpack.c.l.b16 %v5293
    %v5434 = vunpack.c.l.b16 %v5294
    %v5435 = vunpack.c.l.b16 %v5295
    %v5436 = vunpack.c.l.b16 %v5296
    %v5437 = vunpack.c.l.b16 %v5297
    %v5438 = vunpack.c.l.b16 %v5298
    %v5439 = vunpack.c.l.b16 %v5299
    %v5440 = vunpack.c.l.b16 %v5300
    %v5441 = vunpack.c.l.b16 %v5301
    %v5442 = vunpack.c.l.b16 %v5302
    %v5443 = vunpack.c.l.b16 %v5303
    %v5444 = vunpack.c.l.b16 %v5304
    %v5445 = vunpack.c.l.b16 %v5305
    %v5446 = vunpack.c.l.b16 %v5306
    %v5447 = vunpack.c.l.b16 %v5307
    %v5448 = vpack.c.b16 %v5433, %v5432
    %v5449 = vpack.c.b16 %v5435, %v5434
    %v5450 = vpack.c.b16 %v5437, %v5436
    %v5451 = vpack.c.b16 %v5439, %v5438
    %v5452 = vpack.c.b16 %v5441, %v5440
    %v5453 = vpack.c.b16 %v5443, %v5442
    %v5454 = vpack.c.b16 %v5445, %v5444
    %v5455 = vpack.c.b16 %v5447, %v5446
    %5464 = vmatprep.subr.bf16.mxu0 0
    %5465 = vmatpush1.bf16.msra.mxu0 %v5448
    %5466 = vmatprep.subr.bf16.mxu0 0
    %5467 = vmatpush1.bf16.msra.mxu0 %v5449
    %5468 = vmatprep.subr.bf16.mxu0 0
    %5469 = vmatpush1.bf16.msra.mxu0 %v5450
    %5470 = vmatprep.subr.bf16.mxu0 0
    %5471 = vmatpush1.bf16.msra.mxu0 %v5451
    %5472 = vmatprep.subr.bf16.mxu0 0
    %5473 = vmatpush1.bf16.msra.mxu0 %v5452
    %5474 = vmatprep.subr.bf16.mxu0 0
    %5475 = vmatpush1.bf16.msra.mxu0 %v5453
    %5476 = vmatprep.subr.bf16.mxu0 0
    %5477 = vmatpush1.bf16.msra.mxu0 %v5454
    %5478 = vmatprep.subr.bf16.mxu0 0
    %5479 = vmatpush1.bf16.msra.mxu0 %v5455
    %5480 = vmatprep.subr.bf16.mxu0 0
    %5481 = vmatpush1.bf16.msra.mxu0 0
    %5482 = vmatprep.subr.bf16.mxu0 0
    %5483 = vmatpush1.bf16.msra.mxu0 0
    %5484 = vmatprep.subr.bf16.mxu0 0
    %5485 = vmatpush1.bf16.msra.mxu0 0
    %5486 = vmatprep.subr.bf16.mxu0 0
    %5487 = vmatpush1.bf16.msra.mxu0 0
    %5488 = vmatprep.subr.bf16.mxu0 0
    %5489 = vmatpush1.bf16.msra.mxu0 0
    %5490 = vmatprep.subr.bf16.mxu0 0
    %5491 = vmatpush1.bf16.msra.mxu0 0
    %5492 = vmatprep.subr.bf16.mxu0 0
    %5493 = vmatpush1.bf16.msra.mxu0 0
    %5494 = vmatprep.subr.bf16.mxu0 0
    %5495 = vmatpush1.bf16.msra.mxu0 0
    %5496 = vmatprep.mubr.bf16.mxu0 0
    %5497 = vmatmul.mubr.bf16.gmra.mrb[0].mxu0 %v5289
    %v5498 = vpop.f32.mrb[0].mxu0
    %v5499 = vadd.f32 %v5411, %v5498
    %v5500 = vpop.f32.mrb[0].mxu0
    %v5501 = vpop.f32.mrb[0].mxu0
    %v5502 = vpop.f32.mrb[0].mxu0
    %5503 = vdwg.mxu0
    %s5504 = scalar_lea.vmem [#allocation7], 128
    %v5505 = vld [vmem:[%s5504] sm:$0xf]
    %v5506 = vld [vmem:[%s5504 + $0x4] sm:$0xf]
    %v5507 = vld [vmem:[%s5504 + $0x8] sm:$0xf]
    %v5508 = vld [vmem:[%s5504 + $0xc] sm:$0xf]
    %v5509 = vld [vmem:[%s5504 + $0x10] sm:$0xf]
    %v5510 = vld [vmem:[%s5504 + $0x14] sm:$0xf]
    %v5511 = vld [vmem:[%s5504 + $0x18] sm:$0xf]
    %v5512 = vld [vmem:[%s5504 + $0x1c] sm:$0xf]
    %v5513 = vld [vmem:[%s5504 + $0x20] sm:$0xf]
    %v5514 = vld [vmem:[%s5504 + $0x24] sm:$0xf]
    %v5515 = vld [vmem:[%s5504 + $0x28] sm:$0xf]
    %v5516 = vld [vmem:[%s5504 + $0x2c] sm:$0xf]
    %v5517 = vld [vmem:[%s5504 + $0x30] sm:$0xf]
    %v5518 = vld [vmem:[%s5504 + $0x34] sm:$0xf]
    %v5519 = vld [vmem:[%s5504 + $0x38] sm:$0xf]
    %v5520 = vld [vmem:[%s5504 + $0x3c] sm:$0xf]
    %v5537 = vunpack.c.l.b16 %v5505
    %v5538 = vunpack.c.l.b16 %v5506
    %v5539 = vunpack.c.l.b16 %v5507
    %v5540 = vunpack.c.l.b16 %v5508
    %v5541 = vunpack.c.l.b16 %v5509
    %v5542 = vunpack.c.l.b16 %v5510
    %v5543 = vunpack.c.l.b16 %v5511
    %v5544 = vunpack.c.l.b16 %v5512
    %v5545 = vunpack.c.l.b16 %v5513
    %v5546 = vunpack.c.l.b16 %v5514
    %v5547 = vunpack.c.l.b16 %v5515
    %v5548 = vunpack.c.l.b16 %v5516
    %v5549 = vunpack.c.l.b16 %v5517
    %v5550 = vunpack.c.l.b16 %v5518
    %v5551 = vunpack.c.l.b16 %v5519
    %v5552 = vunpack.c.l.b16 %v5520
    %v5553 = vpack.c.b16 %v5538, %v5537
    %v5554 = vpack.c.b16 %v5540, %v5539
    %v5555 = vpack.c.b16 %v5542, %v5541
    %v5556 = vpack.c.b16 %v5544, %v5543
    %v5557 = vpack.c.b16 %v5546, %v5545
    %v5558 = vpack.c.b16 %v5548, %v5547
    %v5559 = vpack.c.b16 %v5550, %v5549
    %v5560 = vpack.c.b16 %v5552, %v5551
    %5569 = vmatprep.subr.bf16.mxu0 0
    %5570 = vmatpush1.bf16.msra.mxu0 %v5553
    %5571 = vmatprep.subr.bf16.mxu0 0
    %5572 = vmatpush1.bf16.msra.mxu0 %v5554
    %5573 = vmatprep.subr.bf16.mxu0 0
    %5574 = vmatpush1.bf16.msra.mxu0 %v5555
    %5575 = vmatprep.subr.bf16.mxu0 0
    %5576 = vmatpush1.bf16.msra.mxu0 %v5556
    %5577 = vmatprep.subr.bf16.mxu0 0
    %5578 = vmatpush1.bf16.msra.mxu0 %v5557
    %5579 = vmatprep.subr.bf16.mxu0 0
    %5580 = vmatpush1.bf16.msra.mxu0 %v5558
    %5581 = vmatprep.subr.bf16.mxu0 0
    %5582 = vmatpush1.bf16.msra.mxu0 %v5559
    %5583 = vmatprep.subr.bf16.mxu0 0
    %5584 = vmatpush1.bf16.msra.mxu0 %v5560
    %5585 = vmatprep.subr.bf16.mxu0 0
    %5586 = vmatpush1.bf16.msra.mxu0 0
    %5587 = vmatprep.subr.bf16.mxu0 0
    %5588 = vmatpush1.bf16.msra.mxu0 0
    %5589 = vmatprep.subr.bf16.mxu0 0
    %5590 = vmatpush1.bf16.msra.mxu0 0
    %5591 = vmatprep.subr.bf16.mxu0 0
    %5592 = vmatpush1.bf16.msra.mxu0 0
    %5593 = vmatprep.subr.bf16.mxu0 0
    %5594 = vmatpush1.bf16.msra.mxu0 0
    %5595 = vmatprep.subr.bf16.mxu0 0
    %5596 = vmatpush1.bf16.msra.mxu0 0
    %5597 = vmatprep.subr.bf16.mxu0 0
    %5598 = vmatpush1.bf16.msra.mxu0 0
    %5599 = vmatprep.subr.bf16.mxu0 0
    %5600 = vmatpush1.bf16.msra.mxu0 0
    %5601 = vmatprep.mubr.bf16.mxu0 0
    %5602 = vmatmul.mubr.bf16.gmra.mrb[0].mxu0 %v5290
    %v5603 = vpop.f32.mrb[0].mxu0
    %v5604 = vadd.f32 0.0, %v5603
    %v5605 = vpop.f32.mrb[0].mxu0
    %v5606 = vpop.f32.mrb[0].mxu0
    %v5607 = vpop.f32.mrb[0].mxu0
    %5608 = vdwg.mxu0
    %v5609 = vadd.f32 %v5499, %v5604
    %s5610 = scalar_lea.vmem [#allocation7], 192
    %v5611 = vld [vmem:[%s5610] sm:$0xf]
    %v5612 = vld [vmem:[%s5610 + $0x4] sm:$0xf]
    %v5613 = vld [vmem:[%s5610 + $0x8] sm:$0xf]
    %v5614 = vld [vmem:[%s5610 + $0xc] sm:$0xf]
    %v5615 = vld [vmem:[%s5610 + $0x10] sm:$0xf]
    %v5616 = vld [vmem:[%s5610 + $0x14] sm:$0xf]
    %v5617 = vld [vmem:[%s5610 + $0x18] sm:$0xf]
    %v5618 = vld [vmem:[%s5610 + $0x1c] sm:$0xf]
    %v5619 = vld [vmem:[%s5610 + $0x20] sm:$0xf]
    %v5620 = vld [vmem:[%s5610 + $0x24] sm:$0xf]
    %v5621 = vld [vmem:[%s5610 + $0x28] sm:$0xf]
    %v5622 = vld [vmem:[%s5610 + $0x2c] sm:$0xf]
    %v5623 = vld [vmem:[%s5610 + $0x30] sm:$0xf]
    %v5624 = vld [vmem:[%s5610 + $0x34] sm:$0xf]
    %v5625 = vld [vmem:[%s5610 + $0x38] sm:$0xf]
    %v5626 = vld [vmem:[%s5610 + $0x3c] sm:$0xf]
    %v5628 = vrot.slane %v5290, 4
    %v5646 = vunpack.c.l.b16 %v5611
    %v5647 = vunpack.c.l.b16 %v5612
    %v5648 = vunpack.c.l.b16 %v5613
    %v5649 = vunpack.c.l.b16 %v5614
    %v5650 = vunpack.c.l.b16 %v5615
    %v5651 = vunpack.c.l.b16 %v5616
    %v5652 = vunpack.c.l.b16 %v5617
    %v5653 = vunpack.c.l.b16 %v5618
    %v5654 = vunpack.c.l.b16 %v5619
    %v5655 = vunpack.c.l.b16 %v5620
    %v5656 = vunpack.c.l.b16 %v5621
    %v5657 = vunpack.c.l.b16 %v5622
    %v5658 = vunpack.c.l.b16 %v5623
    %v5659 = vunpack.c.l.b16 %v5624
    %v5660 = vunpack.c.l.b16 %v5625
    %v5661 = vunpack.c.l.b16 %v5626
    %v5662 = vpack.c.b16 %v5647, %v5646
    %v5663 = vpack.c.b16 %v5649, %v5648
    %v5664 = vpack.c.b16 %v5651, %v5650
    %v5665 = vpack.c.b16 %v5653, %v5652
    %v5666 = vpack.c.b16 %v5655, %v5654
    %v5667 = vpack.c.b16 %v5657, %v5656
    %v5668 = vpack.c.b16 %v5659, %v5658
    %v5669 = vpack.c.b16 %v5661, %v5660
    %5678 = vmatprep.subr.bf16.mxu0 0
    %5679 = vmatpush1.bf16.msra.mxu0 %v5662
    %5680 = vmatprep.subr.bf16.mxu0 0
    %5681 = vmatpush1.bf16.msra.mxu0 %v5663
    %5682 = vmatprep.subr.bf16.mxu0 0
    %5683 = vmatpush1.bf16.msra.mxu0 %v5664
    %5684 = vmatprep.subr.bf16.mxu0 0
    %5685 = vmatpush1.bf16.msra.mxu0 %v5665
    %5686 = vmatprep.subr.bf16.mxu0 0
    %5687 = vmatpush1.bf16.msra.mxu0 %v5666
    %5688 = vmatprep.subr.bf16.mxu0 0
    %5689 = vmatpush1.bf16.msra.mxu0 %v5667
    %5690 = vmatprep.subr.bf16.mxu0 0
    %5691 = vmatpush1.bf16.msra.mxu0 %v5668
    %5692 = vmatprep.subr.bf16.mxu0 0
    %5693 = vmatpush1.bf16.msra.mxu0 %v5669
    %5694 = vmatprep.subr.bf16.mxu0 0
    %5695 = vmatpush1.bf16.msra.mxu0 0
    %5696 = vmatprep.subr.bf16.mxu0 0
    %5697 = vmatpush1.bf16.msra.mxu0 0
    %5698 = vmatprep.subr.bf16.mxu0 0
    %5699 = vmatpush1.bf16.msra.mxu0 0
    %5700 = vmatprep.subr.bf16.mxu0 0
    %5701 = vmatpush1.bf16.msra.mxu0 0
    %5702 = vmatprep.subr.bf16.mxu0 0
    %5703 = vmatpush1.bf16.msra.mxu0 0
    %5704 = vmatprep.subr.bf16.mxu0 0
    %5705 = vmatpush1.bf16.msra.mxu0 0
    %5706 = vmatprep.subr.bf16.mxu0 0
    %5707 = vmatpush1.bf16.msra.mxu0 0
    %5708 = vmatprep.subr.bf16.mxu0 0
    %5709 = vmatpush1.bf16.msra.mxu0 0
    %5710 = vmatprep.mubr.bf16.mxu0 0
    %5711 = vmatmul.mubr.bf16.gmra.mrb[0].mxu0 %v5628
    %v5712 = vpop.f32.mrb[0].mxu0
    %v5713 = vadd.f32 0.0, %v5712
    %v5714 = vpop.f32.mrb[0].mxu0
    %v5715 = vpop.f32.mrb[0].mxu0
    %v5716 = vpop.f32.mrb[0].mxu0
    %5717 = vdwg.mxu0
    %v5718 = vadd.f32 %v5609, %v5713
    %s5719 = scalar_lea.vmem [#allocation7], 256
    %v5720 = vld [vmem:[%s5719] sm:$0xf]
    %v5721 = vld [vmem:[%s5719 + $0x4] sm:$0xf]
    %v5722 = vld [vmem:[%s5719 + $0x8] sm:$0xf]
    %v5723 = vld [vmem:[%s5719 + $0xc] sm:$0xf]
    %v5724 = vld [vmem:[%s5719 + $0x10] sm:$0xf]
    %v5725 = vld [vmem:[%s5719 + $0x14] sm:$0xf]
    %v5726 = vld [vmem:[%s5719 + $0x18] sm:$0xf]
    %v5727 = vld [vmem:[%s5719 + $0x1c] sm:$0xf]
    %v5728 = vld [vmem:[%s5719 + $0x20] sm:$0xf]
    %v5729 = vld [vmem:[%s5719 + $0x24] sm:$0xf]
    %v5730 = vld [vmem:[%s5719 + $0x28] sm:$0xf]
    %v5731 = vld [vmem:[%s5719 + $0x2c] sm:$0xf]
    %v5732 = vld [vmem:[%s5719 + $0x30] sm:$0xf]
    %v5733 = vld [vmem:[%s5719 + $0x34] sm:$0xf]
    %v5734 = vld [vmem:[%s5719 + $0x38] sm:$0xf]
    %v5735 = vld [vmem:[%s5719 + $0x3c] sm:$0xf]
    %v5752 = vunpack.c.l.b16 %v5720
    %v5753 = vunpack.c.l.b16 %v5721
    %v5754 = vunpack.c.l.b16 %v5722
    %v5755 = vunpack.c.l.b16 %v5723
    %v5756 = vunpack.c.l.b16 %v5724
    %v5757 = vunpack.c.l.b16 %v5725
    %v5758 = vunpack.c.l.b16 %v5726
    %v5759 = vunpack.c.l.b16 %v5727
    %v5760 = vunpack.c.l.b16 %v5728
    %v5761 = vunpack.c.l.b16 %v5729
    %v5762 = vunpack.c.l.b16 %v5730
    %v5763 = vunpack.c.l.b16 %v5731
    %v5764 = vunpack.c.l.b16 %v5732
    %v5765 = vunpack.c.l.b16 %v5733
    %v5766 = vunpack.c.l.b16 %v5734
    %v5767 = vunpack.c.l.b16 %v5735
    %v5768 = vpack.c.b16 %v5753, %v5752
    %v5769 = vpack.c.b16 %v5755, %v5754
    %v5770 = vpack.c.b16 %v5757, %v5756
    %v5771 = vpack.c.b16 %v5759, %v5758
    %v5772 = vpack.c.b16 %v5761, %v5760
    %v5773 = vpack.c.b16 %v5763, %v5762
    %v5774 = vpack.c.b16 %v5765, %v5764
    %v5775 = vpack.c.b16 %v5767, %v5766
    %5784 = vmatprep.subr.bf16.mxu0 0
    %5785 = vmatpush1.bf16.msra.mxu0 %v5768
    %5786 = vmatprep.subr.bf16.mxu0 0
    %5787 = vmatpush1.bf16.msra.mxu0 %v5769
    %5788 = vmatprep.subr.bf16.mxu0 0
    %5789 = vmatpush1.bf16.msra.mxu0 %v5770
    %5790 = vmatprep.subr.bf16.mxu0 0
    %5791 = vmatpush1.bf16.msra.mxu0 %v5771
    %5792 = vmatprep.subr.bf16.mxu0 0
    %5793 = vmatpush1.bf16.msra.mxu0 %v5772
    %5794 = vmatprep.subr.bf16.mxu0 0
    %5795 = vmatpush1.bf16.msra.mxu0 %v5773
    %5796 = vmatprep.subr.bf16.mxu0 0
    %5797 = vmatpush1.bf16.msra.mxu0 %v5774
    %5798 = vmatprep.subr.bf16.mxu0 0
    %5799 = vmatpush1.bf16.msra.mxu0 %v5775
    %5800 = vmatprep.subr.bf16.mxu0 0
    %5801 = vmatpush1.bf16.msra.mxu0 0
    %5802 = vmatprep.subr.bf16.mxu0 0
    %5803 = vmatpush1.bf16.msra.mxu0 0
    %5804 = vmatprep.subr.bf16.mxu0 0
    %5805 = vmatpush1.bf16.msra.mxu0 0
    %5806 = vmatprep.subr.bf16.mxu0 0
    %5807 = vmatpush1.bf16.msra.mxu0 0
    %5808 = vmatprep.subr.bf16.mxu0 0
    %5809 = vmatpush1.bf16.msra.mxu0 0
    %5810 = vmatprep.subr.bf16.mxu0 0
    %5811 = vmatpush1.bf16.msra.mxu0 0
    %5812 = vmatprep.subr.bf16.mxu0 0
    %5813 = vmatpush1.bf16.msra.mxu0 0
    %5814 = vmatprep.subr.bf16.mxu0 0
    %5815 = vmatpush1.bf16.msra.mxu0 0
    %5816 = vmatprep.mubr.bf16.mxu0 0
    %5817 = vmatmul.mubr.bf16.gmra.mrb[0].mxu0 %v5291
    %v5818 = vpop.f32.mrb[0].mxu0
    %v5819 = vadd.f32 0.0, %v5818
    %v5820 = vpop.f32.mrb[0].mxu0
    %v5821 = vpop.f32.mrb[0].mxu0
    %v5822 = vpop.f32.mrb[0].mxu0
    %5823 = vdwg.mxu0
    %v5824 = vadd.f32 %v5718, %v5819
    %v5825 = vld [vmem:[%s9] sm:$0x1]
    %v5827 = vlaneseq
    %v5828 = vshrl.u32 %v5827, 7
    %v5829 = vsub.s32 0, %v5828
    %v5830 = vrot.slane %v5825, %v5829
    %v5832 = vadd.f32 %v5824, %v5830
    %v5833 = vmax.f32 %v5832, 0.0
    %v5834 = vpack.c.bf16 %v5833, %v5833
    %v5835 = vld [vmem:[%s10] sm:$0xf]
    %v5836 = vld [vmem:[%s10 + $0x4] sm:$0xf]
    %v5837 = vld [vmem:[%s10 + $0x8] sm:$0xf]
    %v5838 = vld [vmem:[%s10 + $0xc] sm:$0xf]
    %v5839 = vld [vmem:[%s10 + $0x10] sm:$0xf]
    %v5840 = vld [vmem:[%s10 + $0x14] sm:$0xf]
    %v5841 = vld [vmem:[%s10 + $0x18] sm:$0xf]
    %v5842 = vld [vmem:[%s10 + $0x1c] sm:$0xf]
    %v5843 = vld [vmem:[%s10 + $0x20] sm:$0xf]
    %v5844 = vld [vmem:[%s10 + $0x24] sm:$0xf]
    %v5845 = vld [vmem:[%s10 + $0x28] sm:$0xf]
    %v5846 = vld [vmem:[%s10 + $0x2c] sm:$0xf]
    %v5847 = vld [vmem:[%s10 + $0x30] sm:$0xf]
    %v5848 = vld [vmem:[%s10 + $0x34] sm:$0xf]
    %v5849 = vld [vmem:[%s10 + $0x38] sm:$0xf]
    %v5850 = vld [vmem:[%s10 + $0x3c] sm:$0xf]
    %v5851 = vld [vmem:[%s11] sm:$0x1]
    %v5853 = vlaneseq
    %v5854 = vshrl.u32 %v5853, 7
    %v5855 = vsub.s32 0, %v5854
    %v5856 = vrot.slane %v5851, %v5855
    %v5874 = vunpack.c.l.b16 %v5835
    %v5875 = vunpack.c.l.b16 %v5836
    %v5876 = vunpack.c.l.b16 %v5837
    %v5877 = vunpack.c.l.b16 %v5838
    %v5878 = vunpack.c.l.b16 %v5839
    %v5879 = vunpack.c.l.b16 %v5840
    %v5880 = vunpack.c.l.b16 %v5841
    %v5881 = vunpack.c.l.b16 %v5842
    %v5882 = vunpack.c.l.b16 %v5843
    %v5883 = vunpack.c.l.b16 %v5844
    %v5884 = vunpack.c.l.b16 %v5845
    %v5885 = vunpack.c.l.b16 %v5846
    %v5886 = vunpack.c.l.b16 %v5847
    %v5887 = vunpack.c.l.b16 %v5848
    %v5888 = vunpack.c.l.b16 %v5849
    %v5889 = vunpack.c.l.b16 %v5850
    %v5890 = vpack.c.b16 %v5875, %v5874
    %v5891 = vpack.c.b16 %v5877, %v5876
    %v5892 = vpack.c.b16 %v5879, %v5878
    %v5893 = vpack.c.b16 %v5881, %v5880
    %v5894 = vpack.c.b16 %v5883, %v5882
    %v5895 = vpack.c.b16 %v5885, %v5884
    %v5896 = vpack.c.b16 %v5887, %v5886
    %v5897 = vpack.c.b16 %v5889, %v5888
    %5906 = vmatprep.subr.bf16.mxu0 0
    %5907 = vmatpush1.bf16.msra.mxu0 %v5890
    %5908 = vmatprep.subr.bf16.mxu0 0
    %5909 = vmatpush1.bf16.msra.mxu0 %v5891
    %5910 = vmatprep.subr.bf16.mxu0 0
    %5911 = vmatpush1.bf16.msra.mxu0 %v5892
    %5912 = vmatprep.subr.bf16.mxu0 0
    %5913 = vmatpush1.bf16.msra.mxu0 %v5893
    %5914 = vmatprep.subr.bf16.mxu0 0
    %5915 = vmatpush1.bf16.msra.mxu0 %v5894
    %5916 = vmatprep.subr.bf16.mxu0 0
    %5917 = vmatpush1.bf16.msra.mxu0 %v5895
    %5918 = vmatprep.subr.bf16.mxu0 0
    %5919 = vmatpush1.bf16.msra.mxu0 %v5896
    %5920 = vmatprep.subr.bf16.mxu0 0
    %5921 = vmatpush1.bf16.msra.mxu0 %v5897
    %5922 = vmatprep.subr.bf16.mxu0 0
    %5923 = vmatpush1.bf16.msra.mxu0 0
    %5924 = vmatprep.subr.bf16.mxu0 0
    %5925 = vmatpush1.bf16.msra.mxu0 0
    %5926 = vmatprep.subr.bf16.mxu0 0
    %5927 = vmatpush1.bf16.msra.mxu0 0
    %5928 = vmatprep.subr.bf16.mxu0 0
    %5929 = vmatpush1.bf16.msra.mxu0 0
    %5930 = vmatprep.subr.bf16.mxu0 0
    %5931 = vmatpush1.bf16.msra.mxu0 0
    %5932 = vmatprep.subr.bf16.mxu0 0
    %5933 = vmatpush1.bf16.msra.mxu0 0
    %5934 = vmatprep.subr.bf16.mxu0 0
    %5935 = vmatpush1.bf16.msra.mxu0 0
    %5936 = vmatprep.subr.bf16.mxu0 0
    %5937 = vmatpush1.bf16.msra.mxu0 0
    %5938 = vmatprep.mubr.bf16.mxu0 0
    %5939 = vmatmul.mubr.bf16.gmra.mrb[0].mxu0 %v5834
    %v5940 = vpop.f32.mrb[0].mxu0
    %v5941 = vadd.f32 %v5856, %v5940
    %v5942 = vpop.f32.mrb[0].mxu0
    %v5943 = vpop.f32.mrb[0].mxu0
    %v5944 = vpop.f32.mrb[0].mxu0
    %5945 = vdwg.mxu0
    %v5946 = vmax.f32 %v5941, 0.0
    %v5947 = vpack.c.bf16 %v5946, %v5946
    %v5948 = vld [vmem:[%s12] sm:$0xf]
    %v5949 = vld [vmem:[%s12 + $0x4] sm:$0xf]
    %v5950 = vld [vmem:[%s12 + $0x8] sm:$0xf]
    %v5951 = vld [vmem:[%s12 + $0xc] sm:$0xf]
    %v5952 = vld [vmem:[%s12 + $0x10] sm:$0xf]
    %v5953 = vld [vmem:[%s12 + $0x14] sm:$0xf]
    %v5954 = vld [vmem:[%s12 + $0x18] sm:$0xf]
    %v5955 = vld [vmem:[%s12 + $0x1c] sm:$0xf]
    %v5956 = vld [vmem:[%s12 + $0x20] sm:$0xf]
    %v5957 = vld [vmem:[%s12 + $0x24] sm:$0xf]
    %v5958 = vld [vmem:[%s12 + $0x28] sm:$0xf]
    %v5959 = vld [vmem:[%s12 + $0x2c] sm:$0xf]
    %v5960 = vld [vmem:[%s12 + $0x30] sm:$0xf]
    %v5961 = vld [vmem:[%s12 + $0x34] sm:$0xf]
    %v5962 = vld [vmem:[%s12 + $0x38] sm:$0xf]
    %v5963 = vld [vmem:[%s12 + $0x3c] sm:$0xf]
    %v5964 = vld [vmem:[%s13] sm:$0x1]
    %v5966 = vlaneseq
    %v5967 = vshrl.u32 %v5966, 7
    %v5968 = vsub.s32 0, %v5967
    %v5969 = vrot.slane %v5964, %v5968
    %v5987 = vunpack.c.l.b16 %v5948
    %v5988 = vunpack.c.l.b16 %v5949
    %v5989 = vunpack.c.l.b16 %v5950
    %v5990 = vunpack.c.l.b16 %v5951
    %v5991 = vunpack.c.l.b16 %v5952
    %v5992 = vunpack.c.l.b16 %v5953
    %v5993 = vunpack.c.l.b16 %v5954
    %v5994 = vunpack.c.l.b16 %v5955
    %v5995 = vunpack.c.l.b16 %v5956
    %v5996 = vunpack.c.l.b16 %v5957
    %v5997 = vunpack.c.l.b16 %v5958
    %v5998 = vunpack.c.l.b16 %v5959
    %v5999 = vunpack.c.l.b16 %v5960
    %v6000 = vunpack.c.l.b16 %v5961
    %v6001 = vunpack.c.l.b16 %v5962
    %v6002 = vunpack.c.l.b16 %v5963
    %v6003 = vpack.c.b16 %v5988, %v5987
    %v6004 = vpack.c.b16 %v5990, %v5989
    %v6005 = vpack.c.b16 %v5992, %v5991
    %v6006 = vpack.c.b16 %v5994, %v5993
    %v6007 = vpack.c.b16 %v5996, %v5995
    %v6008 = vpack.c.b16 %v5998, %v5997
    %v6009 = vpack.c.b16 %v6000, %v5999
    %v6010 = vpack.c.b16 %v6002, %v6001
    %6019 = vmatprep.subr.bf16.mxu0 0
    %6020 = vmatpush1.bf16.msra.mxu0 %v6003
    %6021 = vmatprep.subr.bf16.mxu0 0
    %6022 = vmatpush1.bf16.msra.mxu0 %v6004
    %6023 = vmatprep.subr.bf16.mxu0 0
    %6024 = vmatpush1.bf16.msra.mxu0 %v6005
    %6025 = vmatprep.subr.bf16.mxu0 0
    %6026 = vmatpush1.bf16.msra.mxu0 %v6006
    %6027 = vmatprep.subr.bf16.mxu0 0
    %6028 = vmatpush1.bf16.msra.mxu0 %v6007
    %6029 = vmatprep.subr.bf16.mxu0 0
    %6030 = vmatpush1.bf16.msra.mxu0 %v6008
    %6031 = vmatprep.subr.bf16.mxu0 0
    %6032 = vmatpush1.bf16.msra.mxu0 %v6009
    %6033 = vmatprep.subr.bf16.mxu0 0
    %6034 = vmatpush1.bf16.msra.mxu0 %v6010
    %6035 = vmatprep.subr.bf16.mxu0 0
    %6036 = vmatpush1.bf16.msra.mxu0 0
    %6037 = vmatprep.subr.bf16.mxu0 0
    %6038 = vmatpush1.bf16.msra.mxu0 0
    %6039 = vmatprep.subr.bf16.mxu0 0
    %6040 = vmatpush1.bf16.msra.mxu0 0
    %6041 = vmatprep.subr.bf16.mxu0 0
    %6042 = vmatpush1.bf16.msra.mxu0 0
    %6043 = vmatprep.subr.bf16.mxu0 0
    %6044 = vmatpush1.bf16.msra.mxu0 0
    %6045 = vmatprep.subr.bf16.mxu0 0
    %6046 = vmatpush1.bf16.msra.mxu0 0
    %6047 = vmatprep.subr.bf16.mxu0 0
    %6048 = vmatpush1.bf16.msra.mxu0 0
    %6049 = vmatprep.subr.bf16.mxu0 0
    %6050 = vmatpush1.bf16.msra.mxu0 0
    %6051 = vmatprep.mubr.bf16.mxu0 0
    %6052 = vmatmul.mubr.bf16.gmra.mrb[0].mxu0 %v5947
    %v6053 = vpop.f32.mrb[0].mxu0
    %v6054 = vadd.f32 %v5969, %v6053
    %v6055 = vpop.f32.mrb[0].mxu0
    %v6056 = vpop.f32.mrb[0].mxu0
    %v6057 = vpop.f32.mrb[0].mxu0
    %6058 = vdwg.mxu0
    %6059 = vst [vmem:[%s14] sm:$0xff] %v6054
    // Predicated region
    $region74: #{cnn_cifar_forward.1} parent=1 // pred_check
      _
    $region75: #{cnn_cifar_forward.1} parent=1 // pred_check_branch
      %6061 = sbr.rel (0) target = $region77
    $region76: #{cnn_cifar_forward.1} parent=1 // pred_region
      _
    $region77: #{cnn_cifar_forward.1} parent=1 // pred_fallthru
      _
    // Predicated region
    $region78: #{cnn_cifar_forward.1} parent=1 // pred_check
      _
    $region79: #{cnn_cifar_forward.1} parent=1 // pred_check_branch
      %6063 = sbr.rel (0) target = $region81
    $region80: #{cnn_cifar_forward.1} parent=1 // pred_region
      _
    $region81: #{cnn_cifar_forward.1} parent=1 // pred_fallthru
      _
    %6064 = vsyncpa [#allocation3], 1
    %6065 = vsyncpa [#allocation5], 1
    %6066 = vsyncpa [#allocation8], 1

</llo_original>
